<compile_context>
chip_gen: v7x
topology: tpu7x:2x2x1
jax: 0.10.0
libtpu: 0.0.40
codegen_flags: <defaults>
</compile_context>

<pallas_src>
import functools
import math

import jax
import jax.numpy as jnp
from jax.experimental import pallas as pl
from jax.experimental.pallas import tpu as pltpu


def _round_up(v, m):
    return ((v + m - 1) // m) * m


# ----------------------------------------------------------------------------
# Fused Pallas kernel: whole Net2 forward for one batch element.
# ----------------------------------------------------------------------------
def _net2_fused_kernel(alpha_ref, x_ref,
                       w0_ref, w1_ref, w2_ref, w3_ref, w4_ref,
                       b_rb1_ref, b_rb2_ref, mask_ref,
                       o_ref,
                       a1_buf, b1_buf, b2_buf, b3_buf, stage_buf,
                       *, guard, wp, p_pad):
    # alpha_ref : (5,) f32 SMEM                — PReLU slopes for the 5 layers
    # x_ref     : (Cin_pad, G) guarded flat input (lanes = padded spatial)
    # w*_ref    : (Cout_l, 9*Cin_pad_l)        — taps stacked along K
    # b_rb1_ref : (2F, 1), b_rb2_ref : (F, 1)  — conv biases (lane-broadcast)
    # mask_ref  : (1, P_pad)                   — 1 at real pixels, 0 elsewhere
    # o_ref     : (Cout, P_pad)                — final output (padded coords)
    # *_buf     : (C, G) VMEM                  — resident activations
    # stage_buf : (9*Cin_pad_max, P_pad) VMEM  — stacked-K conv staging
    f32 = jnp.float32

    # Keep the 128-lane guard slabs zero.  Cheap (2 aligned stores / buffer)
    # and unconditional -> safe under megacore splitting of the batch axis.
    def zero_guards(buf):
        z = jnp.zeros((buf.shape[0], guard), f32)
        buf[:, pl.ds(0, guard)] = z
        buf[:, pl.ds(guard + p_pad, guard)] = z

    for buf in (a1_buf, b1_buf, b2_buf, b3_buf):
        zero_guards(buf)

    def conv3x3(src_ref, w_ref):
        # 3x3 SAME conv as ONE MXU matmul: stage the 9 lane-shifted copies of
        # src into contiguous row blocks of stage_buf, then contract K=9*Cin.
        cin = src_ref.shape[0]
        k = 0
        for dy in (-1, 0, 1):
            for dx in (-1, 0, 1):
                off = dy * wp + dx
                stage_buf[pl.ds(k * cin, cin), :] = src_ref[:, pl.ds(guard + off, p_pad)]
                k += 1
        staged = stage_buf[pl.ds(0, 9 * cin), :]                 # (9*Cin, P_pad)
        return jnp.dot(w_ref[...], staged, preferred_element_type=f32)

    def prelu(v, a):
        return jnp.where(v >= 0.0, v, a * v)

    def store_act(buf, val):
        # Zero the pad ring + alignment-pad lanes so the next conv sees the
        # correct zero padding; guards stay zero from zero_guards above.
        buf[:, pl.ds(guard, p_pad)] = val * mask_ref[...]

    # Net2.conv0 : Conv(in -> F, bias=False) + PReLU
    a1 = prelu(conv3x3(x_ref, w0_ref), alpha_ref[0])
    store_act(a1_buf, a1)

    # ResBlock.conv0 : Conv(F -> F, bias=False) + PReLU
    b1 = prelu(conv3x3(a1_buf, w1_ref), alpha_ref[1])
    store_act(b1_buf, b1)

    # ResBlock.conv1 : Conv(F -> 2F, bias=True) + PReLU
    b2 = prelu(conv3x3(b1_buf, w2_ref) + b_rb1_ref[...], alpha_ref[2])
    store_act(b2_buf, b2)

    # ResBlock.conv2 : Conv(2F -> F, bias=True) + PReLU, then residual (+ a1)
    b3 = prelu(conv3x3(b2_buf, w3_ref) + b_rb2_ref[...], alpha_ref[3])
    b3 = b3 + a1_buf[:, pl.ds(guard, p_pad)]
    store_act(b3_buf, b3)

    # Net2.conv3 : Conv(F -> out, bias=False) + PReLU -> lane-dense store
    y = prelu(conv3x3(b3_buf, w4_ref), alpha_ref[4])
    o_ref[...] = y.astype(o_ref.dtype)


# ----------------------------------------------------------------------------
# Parameter init (PyTorch-like shapes) and one-time packing for the kernel.
# ----------------------------------------------------------------------------
def init_net2_params(key, in_channel, feature_num, out_channel):
    f = feature_num
    ks = jax.random.split(key, 7)

    def w(k, co, ci):
        bound = 1.0 / math.sqrt(ci * 9)
        return jax.random.uniform(k, (co, ci, 3, 3), jnp.float32, -bound, bound)

    def bvec(k, co, ci):
        bound = 1.0 / math.sqrt(ci * 9)
        return jax.random.uniform(k, (co,), jnp.float32, -bound, bound)

    return {
        "w_conv0": w(ks[0], f, in_channel), "a_conv0": 0.2,
        "w_rb0": w(ks[1], f, f), "a_rb0": 0.2,
        "w_rb1": w(ks[2], 2 * f, f), "b_rb1": bvec(ks[3], 2 * f, f), "a_rb1": 0.2,
        "w_rb2": w(ks[4], f, 2 * f), "b_rb2": bvec(ks[5], f, 2 * f), "a_rb2": 0.2,
        "w_conv3": w(ks[6], out_channel, f), "a_conv3": 0.2,
    }


def _pack_conv_weight(w_oihw, cin_pad):
    # (Cout, Cin, 3, 3) -> (Cout, 9*cin_pad):
    #   column index = (ky*3 + kx)*cin_pad + ci  (matches kernel staging order);
    #   padded-channel columns are zero.
    cout, cin, _, _ = w_oihw.shape
    w = jnp.transpose(w_oihw, (2, 3, 1, 0))                        # (ky,kx,ci,co)
    w = jnp.pad(w, ((0, 0), (0, 0), (0, cin_pad - cin), (0, 0)))
    return w.reshape(9 * cin_pad, cout).T.astype(jnp.float32)       # (co, 9*cin_pad)


def pack_net2_params(params):
    """Hoisted out of the forward path: repack weights/biases/alphas once."""
    f = params["w_rb0"].shape[0]
    in_ch = params["w_conv0"].shape[1]
    return {
        "alphas": jnp.array([params["a_conv0"], params["a_rb0"], params["a_rb1"],
                             params["a_rb2"], params["a_conv3"]], jnp.float32),
        "w0": _pack_conv_weight(params["w_conv0"], _round_up(in_ch, 8)),
        "w1": _pack_conv_weight(params["w_rb0"], f),
        "w2": _pack_conv_weight(params["w_rb1"], f),
        "w3": _pack_conv_weight(params["w_rb2"], 2 * f),
        "w4": _pack_conv_weight(params["w_conv3"], f),
        "b_rb1": params["b_rb1"].reshape(-1, 1).astype(jnp.float32),
        "b_rb2": params["b_rb2"].reshape(-1, 1).astype(jnp.float32),
    }


# ----------------------------------------------------------------------------
# Forward wrapper: one fused pallas_call, gridded over batch.
# ----------------------------------------------------------------------------
def net2_forward(x_nchw, packed):
    n, cin, h, w = x_nchw.shape
    hp, wp = h + 2, w + 2
    p_pix = hp * wp
    p_pad = _round_up(p_pix, 128)          # lane-aligned spatial extent
    guard = _round_up(wp + 1, 128)         # >= max |lane shift|, 128-aligned
    g = p_pad + 2 * guard

    cin_pad = packed["w0"].shape[1] // 9
    feat = packed["w1"].shape[1] // 9      # F
    feat2 = packed["w3"].shape[1] // 9     # 2F
    cout = packed["w4"].shape[0]
    stage_rows = max(packed[k].shape[1] for k in ("w0", "w1", "w2", "w3", "w4"))

    # One-time cheap repacking of the network input into the guarded flat
    # layout (channels-first already -> no NCHW<->NHWC transposes anywhere).
    # Channels are zero-padded to a multiple of 8 so in-kernel staging writes
    # are full sublane-aligned blocks.
    xp = jnp.pad(x_nchw.astype(jnp.float32),
                 ((0, 0), (0, cin_pad - cin), (1, 1), (1, 1)))
    xg = jnp.pad(xp.reshape(n, cin_pad, p_pix),
                 ((0, 0), (0, 0), (guard, guard + p_pad - p_pix)))

    # Interior-pixel mask in padded flat coordinates (0 on the padding ring
    # and on the lane-alignment padding).
    rr = jnp.arange(hp)[:, None]
    cc = jnp.arange(wp)[None, :]
    mask = (((rr >= 1) & (rr <= h)) & ((cc >= 1) & (cc <= w)))
    mask = mask.astype(jnp.float32).reshape(1, p_pix)
    mask = jnp.pad(mask, ((0, 0), (0, p_pad - p_pix)))

    kernel = functools.partial(_net2_fused_kernel, guard=guard, wp=wp, p_pad=p_pad)

    out = pl.pallas_call(
        kernel,
        out_shape=jax.ShapeDtypeStruct((n, cout, p_pad), jnp.float32),
        grid_spec=pltpu.PrefetchScalarGridSpec(
            num_scalar_prefetch=0,
            grid=(n,),
            in_specs=[
                pl.BlockSpec(memory_space=pltpu.MemorySpace.SMEM),               # alphas
                pl.BlockSpec((pl.Squeezed(), cin_pad, g), lambda i: (i, 0, 0)),  # x
                pl.BlockSpec(packed["w0"].shape, lambda i: (0, 0)),              # w0
                pl.BlockSpec(packed["w1"].shape, lambda i: (0, 0)),              # w1
                pl.BlockSpec(packed["w2"].shape, lambda i: (0, 0)),              # w2
                pl.BlockSpec(packed["w3"].shape, lambda i: (0, 0)),              # w3
                pl.BlockSpec(packed["w4"].shape, lambda i: (0, 0)),              # w4
                pl.BlockSpec((feat2, 1), lambda i: (0, 0)),                      # b_rb1
                pl.BlockSpec((feat, 1), lambda i: (0, 0)),                       # b_rb2
                pl.BlockSpec((1, p_pad), lambda i: (0, 0)),                      # mask
            ],
            out_specs=pl.BlockSpec((pl.Squeezed(), cout, p_pad), lambda i: (i, 0, 0)),
            scratch_shapes=[
                pltpu.VMEM((feat, g), jnp.float32),        # a1 (also the residual)
                pltpu.VMEM((feat, g), jnp.float32),        # b1
                pltpu.VMEM((feat2, g), jnp.float32),       # b2
                pltpu.VMEM((feat, g), jnp.float32),        # b3
                pltpu.VMEM((stage_rows, p_pad), jnp.float32),  # stacked-K staging
            ],
        ),
        compiler_params=pltpu.CompilerParams(
            dimension_semantics=("parallel",)),            # batch feeds both v7x TCs
    )(packed["alphas"], xg, packed["w0"], packed["w1"], packed["w2"],
      packed["w3"], packed["w4"], packed["b_rb1"], packed["b_rb2"], mask)

    # (N, Cout, P_pad) -> drop alignment pad -> crop the padding ring -> NCHW.
    return out[:, :, :p_pix].reshape(n, cout, hp, wp)[:, :, 1:h + 1, 1:w + 1]


# ----------------------------------------------------------------------------
# Pure-JAX reference (high precision) for the correctness check.
# ----------------------------------------------------------------------------
def _conv3x3_prelu_ref(x_nchw, w_oihw, bias, alpha, residual=None):
    out = jax.lax.conv_general_dilated(
        x_nchw, w_oihw, window_strides=(1, 1), padding="SAME",
        dimension_numbers=("NCHW", "OIHW", "NCHW"),
        precision=jax.lax.Precision.HIGHEST)
    if bias is not None:
        out = out + bias[None, :, None, None]
    out = jnp.where(out >= 0.0, out, alpha * out)
    if residual is not None:
        out = out + residual
    return out


def net2_forward_ref(x_nchw, params):
    a1 = _conv3x3_prelu_ref(x_nchw, params["w_conv0"], None, params["a_conv0"])
    b1 = _conv3x3_prelu_ref(a1, params["w_rb0"], None, params["a_rb0"])
    b2 = _conv3x3_prelu_ref(b1, params["w_rb1"], params["b_rb1"], params["a_rb1"])
    b3 = _conv3x3_prelu_ref(b2, params["w_rb2"], params["b_rb2"], params["a_rb2"],
                            residual=a1)
    y = _conv3x3_prelu_ref(b3, params["w_conv3"], None, params["a_conv3"])
    return y


if __name__ == "__main__":
    in_channel, out_channel, feature_num = 3, 3, 8
    n, h, w = 2, 16, 16

    key = jax.random.PRNGKey(0)
    kx, kp = jax.random.split(key)
    x = jax.random.normal(kx, (n, in_channel, h, w), jnp.float32)
    params = init_net2_params(kp, in_channel, feature_num, out_channel)
    packed = pack_net2_params(params)            # one-time weight repacking

    fwd = jax.jit(net2_forward)
    y = jax.block_until_ready(fwd(x, packed))
    assert y.shape == (n, out_channel, h, w), y.shape

    y_ref = jax.block_until_ready(net2_forward_ref(x, params))
    max_err = float(jnp.max(jnp.abs(y - y_ref)))
    # Both paths accumulate in f32 (kernel contracts K=72/144 on the MXU).
    assert jnp.allclose(y, y_ref, rtol=2e-3, atol=2e-3), max_err

    print("KERNEL_OK")
</pallas_src>

<mosaic_0001>
module attributes {stable_mosaic.version = 11 : i64} {
  func.func @_net2_fused_kernel(%arg0: i32, %arg1: memref<5xf32, #tpu.memory_space<smem>>, %arg2: memref<1x8x640xf32, #tpu.memory_space<vmem>>, %arg3: memref<8x72xf32, #tpu.memory_space<vmem>>, %arg4: memref<8x72xf32, #tpu.memory_space<vmem>>, %arg5: memref<16x72xf32, #tpu.memory_space<vmem>>, %arg6: memref<8x144xf32, #tpu.memory_space<vmem>>, %arg7: memref<3x72xf32, #tpu.memory_space<vmem>>, %arg8: memref<16x1xf32, #tpu.memory_space<vmem>>, %arg9: memref<8x1xf32, #tpu.memory_space<vmem>>, %arg10: memref<1x384xf32, #tpu.memory_space<vmem>>, %arg11: memref<1x3x384xf32, #tpu.memory_space<vmem>>, %arg12: memref<8x640xf32, #tpu.memory_space<vmem>>, %arg13: memref<8x640xf32, #tpu.memory_space<vmem>>, %arg14: memref<16x640xf32, #tpu.memory_space<vmem>>, %arg15: memref<8x640xf32, #tpu.memory_space<vmem>>, %arg16: memref<144x384xf32, #tpu.memory_space<vmem>>) attributes {dimension_semantics = [#tpu.dimension_semantics<parallel>], iteration_bounds = array<i64: 2>, scalar_prefetch = 0 : i64, scratch_operands = 5 : i64, tpu.core_type = #tpu.core_type<tc>, window_params = [{transform_indices = @transform_0, window_bounds = array<i64: 5>}, {transform_indices = @transform_1, window_bounds = array<i64: 1, 8, 640>}, {pipeline_mode = #tpu.pipeline_mode<synchronous>, transform_indices = @transform_2, window_bounds = array<i64: 8, 72>}, {pipeline_mode = #tpu.pipeline_mode<synchronous>, transform_indices = @transform_3, window_bounds = array<i64: 8, 72>}, {pipeline_mode = #tpu.pipeline_mode<synchronous>, transform_indices = @transform_4, window_bounds = array<i64: 16, 72>}, {pipeline_mode = #tpu.pipeline_mode<synchronous>, transform_indices = @transform_5, window_bounds = array<i64: 8, 144>}, {pipeline_mode = #tpu.pipeline_mode<synchronous>, transform_indices = @transform_6, window_bounds = array<i64: 3, 72>}, {pipeline_mode = #tpu.pipeline_mode<synchronous>, transform_indices = @transform_7, window_bounds = array<i64: 16, 1>}, {pipeline_mode = #tpu.pipeline_mode<synchronous>, transform_indices = @transform_8, window_bounds = array<i64: 8, 1>}, {pipeline_mode = #tpu.pipeline_mode<synchronous>, transform_indices = @transform_9, window_bounds = array<i64: 1, 384>}, {transform_indices = @transform_10, window_bounds = array<i64: 1, 3, 384>}]} {
    %cst = arith.constant 0.000000e+00 : f32
    %0 = vector.broadcast %cst : f32 to vector<8x128xf32>
    %c0 = arith.constant 0 : index
    %c0_0 = arith.constant 0 : index
    %1 = vector.load %arg12[%c0, %c0_0] : memref<8x640xf32, #tpu.memory_space<vmem>>, vector<8x128xf32>
    tpu.vector_store %arg12[%c0, %c0_0], %0 {strides = array<i32>} : memref<8x640xf32, #tpu.memory_space<vmem>>, vector<8x128xf32>,
    %c0_1 = arith.constant 0 : index
    %c512 = arith.constant 512 : index
    %2 = vector.load %arg12[%c0_1, %c512] : memref<8x640xf32, #tpu.memory_space<vmem>>, vector<8x128xf32>
    tpu.vector_store %arg12[%c0_1, %c512], %0 {strides = array<i32>} : memref<8x640xf32, #tpu.memory_space<vmem>>, vector<8x128xf32>,
    %cst_2 = arith.constant 0.000000e+00 : f32
    %3 = vector.broadcast %cst_2 : f32 to vector<8x128xf32>
    %c0_3 = arith.constant 0 : index
    %c0_4 = arith.constant 0 : index
    %4 = vector.load %arg13[%c0_3, %c0_4] : memref<8x640xf32, #tpu.memory_space<vmem>>, vector<8x128xf32>
    tpu.vector_store %arg13[%c0_3, %c0_4], %3 {strides = array<i32>} : memref<8x640xf32, #tpu.memory_space<vmem>>, vector<8x128xf32>,
    %c0_5 = arith.constant 0 : index
    %c512_6 = arith.constant 512 : index
    %5 = vector.load %arg13[%c0_5, %c512_6] : memref<8x640xf32, #tpu.memory_space<vmem>>, vector<8x128xf32>
    tpu.vector_store %arg13[%c0_5, %c512_6], %3 {strides = array<i32>} : memref<8x640xf32, #tpu.memory_space<vmem>>, vector<8x128xf32>,
    %cst_7 = arith.constant 0.000000e+00 : f32
    %6 = vector.broadcast %cst_7 : f32 to vector<16x128xf32>
    %c0_8 = arith.constant 0 : index
    %c0_9 = arith.constant 0 : index
    %7 = vector.load %arg14[%c0_8, %c0_9] : memref<16x640xf32, #tpu.memory_space<vmem>>, vector<16x128xf32>
    tpu.vector_store %arg14[%c0_8, %c0_9], %6 {strides = array<i32>} : memref<16x640xf32, #tpu.memory_space<vmem>>, vector<16x128xf32>,
    %c0_10 = arith.constant 0 : index
    %c512_11 = arith.constant 512 : index
    %8 = vector.load %arg14[%c0_10, %c512_11] : memref<16x640xf32, #tpu.memory_space<vmem>>, vector<16x128xf32>
    tpu.vector_store %arg14[%c0_10, %c512_11], %6 {strides = array<i32>} : memref<16x640xf32, #tpu.memory_space<vmem>>, vector<16x128xf32>,
    %cst_12 = arith.constant 0.000000e+00 : f32
    %9 = vector.broadcast %cst_12 : f32 to vector<8x128xf32>
    %c0_13 = arith.constant 0 : index
    %c0_14 = arith.constant 0 : index
    %10 = vector.load %arg15[%c0_13, %c0_14] : memref<8x640xf32, #tpu.memory_space<vmem>>, vector<8x128xf32>
    tpu.vector_store %arg15[%c0_13, %c0_14], %9 {strides = array<i32>} : memref<8x640xf32, #tpu.memory_space<vmem>>, vector<8x128xf32>,
    %c0_15 = arith.constant 0 : index
    %c512_16 = arith.constant 512 : index
    %11 = vector.load %arg15[%c0_15, %c512_16] : memref<8x640xf32, #tpu.memory_space<vmem>>, vector<8x128xf32>
    tpu.vector_store %arg15[%c0_15, %c512_16], %9 {strides = array<i32>} : memref<8x640xf32, #tpu.memory_space<vmem>>, vector<8x128xf32>,
    %c0_17 = arith.constant 0 : index
    %c0_18 = arith.constant 0 : index
    %c109 = arith.constant 109 : index
    %12 = vector.load %arg2[%c0_17, %c0_18, %c109] : memref<1x8x640xf32, #tpu.memory_space<vmem>>, vector<1x8x384xf32>
    %13 = vector.shape_cast %12 : vector<1x8x384xf32> to vector<8x384xf32>
    %c0_19 = arith.constant 0 : index
    %c0_20 = arith.constant 0 : index
    %14 = vector.load %arg16[%c0_19, %c0_20] : memref<144x384xf32, #tpu.memory_space<vmem>>, vector<8x384xf32>
    tpu.vector_store %arg16[%c0_19, %c0_20], %13 {strides = array<i32>} : memref<144x384xf32, #tpu.memory_space<vmem>>, vector<8x384xf32>,
    %c0_21 = arith.constant 0 : index
    %c0_22 = arith.constant 0 : index
    %c110 = arith.constant 110 : index
    %15 = vector.load %arg2[%c0_21, %c0_22, %c110] : memref<1x8x640xf32, #tpu.memory_space<vmem>>, vector<1x8x384xf32>
    %16 = vector.shape_cast %15 : vector<1x8x384xf32> to vector<8x384xf32>
    %c8 = arith.constant 8 : index
    %c0_23 = arith.constant 0 : index
    %17 = vector.load %arg16[%c8, %c0_23] : memref<144x384xf32, #tpu.memory_space<vmem>>, vector<8x384xf32>
    tpu.vector_store %arg16[%c8, %c0_23], %16 {strides = array<i32>} : memref<144x384xf32, #tpu.memory_space<vmem>>, vector<8x384xf32>,
    %c0_24 = arith.constant 0 : index
    %c0_25 = arith.constant 0 : index
    %c111 = arith.constant 111 : index
    %18 = vector.load %arg2[%c0_24, %c0_25, %c111] : memref<1x8x640xf32, #tpu.memory_space<vmem>>, vector<1x8x384xf32>
    %19 = vector.shape_cast %18 : vector<1x8x384xf32> to vector<8x384xf32>
    %c16 = arith.constant 16 : index
    %c0_26 = arith.constant 0 : index
    %20 = vector.load %arg16[%c16, %c0_26] : memref<144x384xf32, #tpu.memory_space<vmem>>, vector<8x384xf32>
    tpu.vector_store %arg16[%c16, %c0_26], %19 {strides = array<i32>} : memref<144x384xf32, #tpu.memory_space<vmem>>, vector<8x384xf32>,
    %c0_27 = arith.constant 0 : index
    %c0_28 = arith.constant 0 : index
    %c127 = arith.constant 127 : index
    %21 = vector.load %arg2[%c0_27, %c0_28, %c127] : memref<1x8x640xf32, #tpu.memory_space<vmem>>, vector<1x8x384xf32>
    %22 = vector.shape_cast %21 : vector<1x8x384xf32> to vector<8x384xf32>
    %c24 = arith.constant 24 : index
    %c0_29 = arith.constant 0 : index
    %23 = vector.load %arg16[%c24, %c0_29] : memref<144x384xf32, #tpu.memory_space<vmem>>, vector<8x384xf32>
    tpu.vector_store %arg16[%c24, %c0_29], %22 {strides = array<i32>} : memref<144x384xf32, #tpu.memory_space<vmem>>, vector<8x384xf32>,
    %c0_30 = arith.constant 0 : index
    %c0_31 = arith.constant 0 : index
    %c128 = arith.constant 128 : index
    %24 = vector.load %arg2[%c0_30, %c0_31, %c128] : memref<1x8x640xf32, #tpu.memory_space<vmem>>, vector<1x8x384xf32>
    %25 = vector.shape_cast %24 : vector<1x8x384xf32> to vector<8x384xf32>
    %c32 = arith.constant 32 : index
    %c0_32 = arith.constant 0 : index
    %26 = vector.load %arg16[%c32, %c0_32] : memref<144x384xf32, #tpu.memory_space<vmem>>, vector<8x384xf32>
    tpu.vector_store %arg16[%c32, %c0_32], %25 {strides = array<i32>} : memref<144x384xf32, #tpu.memory_space<vmem>>, vector<8x384xf32>,
    %c0_33 = arith.constant 0 : index
    %c0_34 = arith.constant 0 : index
    %c129 = arith.constant 129 : index
    %27 = vector.load %arg2[%c0_33, %c0_34, %c129] : memref<1x8x640xf32, #tpu.memory_space<vmem>>, vector<1x8x384xf32>
    %28 = vector.shape_cast %27 : vector<1x8x384xf32> to vector<8x384xf32>
    %c40 = arith.constant 40 : index
    %c0_35 = arith.constant 0 : index
    %29 = vector.load %arg16[%c40, %c0_35] : memref<144x384xf32, #tpu.memory_space<vmem>>, vector<8x384xf32>
    tpu.vector_store %arg16[%c40, %c0_35], %28 {strides = array<i32>} : memref<144x384xf32, #tpu.memory_space<vmem>>, vector<8x384xf32>,
    %c0_36 = arith.constant 0 : index
    %c0_37 = arith.constant 0 : index
    %c145 = arith.constant 145 : index
    %30 = vector.load %arg2[%c0_36, %c0_37, %c145] : memref<1x8x640xf32, #tpu.memory_space<vmem>>, vector<1x8x384xf32>
    %31 = vector.shape_cast %30 : vector<1x8x384xf32> to vector<8x384xf32>
    %c48 = arith.constant 48 : index
    %c0_38 = arith.constant 0 : index
    %32 = vector.load %arg16[%c48, %c0_38] : memref<144x384xf32, #tpu.memory_space<vmem>>, vector<8x384xf32>
    tpu.vector_store %arg16[%c48, %c0_38], %31 {strides = array<i32>} : memref<144x384xf32, #tpu.memory_space<vmem>>, vector<8x384xf32>,
    %c0_39 = arith.constant 0 : index
    %c0_40 = arith.constant 0 : index
    %c146 = arith.constant 146 : index
    %33 = vector.load %arg2[%c0_39, %c0_40, %c146] : memref<1x8x640xf32, #tpu.memory_space<vmem>>, vector<1x8x384xf32>
    %34 = vector.shape_cast %33 : vector<1x8x384xf32> to vector<8x384xf32>
    %c56 = arith.constant 56 : index
    %c0_41 = arith.constant 0 : index
    %35 = vector.load %arg16[%c56, %c0_41] : memref<144x384xf32, #tpu.memory_space<vmem>>, vector<8x384xf32>
    tpu.vector_store %arg16[%c56, %c0_41], %34 {strides = array<i32>} : memref<144x384xf32, #tpu.memory_space<vmem>>, vector<8x384xf32>,
    %c0_42 = arith.constant 0 : index
    %c0_43 = arith.constant 0 : index
    %c147 = arith.constant 147 : index
    %36 = vector.load %arg2[%c0_42, %c0_43, %c147] : memref<1x8x640xf32, #tpu.memory_space<vmem>>, vector<1x8x384xf32>
    %37 = vector.shape_cast %36 : vector<1x8x384xf32> to vector<8x384xf32>
    %c64 = arith.constant 64 : index
    %c0_44 = arith.constant 0 : index
    %38 = vector.load %arg16[%c64, %c0_44] : memref<144x384xf32, #tpu.memory_space<vmem>>, vector<8x384xf32>
    tpu.vector_store %arg16[%c64, %c0_44], %37 {strides = array<i32>} : memref<144x384xf32, #tpu.memory_space<vmem>>, vector<8x384xf32>,
    %c0_45 = arith.constant 0 : index
    %c0_46 = arith.constant 0 : index
    %39 = vector.load %arg16[%c0_45, %c0_46] : memref<144x384xf32, #tpu.memory_space<vmem>>, vector<72x384xf32>
    %c0_47 = arith.constant 0 : index
    %c0_48 = arith.constant 0 : index
    %40 = vector.load %arg3[%c0_47, %c0_48] : memref<8x72xf32, #tpu.memory_space<vmem>>, vector<8x72xf32>
    %cst_49 = arith.constant dense<0.000000e+00> : vector<8x384xf32>
    %41 = tpu.matmul %40, %39, %cst_49 {dimension_numbers = #tpu.dot_dimension_numbers<[1], [0], [0], [1], [0, 0, 1, 1], [], []>} : vector<8x72xf32>, vector<72x384xf32>, vector<8x384xf32> -> vector<8x384xf32>
    %c0_50 = arith.constant 0 : index
    %42 = memref.load %arg1[%c0_50] : memref<5xf32, #tpu.memory_space<smem>>
    %cst_51 = arith.constant 0.000000e+00 : f32
    %43 = vector.broadcast %cst_51 : f32 to vector<8x384xf32>
    %44 = arith.cmpf oge, %41, %43 : vector<8x384xf32>
    %45 = vector.broadcast %42 : f32 to vector<8x384xf32>
    %46 = arith.mulf %45, %41 : vector<8x384xf32>
    %47 = arith.select %44, %41, %46 : vector<8x384xi1>, vector<8x384xf32>
    %c0_52 = arith.constant 0 : index
    %c0_53 = arith.constant 0 : index
    %48 = vector.load %arg10[%c0_52, %c0_53] : memref<1x384xf32, #tpu.memory_space<vmem>>, vector<1x384xf32>
    %49 = vector.broadcast %48 : vector<1x384xf32> to vector<8x384xf32>
    %50 = arith.mulf %47, %49 : vector<8x384xf32>
    %c0_54 = arith.constant 0 : index
    %c128_55 = arith.constant 128 : index
    %51 = vector.load %arg12[%c0_54, %c128_55] : memref<8x640xf32, #tpu.memory_space<vmem>>, vector<8x384xf32>
    tpu.vector_store %arg12[%c0_54, %c128_55], %50 {strides = array<i32>} : memref<8x640xf32, #tpu.memory_space<vmem>>, vector<8x384xf32>,
    %c0_56 = arith.constant 0 : index
    %c109_57 = arith.constant 109 : index
    %52 = vector.load %arg12[%c0_56, %c109_57] : memref<8x640xf32, #tpu.memory_space<vmem>>, vector<8x384xf32>
    %c0_58 = arith.constant 0 : index
    %c0_59 = arith.constant 0 : index
    %53 = vector.load %arg16[%c0_58, %c0_59] : memref<144x384xf32, #tpu.memory_space<vmem>>, vector<8x384xf32>
    tpu.vector_store %arg16[%c0_58, %c0_59], %52 {strides = array<i32>} : memref<144x384xf32, #tpu.memory_space<vmem>>, vector<8x384xf32>,
    %c0_60 = arith.constant 0 : index
    %c110_61 = arith.constant 110 : index
    %54 = vector.load %arg12[%c0_60, %c110_61] : memref<8x640xf32, #tpu.memory_space<vmem>>, vector<8x384xf32>
    %c8_62 = arith.constant 8 : index
    %c0_63 = arith.constant 0 : index
    %55 = vector.load %arg16[%c8_62, %c0_63] : memref<144x384xf32, #tpu.memory_space<vmem>>, vector<8x384xf32>
    tpu.vector_store %arg16[%c8_62, %c0_63], %54 {strides = array<i32>} : memref<144x384xf32, #tpu.memory_space<vmem>>, vector<8x384xf32>,
    %c0_64 = arith.constant 0 : index
    %c111_65 = arith.constant 111 : index
    %56 = vector.load %arg12[%c0_64, %c111_65] : memref<8x640xf32, #tpu.memory_space<vmem>>, vector<8x384xf32>
    %c16_66 = arith.constant 16 : index
    %c0_67 = arith.constant 0 : index
    %57 = vector.load %arg16[%c16_66, %c0_67] : memref<144x384xf32, #tpu.memory_space<vmem>>, vector<8x384xf32>
    tpu.vector_store %arg16[%c16_66, %c0_67], %56 {strides = array<i32>} : memref<144x384xf32, #tpu.memory_space<vmem>>, vector<8x384xf32>,
    %c0_68 = arith.constant 0 : index
    %c127_69 = arith.constant 127 : index
    %58 = vector.load %arg12[%c0_68, %c127_69] : memref<8x640xf32, #tpu.memory_space<vmem>>, vector<8x384xf32>
    %c24_70 = arith.constant 24 : index
    %c0_71 = arith.constant 0 : index
    %59 = vector.load %arg16[%c24_70, %c0_71] : memref<144x384xf32, #tpu.memory_space<vmem>>, vector<8x384xf32>
    tpu.vector_store %arg16[%c24_70, %c0_71], %58 {strides = array<i32>} : memref<144x384xf32, #tpu.memory_space<vmem>>, vector<8x384xf32>,
    %c0_72 = arith.constant 0 : index
    %c128_73 = arith.constant 128 : index
    %60 = vector.load %arg12[%c0_72, %c128_73] : memref<8x640xf32, #tpu.memory_space<vmem>>, vector<8x384xf32>
    %c32_74 = arith.constant 32 : index
    %c0_75 = arith.constant 0 : index
    %61 = vector.load %arg16[%c32_74, %c0_75] : memref<144x384xf32, #tpu.memory_space<vmem>>, vector<8x384xf32>
    tpu.vector_store %arg16[%c32_74, %c0_75], %60 {strides = array<i32>} : memref<144x384xf32, #tpu.memory_space<vmem>>, vector<8x384xf32>,
    %c0_76 = arith.constant 0 : index
    %c129_77 = arith.constant 129 : index
    %62 = vector.load %arg12[%c0_76, %c129_77] : memref<8x640xf32, #tpu.memory_space<vmem>>, vector<8x384xf32>
    %c40_78 = arith.constant 40 : index
    %c0_79 = arith.constant 0 : index
    %63 = vector.load %arg16[%c40_78, %c0_79] : memref<144x384xf32, #tpu.memory_space<vmem>>, vector<8x384xf32>
    tpu.vector_store %arg16[%c40_78, %c0_79], %62 {strides = array<i32>} : memref<144x384xf32, #tpu.memory_space<vmem>>, vector<8x384xf32>,
    %c0_80 = arith.constant 0 : index
    %c145_81 = arith.constant 145 : index
    %64 = vector.load %arg12[%c0_80, %c145_81] : memref<8x640xf32, #tpu.memory_space<vmem>>, vector<8x384xf32>
    %c48_82 = arith.constant 48 : index
    %c0_83 = arith.constant 0 : index
    %65 = vector.load %arg16[%c48_82, %c0_83] : memref<144x384xf32, #tpu.memory_space<vmem>>, vector<8x384xf32>
    tpu.vector_store %arg16[%c48_82, %c0_83], %64 {strides = array<i32>} : memref<144x384xf32, #tpu.memory_space<vmem>>, vector<8x384xf32>,
    %c0_84 = arith.constant 0 : index
    %c146_85 = arith.constant 146 : index
    %66 = vector.load %arg12[%c0_84, %c146_85] : memref<8x640xf32, #tpu.memory_space<vmem>>, vector<8x384xf32>
    %c56_86 = arith.constant 56 : index
    %c0_87 = arith.constant 0 : index
    %67 = vector.load %arg16[%c56_86, %c0_87] : memref<144x384xf32, #tpu.memory_space<vmem>>, vector<8x384xf32>
    tpu.vector_store %arg16[%c56_86, %c0_87], %66 {strides = array<i32>} : memref<144x384xf32, #tpu.memory_space<vmem>>, vector<8x384xf32>,
    %c0_88 = arith.constant 0 : index
    %c147_89 = arith.constant 147 : index
    %68 = vector.load %arg12[%c0_88, %c147_89] : memref<8x640xf32, #tpu.memory_space<vmem>>, vector<8x384xf32>
    %c64_90 = arith.constant 64 : index
    %c0_91 = arith.constant 0 : index
    %69 = vector.load %arg16[%c64_90, %c0_91] : memref<144x384xf32, #tpu.memory_space<vmem>>, vector<8x384xf32>
    tpu.vector_store %arg16[%c64_90, %c0_91], %68 {strides = array<i32>} : memref<144x384xf32, #tpu.memory_space<vmem>>, vector<8x384xf32>,
    %c0_92 = arith.constant 0 : index
    %c0_93 = arith.constant 0 : index
    %70 = vector.load %arg16[%c0_92, %c0_93] : memref<144x384xf32, #tpu.memory_space<vmem>>, vector<72x384xf32>
    %c0_94 = arith.constant 0 : index
    %c0_95 = arith.constant 0 : index
    %71 = vector.load %arg4[%c0_94, %c0_95] : memref<8x72xf32, #tpu.memory_space<vmem>>, vector<8x72xf32>
    %cst_96 = arith.constant dense<0.000000e+00> : vector<8x384xf32>
    %72 = tpu.matmul %71, %70, %cst_96 {dimension_numbers = #tpu.dot_dimension_numbers<[1], [0], [0], [1], [0, 0, 1, 1], [], []>} : vector<8x72xf32>, vector<72x384xf32>, vector<8x384xf32> -> vector<8x384xf32>
    %c1 = arith.constant 1 : index
    %73 = memref.load %arg1[%c1] : memref<5xf32, #tpu.memory_space<smem>>
    %cst_97 = arith.constant 0.000000e+00 : f32
    %74 = vector.broadcast %cst_97 : f32 to vector<8x384xf32>
    %75 = arith.cmpf oge, %72, %74 : vector<8x384xf32>
    %76 = vector.broadcast %73 : f32 to vector<8x384xf32>
    %77 = arith.mulf %76, %72 : vector<8x384xf32>
    %78 = arith.select %75, %72, %77 : vector<8x384xi1>, vector<8x384xf32>
    %c0_98 = arith.constant 0 : index
    %c0_99 = arith.constant 0 : index
    %79 = vector.load %arg10[%c0_98, %c0_99] : memref<1x384xf32, #tpu.memory_space<vmem>>, vector<1x384xf32>
    %80 = vector.broadcast %79 : vector<1x384xf32> to vector<8x384xf32>
    %81 = arith.mulf %78, %80 : vector<8x384xf32>
    %c0_100 = arith.constant 0 : index
    %c128_101 = arith.constant 128 : index
    %82 = vector.load %arg13[%c0_100, %c128_101] : memref<8x640xf32, #tpu.memory_space<vmem>>, vector<8x384xf32>
    tpu.vector_store %arg13[%c0_100, %c128_101], %81 {strides = array<i32>} : memref<8x640xf32, #tpu.memory_space<vmem>>, vector<8x384xf32>,
    %c0_102 = arith.constant 0 : index
    %c109_103 = arith.constant 109 : index
    %83 = vector.load %arg13[%c0_102, %c109_103] : memref<8x640xf32, #tpu.memory_space<vmem>>, vector<8x384xf32>
    %c0_104 = arith.constant 0 : index
    %c0_105 = arith.constant 0 : index
    %84 = vector.load %arg16[%c0_104, %c0_105] : memref<144x384xf32, #tpu.memory_space<vmem>>, vector<8x384xf32>
    tpu.vector_store %arg16[%c0_104, %c0_105], %83 {strides = array<i32>} : memref<144x384xf32, #tpu.memory_space<vmem>>, vector<8x384xf32>,
    %c0_106 = arith.constant 0 : index
    %c110_107 = arith.constant 110 : index
    %85 = vector.load %arg13[%c0_106, %c110_107] : memref<8x640xf32, #tpu.memory_space<vmem>>, vector<8x384xf32>
    %c8_108 = arith.constant 8 : index
    %c0_109 = arith.constant 0 : index
    %86 = vector.load %arg16[%c8_108, %c0_109] : memref<144x384xf32, #tpu.memory_space<vmem>>, vector<8x384xf32>
    tpu.vector_store %arg16[%c8_108, %c0_109], %85 {strides = array<i32>} : memref<144x384xf32, #tpu.memory_space<vmem>>, vector<8x384xf32>,
    %c0_110 = arith.constant 0 : index
    %c111_111 = arith.constant 111 : index
    %87 = vector.load %arg13[%c0_110, %c111_111] : memref<8x640xf32, #tpu.memory_space<vmem>>, vector<8x384xf32>
    %c16_112 = arith.constant 16 : index
    %c0_113 = arith.constant 0 : index
    %88 = vector.load %arg16[%c16_112, %c0_113] : memref<144x384xf32, #tpu.memory_space<vmem>>, vector<8x384xf32>
    tpu.vector_store %arg16[%c16_112, %c0_113], %87 {strides = array<i32>} : memref<144x384xf32, #tpu.memory_space<vmem>>, vector<8x384xf32>,
    %c0_114 = arith.constant 0 : index
    %c127_115 = arith.constant 127 : index
    %89 = vector.load %arg13[%c0_114, %c127_115] : memref<8x640xf32, #tpu.memory_space<vmem>>, vector<8x384xf32>
    %c24_116 = arith.constant 24 : index
    %c0_117 = arith.constant 0 : index
    %90 = vector.load %arg16[%c24_116, %c0_117] : memref<144x384xf32, #tpu.memory_space<vmem>>, vector<8x384xf32>
    tpu.vector_store %arg16[%c24_116, %c0_117], %89 {strides = array<i32>} : memref<144x384xf32, #tpu.memory_space<vmem>>, vector<8x384xf32>,
    %c0_118 = arith.constant 0 : index
    %c128_119 = arith.constant 128 : index
    %91 = vector.load %arg13[%c0_118, %c128_119] : memref<8x640xf32, #tpu.memory_space<vmem>>, vector<8x384xf32>
    %c32_120 = arith.constant 32 : index
    %c0_121 = arith.constant 0 : index
    %92 = vector.load %arg16[%c32_120, %c0_121] : memref<144x384xf32, #tpu.memory_space<vmem>>, vector<8x384xf32>
    tpu.vector_store %arg16[%c32_120, %c0_121], %91 {strides = array<i32>} : memref<144x384xf32, #tpu.memory_space<vmem>>, vector<8x384xf32>,
    %c0_122 = arith.constant 0 : index
    %c129_123 = arith.constant 129 : index
    %93 = vector.load %arg13[%c0_122, %c129_123] : memref<8x640xf32, #tpu.memory_space<vmem>>, vector<8x384xf32>
    %c40_124 = arith.constant 40 : index
    %c0_125 = arith.constant 0 : index
    %94 = vector.load %arg16[%c40_124, %c0_125] : memref<144x384xf32, #tpu.memory_space<vmem>>, vector<8x384xf32>
    tpu.vector_store %arg16[%c40_124, %c0_125], %93 {strides = array<i32>} : memref<144x384xf32, #tpu.memory_space<vmem>>, vector<8x384xf32>,
    %c0_126 = arith.constant 0 : index
    %c145_127 = arith.constant 145 : index
    %95 = vector.load %arg13[%c0_126, %c145_127] : memref<8x640xf32, #tpu.memory_space<vmem>>, vector<8x384xf32>
    %c48_128 = arith.constant 48 : index
    %c0_129 = arith.constant 0 : index
    %96 = vector.load %arg16[%c48_128, %c0_129] : memref<144x384xf32, #tpu.memory_space<vmem>>, vector<8x384xf32>
    tpu.vector_store %arg16[%c48_128, %c0_129], %95 {strides = array<i32>} : memref<144x384xf32, #tpu.memory_space<vmem>>, vector<8x384xf32>,
    %c0_130 = arith.constant 0 : index
    %c146_131 = arith.constant 146 : index
    %97 = vector.load %arg13[%c0_130, %c146_131] : memref<8x640xf32, #tpu.memory_space<vmem>>, vector<8x384xf32>
    %c56_132 = arith.constant 56 : index
    %c0_133 = arith.constant 0 : index
    %98 = vector.load %arg16[%c56_132, %c0_133] : memref<144x384xf32, #tpu.memory_space<vmem>>, vector<8x384xf32>
    tpu.vector_store %arg16[%c56_132, %c0_133], %97 {strides = array<i32>} : memref<144x384xf32, #tpu.memory_space<vmem>>, vector<8x384xf32>,
    %c0_134 = arith.constant 0 : index
    %c147_135 = arith.constant 147 : index
    %99 = vector.load %arg13[%c0_134, %c147_135] : memref<8x640xf32, #tpu.memory_space<vmem>>, vector<8x384xf32>
    %c64_136 = arith.constant 64 : index
    %c0_137 = arith.constant 0 : index
    %100 = vector.load %arg16[%c64_136, %c0_137] : memref<144x384xf32, #tpu.memory_space<vmem>>, vector<8x384xf32>
    tpu.vector_store %arg16[%c64_136, %c0_137], %99 {strides = array<i32>} : memref<144x384xf32, #tpu.memory_space<vmem>>, vector<8x384xf32>,
    %c0_138 = arith.constant 0 : index
    %c0_139 = arith.constant 0 : index
    %101 = vector.load %arg16[%c0_138, %c0_139] : memref<144x384xf32, #tpu.memory_space<vmem>>, vector<72x384xf32>
    %c0_140 = arith.constant 0 : index
    %c0_141 = arith.constant 0 : index
    %102 = vector.load %arg5[%c0_140, %c0_141] : memref<16x72xf32, #tpu.memory_space<vmem>>, vector<16x72xf32>
    %cst_142 = arith.constant dense<0.000000e+00> : vector<16x384xf32>
    %103 = tpu.matmul %102, %101, %cst_142 {dimension_numbers = #tpu.dot_dimension_numbers<[1], [0], [0], [1], [0, 0, 1, 1], [], []>} : vector<16x72xf32>, vector<72x384xf32>, vector<16x384xf32> -> vector<16x384xf32>
    %c0_143 = arith.constant 0 : index
    %c0_144 = arith.constant 0 : index
    %104 = vector.load %arg8[%c0_143, %c0_144] : memref<16x1xf32, #tpu.memory_space<vmem>>, vector<16x1xf32>
    %105 = vector.broadcast %104 : vector<16x1xf32> to vector<16x384xf32>
    %106 = arith.addf %103, %105 : vector<16x384xf32>
    %c2 = arith.constant 2 : index
    %107 = memref.load %arg1[%c2] : memref<5xf32, #tpu.memory_space<smem>>
    %cst_145 = arith.constant 0.000000e+00 : f32
    %108 = vector.broadcast %cst_145 : f32 to vector<16x384xf32>
    %109 = arith.cmpf oge, %106, %108 : vector<16x384xf32>
    %110 = vector.broadcast %107 : f32 to vector<16x384xf32>
    %111 = arith.mulf %110, %106 : vector<16x384xf32>
    %112 = arith.select %109, %106, %111 : vector<16x384xi1>, vector<16x384xf32>
    %c0_146 = arith.constant 0 : index
    %c0_147 = arith.constant 0 : index
    %113 = vector.load %arg10[%c0_146, %c0_147] : memref<1x384xf32, #tpu.memory_space<vmem>>, vector<1x384xf32>
    %114 = vector.broadcast %113 : vector<1x384xf32> to vector<16x384xf32>
    %115 = arith.mulf %112, %114 : vector<16x384xf32>
    %c0_148 = arith.constant 0 : index
    %c128_149 = arith.constant 128 : index
    %116 = vector.load %arg14[%c0_148, %c128_149] : memref<16x640xf32, #tpu.memory_space<vmem>>, vector<16x384xf32>
    tpu.vector_store %arg14[%c0_148, %c128_149], %115 {strides = array<i32>} : memref<16x640xf32, #tpu.memory_space<vmem>>, vector<16x384xf32>,
    %c0_150 = arith.constant 0 : index
    %c109_151 = arith.constant 109 : index
    %117 = vector.load %arg14[%c0_150, %c109_151] : memref<16x640xf32, #tpu.memory_space<vmem>>, vector<16x384xf32>
    %c0_152 = arith.constant 0 : index
    %c0_153 = arith.constant 0 : index
    %118 = vector.load %arg16[%c0_152, %c0_153] : memref<144x384xf32, #tpu.memory_space<vmem>>, vector<16x384xf32>
    tpu.vector_store %arg16[%c0_152, %c0_153], %117 {strides = array<i32>} : memref<144x384xf32, #tpu.memory_space<vmem>>, vector<16x384xf32>,
    %c0_154 = arith.constant 0 : index
    %c110_155 = arith.constant 110 : index
    %119 = vector.load %arg14[%c0_154, %c110_155] : memref<16x640xf32, #tpu.memory_space<vmem>>, vector<16x384xf32>
    %c16_156 = arith.constant 16 : index
    %c0_157 = arith.constant 0 : index
    %120 = vector.load %arg16[%c16_156, %c0_157] : memref<144x384xf32, #tpu.memory_space<vmem>>, vector<16x384xf32>
    tpu.vector_store %arg16[%c16_156, %c0_157], %119 {strides = array<i32>} : memref<144x384xf32, #tpu.memory_space<vmem>>, vector<16x384xf32>,
    %c0_158 = arith.constant 0 : index
    %c111_159 = arith.constant 111 : index
    %121 = vector.load %arg14[%c0_158, %c111_159] : memref<16x640xf32, #tpu.memory_space<vmem>>, vector<16x384xf32>
    %c32_160 = arith.constant 32 : index
    %c0_161 = arith.constant 0 : index
    %122 = vector.load %arg16[%c32_160, %c0_161] : memref<144x384xf32, #tpu.memory_space<vmem>>, vector<16x384xf32>
    tpu.vector_store %arg16[%c32_160, %c0_161], %121 {strides = array<i32>} : memref<144x384xf32, #tpu.memory_space<vmem>>, vector<16x384xf32>,
    %c0_162 = arith.constant 0 : index
    %c127_163 = arith.constant 127 : index
    %123 = vector.load %arg14[%c0_162, %c127_163] : memref<16x640xf32, #tpu.memory_space<vmem>>, vector<16x384xf32>
    %c48_164 = arith.constant 48 : index
    %c0_165 = arith.constant 0 : index
    %124 = vector.load %arg16[%c48_164, %c0_165] : memref<144x384xf32, #tpu.memory_space<vmem>>, vector<16x384xf32>
    tpu.vector_store %arg16[%c48_164, %c0_165], %123 {strides = array<i32>} : memref<144x384xf32, #tpu.memory_space<vmem>>, vector<16x384xf32>,
    %c0_166 = arith.constant 0 : index
    %c128_167 = arith.constant 128 : index
    %125 = vector.load %arg14[%c0_166, %c128_167] : memref<16x640xf32, #tpu.memory_space<vmem>>, vector<16x384xf32>
    %c64_168 = arith.constant 64 : index
    %c0_169 = arith.constant 0 : index
    %126 = vector.load %arg16[%c64_168, %c0_169] : memref<144x384xf32, #tpu.memory_space<vmem>>, vector<16x384xf32>
    tpu.vector_store %arg16[%c64_168, %c0_169], %125 {strides = array<i32>} : memref<144x384xf32, #tpu.memory_space<vmem>>, vector<16x384xf32>,
    %c0_170 = arith.constant 0 : index
    %c129_171 = arith.constant 129 : index
    %127 = vector.load %arg14[%c0_170, %c129_171] : memref<16x640xf32, #tpu.memory_space<vmem>>, vector<16x384xf32>
    %c80 = arith.constant 80 : index
    %c0_172 = arith.constant 0 : index
    %128 = vector.load %arg16[%c80, %c0_172] : memref<144x384xf32, #tpu.memory_space<vmem>>, vector<16x384xf32>
    tpu.vector_store %arg16[%c80, %c0_172], %127 {strides = array<i32>} : memref<144x384xf32, #tpu.memory_space<vmem>>, vector<16x384xf32>,
    %c0_173 = arith.constant 0 : index
    %c145_174 = arith.constant 145 : index
    %129 = vector.load %arg14[%c0_173, %c145_174] : memref<16x640xf32, #tpu.memory_space<vmem>>, vector<16x384xf32>
    %c96 = arith.constant 96 : index
    %c0_175 = arith.constant 0 : index
    %130 = vector.load %arg16[%c96, %c0_175] : memref<144x384xf32, #tpu.memory_space<vmem>>, vector<16x384xf32>
    tpu.vector_store %arg16[%c96, %c0_175], %129 {strides = array<i32>} : memref<144x384xf32, #tpu.memory_space<vmem>>, vector<16x384xf32>,
    %c0_176 = arith.constant 0 : index
    %c146_177 = arith.constant 146 : index
    %131 = vector.load %arg14[%c0_176, %c146_177] : memref<16x640xf32, #tpu.memory_space<vmem>>, vector<16x384xf32>
    %c112 = arith.constant 112 : index
    %c0_178 = arith.constant 0 : index
    %132 = vector.load %arg16[%c112, %c0_178] : memref<144x384xf32, #tpu.memory_space<vmem>>, vector<16x384xf32>
    tpu.vector_store %arg16[%c112, %c0_178], %131 {strides = array<i32>} : memref<144x384xf32, #tpu.memory_space<vmem>>, vector<16x384xf32>,
    %c0_179 = arith.constant 0 : index
    %c147_180 = arith.constant 147 : index
    %133 = vector.load %arg14[%c0_179, %c147_180] : memref<16x640xf32, #tpu.memory_space<vmem>>, vector<16x384xf32>
    %c128_181 = arith.constant 128 : index
    %c0_182 = arith.constant 0 : index
    %134 = vector.load %arg16[%c128_181, %c0_182] : memref<144x384xf32, #tpu.memory_space<vmem>>, vector<16x384xf32>
    tpu.vector_store %arg16[%c128_181, %c0_182], %133 {strides = array<i32>} : memref<144x384xf32, #tpu.memory_space<vmem>>, vector<16x384xf32>,
    %c0_183 = arith.constant 0 : index
    %c0_184 = arith.constant 0 : index
    %135 = vector.load %arg16[%c0_183, %c0_184] : memref<144x384xf32, #tpu.memory_space<vmem>>, vector<144x384xf32>
    %c0_185 = arith.constant 0 : index
    %c0_186 = arith.constant 0 : index
    %136 = vector.load %arg6[%c0_185, %c0_186] : memref<8x144xf32, #tpu.memory_space<vmem>>, vector<8x144xf32>
    %cst_187 = arith.constant dense<0.000000e+00> : vector<8x384xf32>
    %137 = tpu.matmul %136, %135, %cst_187 {dimension_numbers = #tpu.dot_dimension_numbers<[1], [0], [0], [1], [0, 0, 1, 1], [], []>} : vector<8x144xf32>, vector<144x384xf32>, vector<8x384xf32> -> vector<8x384xf32>
    %c0_188 = arith.constant 0 : index
    %c0_189 = arith.constant 0 : index
    %138 = vector.load %arg9[%c0_188, %c0_189] : memref<8x1xf32, #tpu.memory_space<vmem>>, vector<8x1xf32>
    %139 = vector.broadcast %138 : vector<8x1xf32> to vector<8x384xf32>
    %140 = arith.addf %137, %139 : vector<8x384xf32>
    %c3 = arith.constant 3 : index
    %141 = memref.load %arg1[%c3] : memref<5xf32, #tpu.memory_space<smem>>
    %cst_190 = arith.constant 0.000000e+00 : f32
    %142 = vector.broadcast %cst_190 : f32 to vector<8x384xf32>
    %143 = arith.cmpf oge, %140, %142 : vector<8x384xf32>
    %144 = vector.broadcast %141 : f32 to vector<8x384xf32>
    %145 = arith.mulf %144, %140 : vector<8x384xf32>
    %146 = arith.select %143, %140, %145 : vector<8x384xi1>, vector<8x384xf32>
    %c0_191 = arith.constant 0 : index
    %c128_192 = arith.constant 128 : index
    %147 = vector.load %arg12[%c0_191, %c128_192] : memref<8x640xf32, #tpu.memory_space<vmem>>, vector<8x384xf32>
    %148 = arith.addf %146, %147 : vector<8x384xf32>
    %c0_193 = arith.constant 0 : index
    %c0_194 = arith.constant 0 : index
    %149 = vector.load %arg10[%c0_193, %c0_194] : memref<1x384xf32, #tpu.memory_space<vmem>>, vector<1x384xf32>
    %150 = vector.broadcast %149 : vector<1x384xf32> to vector<8x384xf32>
    %151 = arith.mulf %148, %150 : vector<8x384xf32>
    %c0_195 = arith.constant 0 : index
    %c128_196 = arith.constant 128 : index
    %152 = vector.load %arg15[%c0_195, %c128_196] : memref<8x640xf32, #tpu.memory_space<vmem>>, vector<8x384xf32>
    tpu.vector_store %arg15[%c0_195, %c128_196], %151 {strides = array<i32>} : memref<8x640xf32, #tpu.memory_space<vmem>>, vector<8x384xf32>,
    %c0_197 = arith.constant 0 : index
    %c109_198 = arith.constant 109 : index
    %153 = vector.load %arg15[%c0_197, %c109_198] : memref<8x640xf32, #tpu.memory_space<vmem>>, vector<8x384xf32>
    %c0_199 = arith.constant 0 : index
    %c0_200 = arith.constant 0 : index
    %154 = vector.load %arg16[%c0_199, %c0_200] : memref<144x384xf32, #tpu.memory_space<vmem>>, vector<8x384xf32>
    tpu.vector_store %arg16[%c0_199, %c0_200], %153 {strides = array<i32>} : memref<144x384xf32, #tpu.memory_space<vmem>>, vector<8x384xf32>,
    %c0_201 = arith.constant 0 : index
    %c110_202 = arith.constant 110 : index
    %155 = vector.load %arg15[%c0_201, %c110_202] : memref<8x640xf32, #tpu.memory_space<vmem>>, vector<8x384xf32>
    %c8_203 = arith.constant 8 : index
    %c0_204 = arith.constant 0 : index
    %156 = vector.load %arg16[%c8_203, %c0_204] : memref<144x384xf32, #tpu.memory_space<vmem>>, vector<8x384xf32>
    tpu.vector_store %arg16[%c8_203, %c0_204], %155 {strides = array<i32>} : memref<144x384xf32, #tpu.memory_space<vmem>>, vector<8x384xf32>,
    %c0_205 = arith.constant 0 : index
    %c111_206 = arith.constant 111 : index
    %157 = vector.load %arg15[%c0_205, %c111_206] : memref<8x640xf32, #tpu.memory_space<vmem>>, vector<8x384xf32>
    %c16_207 = arith.constant 16 : index
    %c0_208 = arith.constant 0 : index
    %158 = vector.load %arg16[%c16_207, %c0_208] : memref<144x384xf32, #tpu.memory_space<vmem>>, vector<8x384xf32>
    tpu.vector_store %arg16[%c16_207, %c0_208], %157 {strides = array<i32>} : memref<144x384xf32, #tpu.memory_space<vmem>>, vector<8x384xf32>,
    %c0_209 = arith.constant 0 : index
    %c127_210 = arith.constant 127 : index
    %159 = vector.load %arg15[%c0_209, %c127_210] : memref<8x640xf32, #tpu.memory_space<vmem>>, vector<8x384xf32>
    %c24_211 = arith.constant 24 : index
    %c0_212 = arith.constant 0 : index
    %160 = vector.load %arg16[%c24_211, %c0_212] : memref<144x384xf32, #tpu.memory_space<vmem>>, vector<8x384xf32>
    tpu.vector_store %arg16[%c24_211, %c0_212], %159 {strides = array<i32>} : memref<144x384xf32, #tpu.memory_space<vmem>>, vector<8x384xf32>,
    %c0_213 = arith.constant 0 : index
    %c128_214 = arith.constant 128 : index
    %161 = vector.load %arg15[%c0_213, %c128_214] : memref<8x640xf32, #tpu.memory_space<vmem>>, vector<8x384xf32>
    %c32_215 = arith.constant 32 : index
    %c0_216 = arith.constant 0 : index
    %162 = vector.load %arg16[%c32_215, %c0_216] : memref<144x384xf32, #tpu.memory_space<vmem>>, vector<8x384xf32>
    tpu.vector_store %arg16[%c32_215, %c0_216], %161 {strides = array<i32>} : memref<144x384xf32, #tpu.memory_space<vmem>>, vector<8x384xf32>,
    %c0_217 = arith.constant 0 : index
    %c129_218 = arith.constant 129 : index
    %163 = vector.load %arg15[%c0_217, %c129_218] : memref<8x640xf32, #tpu.memory_space<vmem>>, vector<8x384xf32>
    %c40_219 = arith.constant 40 : index
    %c0_220 = arith.constant 0 : index
    %164 = vector.load %arg16[%c40_219, %c0_220] : memref<144x384xf32, #tpu.memory_space<vmem>>, vector<8x384xf32>
    tpu.vector_store %arg16[%c40_219, %c0_220], %163 {strides = array<i32>} : memref<144x384xf32, #tpu.memory_space<vmem>>, vector<8x384xf32>,
    %c0_221 = arith.constant 0 : index
    %c145_222 = arith.constant 145 : index
    %165 = vector.load %arg15[%c0_221, %c145_222] : memref<8x640xf32, #tpu.memory_space<vmem>>, vector<8x384xf32>
    %c48_223 = arith.constant 48 : index
    %c0_224 = arith.constant 0 : index
    %166 = vector.load %arg16[%c48_223, %c0_224] : memref<144x384xf32, #tpu.memory_space<vmem>>, vector<8x384xf32>
    tpu.vector_store %arg16[%c48_223, %c0_224], %165 {strides = array<i32>} : memref<144x384xf32, #tpu.memory_space<vmem>>, vector<8x384xf32>,
    %c0_225 = arith.constant 0 : index
    %c146_226 = arith.constant 146 : index
    %167 = vector.load %arg15[%c0_225, %c146_226] : memref<8x640xf32, #tpu.memory_space<vmem>>, vector<8x384xf32>
    %c56_227 = arith.constant 56 : index
    %c0_228 = arith.constant 0 : index
    %168 = vector.load %arg16[%c56_227, %c0_228] : memref<144x384xf32, #tpu.memory_space<vmem>>, vector<8x384xf32>
    tpu.vector_store %arg16[%c56_227, %c0_228], %167 {strides = array<i32>} : memref<144x384xf32, #tpu.memory_space<vmem>>, vector<8x384xf32>,
    %c0_229 = arith.constant 0 : index
    %c147_230 = arith.constant 147 : index
    %169 = vector.load %arg15[%c0_229, %c147_230] : memref<8x640xf32, #tpu.memory_space<vmem>>, vector<8x384xf32>
    %c64_231 = arith.constant 64 : index
    %c0_232 = arith.constant 0 : index
    %170 = vector.load %arg16[%c64_231, %c0_232] : memref<144x384xf32, #tpu.memory_space<vmem>>, vector<8x384xf32>
    tpu.vector_store %arg16[%c64_231, %c0_232], %169 {strides = array<i32>} : memref<144x384xf32, #tpu.memory_space<vmem>>, vector<8x384xf32>,
    %c0_233 = arith.constant 0 : index
    %c0_234 = arith.constant 0 : index
    %171 = vector.load %arg16[%c0_233, %c0_234] : memref<144x384xf32, #tpu.memory_space<vmem>>, vector<72x384xf32>
    %c0_235 = arith.constant 0 : index
    %c0_236 = arith.constant 0 : index
    %172 = vector.load %arg7[%c0_235, %c0_236] : memref<3x72xf32, #tpu.memory_space<vmem>>, vector<3x72xf32>
    %cst_237 = arith.constant dense<0.000000e+00> : vector<3x384xf32>
    %173 = tpu.matmul %172, %171, %cst_237 {dimension_numbers = #tpu.dot_dimension_numbers<[1], [0], [0], [1], [0, 0, 1, 1], [], []>} : vector<3x72xf32>, vector<72x384xf32>, vector<3x384xf32> -> vector<3x384xf32>
    %c4 = arith.constant 4 : index
    %174 = memref.load %arg1[%c4] : memref<5xf32, #tpu.memory_space<smem>>
    %cst_238 = arith.constant 0.000000e+00 : f32
    %175 = vector.broadcast %cst_238 : f32 to vector<3x384xf32>
    %176 = arith.cmpf oge, %173, %175 : vector<3x384xf32>
    %177 = vector.broadcast %174 : f32 to vector<3x384xf32>
    %178 = arith.mulf %177, %173 : vector<3x384xf32>
    %179 = arith.select %176, %173, %178 : vector<3x384xi1>, vector<3x384xf32>
    %c0_239 = arith.constant 0 : index
    %c0_240 = arith.constant 0 : index
    %c0_241 = arith.constant 0 : index
    %180 = vector.load %arg11[%c0_239, %c0_240, %c0_241] : memref<1x3x384xf32, #tpu.memory_space<vmem>>, vector<1x3x384xf32>
    %181 = vector.shape_cast %180 : vector<1x3x384xf32> to vector<3x384xf32>
    %182 = vector.shape_cast %179 : vector<3x384xf32> to vector<1x3x384xf32>
    tpu.vector_store %arg11[%c0_239, %c0_240, %c0_241], %182 {strides = array<i32>} : memref<1x3x384xf32, #tpu.memory_space<vmem>>, vector<1x3x384xf32>,
    return
  }
  func.func @transform_0(%arg0: i32) -> i32 {
    %c0_i32 = arith.constant 0 : i32
    %c0_i32_0 = arith.constant 0 : i32
    return %c0_i32 : i32
  }
  func.func @transform_1(%arg0: i32) -> (i32, i32, i32) {
    %c0_i32 = arith.constant 0 : i32
    %c0_i32_0 = arith.constant 0 : i32
    %c0_i32_1 = arith.constant 0 : i32
    return %arg0, %c0_i32, %c0_i32_0 : i32, i32, i32
  }
  func.func @transform_2(%arg0: i32) -> (i32, i32) {
    %c0_i32 = arith.constant 0 : i32
    %c0_i32_0 = arith.constant 0 : i32
    %c0_i32_1 = arith.constant 0 : i32
    return %c0_i32, %c0_i32_0 : i32, i32
  }
  func.func @transform_3(%arg0: i32) -> (i32, i32) {
    %c0_i32 = arith.constant 0 : i32
    %c0_i32_0 = arith.constant 0 : i32
    %c0_i32_1 = arith.constant 0 : i32
    return %c0_i32, %c0_i32_0 : i32, i32
  }
  func.func @transform_4(%arg0: i32) -> (i32, i32) {
    %c0_i32 = arith.constant 0 : i32
    %c0_i32_0 = arith.constant 0 : i32
    %c0_i32_1 = arith.constant 0 : i32
    return %c0_i32, %c0_i32_0 : i32, i32
  }
  func.func @transform_5(%arg0: i32) -> (i32, i32) {
    %c0_i32 = arith.constant 0 : i32
    %c0_i32_0 = arith.constant 0 : i32
    %c0_i32_1 = arith.constant 0 : i32
    return %c0_i32, %c0_i32_0 : i32, i32
  }
  func.func @transform_6(%arg0: i32) -> (i32, i32) {
    %c0_i32 = arith.constant 0 : i32
    %c0_i32_0 = arith.constant 0 : i32
    %c0_i32_1 = arith.constant 0 : i32
    return %c0_i32, %c0_i32_0 : i32, i32
  }
  func.func @transform_7(%arg0: i32) -> (i32, i32) {
    %c0_i32 = arith.constant 0 : i32
    %c0_i32_0 = arith.constant 0 : i32
    %c0_i32_1 = arith.constant 0 : i32
    return %c0_i32, %c0_i32_0 : i32, i32
  }
  func.func @transform_8(%arg0: i32) -> (i32, i32) {
    %c0_i32 = arith.constant 0 : i32
    %c0_i32_0 = arith.constant 0 : i32
    %c0_i32_1 = arith.constant 0 : i32
    return %c0_i32, %c0_i32_0 : i32, i32
  }
  func.func @transform_9(%arg0: i32) -> (i32, i32) {
    %c0_i32 = arith.constant 0 : i32
    %c0_i32_0 = arith.constant 0 : i32
    %c0_i32_1 = arith.constant 0 : i32
    return %c0_i32, %c0_i32_0 : i32, i32
  }
  func.func @transform_10(%arg0: i32) -> (i32, i32, i32) {
    %c0_i32 = arith.constant 0 : i32
    %c0_i32_0 = arith.constant 0 : i32
    %c0_i32_1 = arith.constant 0 : i32
    return %arg0, %c0_i32, %c0_i32_0 : i32, i32, i32
  }
}

</mosaic_0001>

<llo_original>
// kernel: net2_forward.1
$region0: #{net2_forward.1}
  #allocation0 [shape = 'u32[]', space=smem, size = 0x4, offset = 0x4, fixed_abs, tag = 'smem constant byte address 0x4 - core index']
  #allocation1 [shape = 'u32[144,128]{1,0:T(1,128)}', space=vmem, size = 0x12000, scoped, tag = 'internal scratch']
  #allocation2 [shape = 'f32[8,640]{1,0:T(8,128)}', space=vmem, size = 0x5000, scoped, tag = 'scratch operand']
  #allocation3 [shape = 'f32[8,640]{1,0:T(8,128)}', space=vmem, size = 0x5000, scoped, tag = 'scratch operand']
  #allocation4 [shape = 'f32[16,640]{1,0:T(8,128)}', space=vmem, size = 0xa000, scoped, tag = 'scratch operand']
  #allocation5 [shape = 'f32[8,640]{1,0:T(8,128)}', space=vmem, size = 0x5000, scoped, tag = 'scratch operand']
  #allocation6 [shape = 'f32[144,384]{1,0:T(8,128)}', space=vmem, size = 0x36000, scoped, tag = 'scratch operand']
  %s0 = inlined_call_operand.vmem [shape: f32[5], index: 0, kind: input, shape index: {}]
  %s1 = inlined_call_operand.vmem [shape: f32[2,8,640], index: 1, kind: input, shape index: {}]
  %s2 = inlined_call_operand.vmem [shape: f32[8,72], index: 2, kind: input, shape index: {}]
  %s3 = inlined_call_operand.vmem [shape: f32[8,72], index: 3, kind: input, shape index: {}]
  %s4 = inlined_call_operand.vmem [shape: f32[16,72], index: 4, kind: input, shape index: {}]
  %s5 = inlined_call_operand.vmem [shape: f32[8,144], index: 5, kind: input, shape index: {}]
  %s6 = inlined_call_operand.vmem [shape: f32[3,72], index: 6, kind: input, shape index: {}]
  %s7 = inlined_call_operand.vmem [shape: f32[16,1], index: 7, kind: input, shape index: {}]
  %s8 = inlined_call_operand.vmem [shape: f32[8,1], index: 8, kind: input, shape index: {}]
  %s9 = inlined_call_operand.vmem [shape: f32[1,384], index: 9, kind: input, shape index: {}]
  %s10 = inlined_call_operand.vmem [shape: f32[2,3,384], index: 10, kind: output, shape index: {}]
  %s11 = sld [smem:[#allocation0]]
  $region77: #{net2_forward.1} parent=0
    _
  %s13 = ssub.s32 1, %s11
  %s14 = scalar_select 0, %s13, %s11
  $region1: #{net2_forward.1} parent=0
    #allocation7 [shape = 'u8[512]{0}', space=smem, size = 0x200, scoped, tag = 'input window, operand 0, single buffered']
    #allocation8 [shape = 's32[2]{0}', space=sflag, size = 0x8, scoped, tag = 'scoped memory for net2_forward.1']
    %15 = vsyncpa [#allocation8], 0
    loop: start=0, step=1, limit=4
    $region2: #{net2_forward.1} parent=1 // loop_pre_header
      _
    $region3: #{net2_forward.1} parent=1 // loop_header
      %s17 = sphi 0, %s21
      %p18 = scmp.ge.s32.totalorder %s17, 4
      %s25 = sphi 0, %s25
      %s27 = sphi 0, %s25
      %s28 = sphi 0, %s27
      %s42 = sphi 0, %s28
      %s48 = sphi 0, %s50
      %s51 = sphi 0, %s48
      %s52 = sphi 0, %s51
      %s68 = sphi 0, %s52
      %s72 = sphi 0, %s72
      %s74 = sphi 0, %s72
      %s75 = sphi 0, %s74
      %s89 = sphi 0, %s75
      %s93 = sphi 0, %s93
      %s95 = sphi 0, %s93
      %s96 = sphi 0, %s95
      %s110 = sphi 0, %s96
      %s114 = sphi 0, %s114
      %s116 = sphi 0, %s114
      %s117 = sphi 0, %s116
      %s131 = sphi 0, %s117
      %s135 = sphi 0, %s135
      %s137 = sphi 0, %s135
      %s138 = sphi 0, %s137
      %s152 = sphi 0, %s138
      %s156 = sphi 0, %s156
      %s158 = sphi 0, %s156
      %s159 = sphi 0, %s158
      %s173 = sphi 0, %s159
      %s177 = sphi 0, %s177
      %s179 = sphi 0, %s177
      %s180 = sphi 0, %s179
      %s194 = sphi 0, %s180
      %s198 = sphi 0, %s198
      %s200 = sphi 0, %s198
      %s201 = sphi 0, %s200
      %s215 = sphi 0, %s201
      %s219 = sphi 0, %s219
      %s221 = sphi 0, %s219
      %s222 = sphi 0, %s221
      %s236 = sphi 0, %s222
      %s242 = sphi 0, %s244
      %s245 = sphi 0, %s242
      %s246 = sphi 0, %s245
      %s262 = sphi 0, %s246
    $region4: #{net2_forward.1} parent=1 // loop_header_branch
      %20 = sbr.rel (%p18) target = $region8
    $region5: #{net2_forward.1} parent=1 // loop_body
      %s22 = ssub.s32 %s17, 1
      %s23 = ssub.s32 %s17, 2
      %s24 = sadd.s32 %s17, 1
      %s26 = sadd.s32 %s25, 1
      %p29 = scmp.eq.s32.totalorder %s17, 1
      %p30 = scmp.ne.s32.totalorder %s25, %s27
      %p31 = scmp.eq.s32.totalorder %s17, 0
      %p32 = por %p30, %p31
      %p33 = scmp.ne.s32.totalorder %s25, %s27
      %p34 = scmp.eq.s32.totalorder %s22, 1
      %p35 = por %p33, %p34
      %p36 = scmp.ne.s32.totalorder %s27, %s28
      %p37 = scmp.eq.s32.totalorder %s22, 0
      %p38 = por %p36, %p37
      %p39 = scmp.ne.s32.totalorder %s27, %s28
      %p40 = scmp.eq.s32.totalorder %s23, 1
      %p41 = por %p39, %p40
      %p43 = scmp.ne.s32.totalorder %s28, %s42
      %p44 = scmp.eq.s32.totalorder %s23, 0
      %p45 = por %p43, %p44
      %s46 = ssub.s32 %s17, %s24
      %p47 = scmp.eq.s32.totalorder %s46, 0
      %s49 = sadd.s32 %s48, 1
      %s50 = scalar_select %p47, %s48, %s49
      %p53 = pneg %p47
      %p54 = scmp.eq.s32.totalorder %s17, 1
      %p55 = por %p53, %p54
      %p56 = scmp.ne.s32.totalorder %s48, %s51
      %p57 = scmp.eq.s32.totalorder %s17, 0
      %p58 = por %p56, %p57
      %p59 = scmp.ne.s32.totalorder %s48, %s51
      %p60 = scmp.eq.s32.totalorder %s22, 1
      %p61 = por %p59, %p60
      %p62 = scmp.ne.s32.totalorder %s51, %s52
      %p63 = scmp.eq.s32.totalorder %s22, 0
      %p64 = por %p62, %p63
      %p65 = scmp.ne.s32.totalorder %s51, %s52
      %p66 = scmp.eq.s32.totalorder %s23, 1
      %p67 = por %p65, %p66
      %p69 = scmp.ne.s32.totalorder %s52, %s68
      %p70 = scmp.eq.s32.totalorder %s23, 0
      %p71 = por %p69, %p70
      %s73 = sadd.s32 %s72, 1
      %p76 = scmp.eq.s32.totalorder %s17, 1
      %p77 = scmp.ne.s32.totalorder %s72, %s74
      %p78 = scmp.eq.s32.totalorder %s17, 0
      %p79 = por %p77, %p78
      %p80 = scmp.ne.s32.totalorder %s72, %s74
      %p81 = scmp.eq.s32.totalorder %s22, 1
      %p82 = por %p80, %p81
      %p83 = scmp.ne.s32.totalorder %s74, %s75
      %p84 = scmp.eq.s32.totalorder %s22, 0
      %p85 = por %p83, %p84
      %p86 = scmp.ne.s32.totalorder %s74, %s75
      %p87 = scmp.eq.s32.totalorder %s23, 1
      %p88 = por %p86, %p87
      %p90 = scmp.ne.s32.totalorder %s75, %s89
      %p91 = scmp.eq.s32.totalorder %s23, 0
      %p92 = por %p90, %p91
      %s94 = sadd.s32 %s93, 1
      %p97 = scmp.eq.s32.totalorder %s17, 1
      %p98 = scmp.ne.s32.totalorder %s93, %s95
      %p99 = scmp.eq.s32.totalorder %s17, 0
      %p100 = por %p98, %p99
      %p101 = scmp.ne.s32.totalorder %s93, %s95
      %p102 = scmp.eq.s32.totalorder %s22, 1
      %p103 = por %p101, %p102
      %p104 = scmp.ne.s32.totalorder %s95, %s96
      %p105 = scmp.eq.s32.totalorder %s22, 0
      %p106 = por %p104, %p105
      %p107 = scmp.ne.s32.totalorder %s95, %s96
      %p108 = scmp.eq.s32.totalorder %s23, 1
      %p109 = por %p107, %p108
      %p111 = scmp.ne.s32.totalorder %s96, %s110
      %p112 = scmp.eq.s32.totalorder %s23, 0
      %p113 = por %p111, %p112
      %s115 = sadd.s32 %s114, 1
      %p118 = scmp.eq.s32.totalorder %s17, 1
      %p119 = scmp.ne.s32.totalorder %s114, %s116
      %p120 = scmp.eq.s32.totalorder %s17, 0
      %p121 = por %p119, %p120
      %p122 = scmp.ne.s32.totalorder %s114, %s116
      %p123 = scmp.eq.s32.totalorder %s22, 1
      %p124 = por %p122, %p123
      %p125 = scmp.ne.s32.totalorder %s116, %s117
      %p126 = scmp.eq.s32.totalorder %s22, 0
      %p127 = por %p125, %p126
      %p128 = scmp.ne.s32.totalorder %s116, %s117
      %p129 = scmp.eq.s32.totalorder %s23, 1
      %p130 = por %p128, %p129
      %p132 = scmp.ne.s32.totalorder %s117, %s131
      %p133 = scmp.eq.s32.totalorder %s23, 0
      %p134 = por %p132, %p133
      %s136 = sadd.s32 %s135, 1
      %p139 = scmp.eq.s32.totalorder %s17, 1
      %p140 = scmp.ne.s32.totalorder %s135, %s137
      %p141 = scmp.eq.s32.totalorder %s17, 0
      %p142 = por %p140, %p141
      %p143 = scmp.ne.s32.totalorder %s135, %s137
      %p144 = scmp.eq.s32.totalorder %s22, 1
      %p145 = por %p143, %p144
      %p146 = scmp.ne.s32.totalorder %s137, %s138
      %p147 = scmp.eq.s32.totalorder %s22, 0
      %p148 = por %p146, %p147
      %p149 = scmp.ne.s32.totalorder %s137, %s138
      %p150 = scmp.eq.s32.totalorder %s23, 1
      %p151 = por %p149, %p150
      %p153 = scmp.ne.s32.totalorder %s138, %s152
      %p154 = scmp.eq.s32.totalorder %s23, 0
      %p155 = por %p153, %p154
      %s157 = sadd.s32 %s156, 1
      %p160 = scmp.eq.s32.totalorder %s17, 1
      %p161 = scmp.ne.s32.totalorder %s156, %s158
      %p162 = scmp.eq.s32.totalorder %s17, 0
      %p163 = por %p161, %p162
      %p164 = scmp.ne.s32.totalorder %s156, %s158
      %p165 = scmp.eq.s32.totalorder %s22, 1
      %p166 = por %p164, %p165
      %p167 = scmp.ne.s32.totalorder %s158, %s159
      %p168 = scmp.eq.s32.totalorder %s22, 0
      %p169 = por %p167, %p168
      %p170 = scmp.ne.s32.totalorder %s158, %s159
      %p171 = scmp.eq.s32.totalorder %s23, 1
      %p172 = por %p170, %p171
      %p174 = scmp.ne.s32.totalorder %s159, %s173
      %p175 = scmp.eq.s32.totalorder %s23, 0
      %p176 = por %p174, %p175
      %s178 = sadd.s32 %s177, 1
      %p181 = scmp.eq.s32.totalorder %s17, 1
      %p182 = scmp.ne.s32.totalorder %s177, %s179
      %p183 = scmp.eq.s32.totalorder %s17, 0
      %p184 = por %p182, %p183
      %p185 = scmp.ne.s32.totalorder %s177, %s179
      %p186 = scmp.eq.s32.totalorder %s22, 1
      %p187 = por %p185, %p186
      %p188 = scmp.ne.s32.totalorder %s179, %s180
      %p189 = scmp.eq.s32.totalorder %s22, 0
      %p190 = por %p188, %p189
      %p191 = scmp.ne.s32.totalorder %s179, %s180
      %p192 = scmp.eq.s32.totalorder %s23, 1
      %p193 = por %p191, %p192
      %p195 = scmp.ne.s32.totalorder %s180, %s194
      %p196 = scmp.eq.s32.totalorder %s23, 0
      %p197 = por %p195, %p196
      %s199 = sadd.s32 %s198, 1
      %p202 = scmp.eq.s32.totalorder %s17, 1
      %p203 = scmp.ne.s32.totalorder %s198, %s200
      %p204 = scmp.eq.s32.totalorder %s17, 0
      %p205 = por %p203, %p204
      %p206 = scmp.ne.s32.totalorder %s198, %s200
      %p207 = scmp.eq.s32.totalorder %s22, 1
      %p208 = por %p206, %p207
      %p209 = scmp.ne.s32.totalorder %s200, %s201
      %p210 = scmp.eq.s32.totalorder %s22, 0
      %p211 = por %p209, %p210
      %p212 = scmp.ne.s32.totalorder %s200, %s201
      %p213 = scmp.eq.s32.totalorder %s23, 1
      %p214 = por %p212, %p213
      %p216 = scmp.ne.s32.totalorder %s201, %s215
      %p217 = scmp.eq.s32.totalorder %s23, 0
      %p218 = por %p216, %p217
      %s220 = sadd.s32 %s219, 1
      %p223 = scmp.eq.s32.totalorder %s17, 1
      %p224 = scmp.ne.s32.totalorder %s219, %s221
      %p225 = scmp.eq.s32.totalorder %s17, 0
      %p226 = por %p224, %p225
      %p227 = scmp.ne.s32.totalorder %s219, %s221
      %p228 = scmp.eq.s32.totalorder %s22, 1
      %p229 = por %p227, %p228
      %p230 = scmp.ne.s32.totalorder %s221, %s222
      %p231 = scmp.eq.s32.totalorder %s22, 0
      %p232 = por %p230, %p231
      %p233 = scmp.ne.s32.totalorder %s221, %s222
      %p234 = scmp.eq.s32.totalorder %s23, 1
      %p235 = por %p233, %p234
      %p237 = scmp.ne.s32.totalorder %s222, %s236
      %p238 = scmp.eq.s32.totalorder %s23, 0
      %p239 = por %p237, %p238
      %s240 = ssub.s32 %s17, %s24
      %p241 = scmp.eq.s32.totalorder %s240, 0
      %s243 = sadd.s32 %s242, 1
      %s244 = scalar_select %p241, %s242, %s243
      %p247 = pneg %p241
      %p248 = scmp.eq.s32.totalorder %s17, 1
      %p249 = por %p247, %p248
      %p250 = scmp.ne.s32.totalorder %s242, %s245
      %p251 = scmp.eq.s32.totalorder %s17, 0
      %p252 = por %p250, %p251
      %p253 = scmp.ne.s32.totalorder %s242, %s245
      %p254 = scmp.eq.s32.totalorder %s22, 1
      %p255 = por %p253, %p254
      %p256 = scmp.ne.s32.totalorder %s245, %s246
      %p257 = scmp.eq.s32.totalorder %s22, 0
      %p258 = por %p256, %p257
      %p259 = scmp.ne.s32.totalorder %s245, %s246
      %p260 = scmp.eq.s32.totalorder %s23, 1
      %p261 = por %p259, %p260
      %p263 = scmp.ne.s32.totalorder %s246, %s262
      %p264 = scmp.eq.s32.totalorder %s23, 0
      %p265 = por %p263, %p264
      %p266 = scmp.le.s32.totalorder 1, %s17
      %p267 = scmp.lt.s32.totalorder %s17, 3
      %p268 = pnand %p266, %p267
      %p269 = pneg %p268
      // Predicated region
      $region9: #{net2_forward.1} parent=5 // pred_check
        _
      $region10: #{net2_forward.1} parent=5 // pred_check_branch
        %271 = sbr.rel (%p268) target = $region12
      $region11: #{net2_forward.1} parent=5 // pred_region
        %s272 = ssub.s32 %s17, 1
        // Predicated region
        $region13: #{net2_forward.1} parent=11 // pred_check
          %p273 = pneg %p38
        $region14: #{net2_forward.1} parent=11 // pred_check_branch
          %275 = sbr.rel (%p273) target = $region16
        $region15: #{net2_forward.1} parent=11 // pred_region
          %s277 = ssub.s32 16, 16
          %278 = vsyncadd [#allocation8], %s277
          %s280 = sshll.u32 %s0, 4
          %s281 = int_to_ptr.vmem [resolvable:$true] %s280
          %283 = dma.vmem_to_smem %s281, 16, [#allocation7], [#allocation8]
        $region16: #{net2_forward.1} parent=11 // pred_fallthru
          _
        // Predicated region
        $region17: #{net2_forward.1} parent=11 // pred_check
          %p284 = pneg %p85
        $region18: #{net2_forward.1} parent=11 // pred_check_branch
          %286 = sbr.rel (%p284) target = $region20
        $region19: #{net2_forward.1} parent=11 // pred_region
          _
        $region20: #{net2_forward.1} parent=11 // pred_fallthru
          _
        // Predicated region
        $region21: #{net2_forward.1} parent=11 // pred_check
          %p287 = pneg %p106
        $region22: #{net2_forward.1} parent=11 // pred_check_branch
          %289 = sbr.rel (%p287) target = $region24
        $region23: #{net2_forward.1} parent=11 // pred_region
          _
        $region24: #{net2_forward.1} parent=11 // pred_fallthru
          _
        // Predicated region
        $region25: #{net2_forward.1} parent=11 // pred_check
          %p290 = pneg %p127
        $region26: #{net2_forward.1} parent=11 // pred_check_branch
          %292 = sbr.rel (%p290) target = $region28
        $region27: #{net2_forward.1} parent=11 // pred_region
          _
        $region28: #{net2_forward.1} parent=11 // pred_fallthru
          _
        // Predicated region
        $region29: #{net2_forward.1} parent=11 // pred_check
          %p293 = pneg %p148
        $region30: #{net2_forward.1} parent=11 // pred_check_branch
          %295 = sbr.rel (%p293) target = $region32
        $region31: #{net2_forward.1} parent=11 // pred_region
          _
        $region32: #{net2_forward.1} parent=11 // pred_fallthru
          _
        // Predicated region
        $region33: #{net2_forward.1} parent=11 // pred_check
          %p296 = pneg %p169
        $region34: #{net2_forward.1} parent=11 // pred_check_branch
          %298 = sbr.rel (%p296) target = $region36
        $region35: #{net2_forward.1} parent=11 // pred_region
          _
        $region36: #{net2_forward.1} parent=11 // pred_fallthru
          _
        // Predicated region
        $region37: #{net2_forward.1} parent=11 // pred_check
          %p299 = pneg %p190
        $region38: #{net2_forward.1} parent=11 // pred_check_branch
          %301 = sbr.rel (%p299) target = $region40
        $region39: #{net2_forward.1} parent=11 // pred_region
          _
        $region40: #{net2_forward.1} parent=11 // pred_fallthru
          _
        // Predicated region
        $region41: #{net2_forward.1} parent=11 // pred_check
          %p302 = pneg %p211
        $region42: #{net2_forward.1} parent=11 // pred_check_branch
          %304 = sbr.rel (%p302) target = $region44
        $region43: #{net2_forward.1} parent=11 // pred_region
          _
        $region44: #{net2_forward.1} parent=11 // pred_fallthru
          _
        // Predicated region
        $region45: #{net2_forward.1} parent=11 // pred_check
          %p305 = pneg %p232
        $region46: #{net2_forward.1} parent=11 // pred_check_branch
          %307 = sbr.rel (%p305) target = $region48
        $region47: #{net2_forward.1} parent=11 // pred_region
          _
        $region48: #{net2_forward.1} parent=11 // pred_fallthru
          _
      $region12: #{net2_forward.1} parent=5 // pred_fallthru
        _
      %p308 = scmp.lt.s32.totalorder %s17, 2
      // Predicated region
      $region49: #{net2_forward.1} parent=5 // pred_check
        %p309 = pneg %p308
      $region50: #{net2_forward.1} parent=5 // pred_check_branch
        %311 = sbr.rel (%p309) target = $region52
      $region51: #{net2_forward.1} parent=5 // pred_region
        // Predicated region
        $region53: #{net2_forward.1} parent=51 // pred_check
          %p312 = pneg %p58
        $region54: #{net2_forward.1} parent=51 // pred_check_branch
          %314 = sbr.rel (%p312) target = $region56
        $region55: #{net2_forward.1} parent=51 // pred_region
          %p315 = scmp.lt.s32.totalorder %s17, 1
          %s316 = scalar_select %p315, %s17, 1
          %s317 = smul.addr %s316, 5
          %s318 = smul.addr %s317, 8
          %s319 = scalar_lea.vmem %s1, %s318
        $region56: #{net2_forward.1} parent=51 // pred_fallthru
          _
      $region52: #{net2_forward.1} parent=5 // pred_fallthru
        _
      %p320 = scmp.le.s32.totalorder 1, %s17
      %p321 = scmp.lt.s32.totalorder %s17, 3
      %p322 = pnand %p320, %p321
      %p323 = pneg %p322
      // Predicated region
      $region57: #{net2_forward.1} parent=5 // pred_check
        _
      $region58: #{net2_forward.1} parent=5 // pred_check_branch
        %325 = sbr.rel (%p322) target = $region60
      $region59: #{net2_forward.1} parent=5 // pred_region
        %s326 = ssub.s32 %s17, 1
        // Predicated region
        $region61: #{net2_forward.1} parent=59 // pred_check
          %p327 = pneg %p38
        $region62: #{net2_forward.1} parent=59 // pred_check_branch
          %329 = sbr.rel (%p327) target = $region64
        $region63: #{net2_forward.1} parent=59 // pred_region
          %330 = dma.done [#allocation8], 16
        $region64: #{net2_forward.1} parent=59 // pred_fallthru
          _
        %331 = sfence
        %p332 = pneg %p38
        %p333 = pneg %p35
        %p334 = scmp.lt.s32.totalorder %s22, 1
        %s335 = scalar_select %p334, %s22, 1
        %s336 = smul.addr %s335, 5
        %s337 = smul.addr %s336, 8
        %s338 = scalar_lea.vmem %s1, %s337
        %p339 = pneg %p64
        %p340 = pneg %p61
        %p341 = pneg %p85
        %p342 = pneg %p82
        %p343 = pneg %p106
        %p344 = pneg %p103
        %p345 = pneg %p127
        %p346 = pneg %p124
        %p347 = pneg %p148
        %p348 = pneg %p145
        %p349 = pneg %p169
        %p350 = pneg %p166
        %p351 = pneg %p190
        %p352 = pneg %p187
        %p353 = pneg %p211
        %p354 = pneg %p208
        %p355 = pneg %p232
        %p356 = pneg %p229
        %p357 = pneg %p258
        %p358 = pneg %p255
        %p359 = scmp.lt.s32.totalorder %s22, 1
        %s360 = scalar_select %p359, %s22, 1
        %s361 = smul.addr %s360, 3
        %s362 = smul.addr %s361, 4
        %s363 = scalar_lea.vmem %s10, %s362
        %p364 = scmp.lt.s32.totalorder %s22, 1
        %s365 = scalar_select %p364, %s22, 1
        %s366 = smul.addr %s365, 5
        %s367 = smul.addr %s366, 8
        %s368 = scalar_lea.vmem %s1, %s367
        %p369 = scmp.lt.s32.totalorder %s22, 1
        %s370 = scalar_select %p369, %s22, 1
        %s371 = smul.addr %s370, 3
        %s372 = smul.addr %s371, 4
        %s373 = scalar_lea.vmem %s10, %s372
        %374 = vst [vmem:[#allocation2] sm:$0xff] 0.0
        %375 = vst [vmem:[#allocation2 + $0x20] sm:$0xff] 0.0
        %376 = vst [vmem:[#allocation3] sm:$0xff] 0.0
        %377 = vst [vmem:[#allocation3 + $0x20] sm:$0xff] 0.0
        %378 = vst [vmem:[#allocation4] sm:$0xff] 0.0
        %379 = vst [vmem:[#allocation4 + $0x28] sm:$0xff] 0.0
        %380 = vst [vmem:[#allocation4 + $0x20] sm:$0xff] 0.0
        %381 = vst [vmem:[#allocation4 + $0x48] sm:$0xff] 0.0
        %382 = vst [vmem:[#allocation5] sm:$0xff] 0.0
        %383 = vst [vmem:[#allocation5 + $0x20] sm:$0xff] 0.0
        %v384 = vld [vmem:[%s368] sm:$0xff]
        %v385 = vld [vmem:[%s368 + $0x8] sm:$0xff]
        %v386 = vld [vmem:[%s368 + $0x10] sm:$0xff]
        %v387 = vld [vmem:[%s368 + $0x18] sm:$0xff]
        %392 = vrot.lane.b32.xlu0 %v384, 19
        %v393 = vpop.permute.xlu0 %392
        %394 = vrot.lane.b32.xlu0 %v385, 19
        %v395 = vpop.permute.xlu0 %394
        %396 = vrot.lane.b32.xlu0 %v386, 19
        %v397 = vpop.permute.xlu0 %396
        %398 = vrot.lane.b32.xlu0 %v387, 19
        %v399 = vpop.permute.xlu0 %398
        %vm400 = vcmask 154624
        %v401 = vsel %vm400, %v393, %v395
        %v402 = vsel %vm400, %v395, %v397
        %v403 = vsel %vm400, %v397, %v399
        %407 = vst [vmem:[#allocation6] sm:$0xff] %v401
        %408 = vst [vmem:[#allocation6 + $0x8] sm:$0xff] %v402
        %409 = vst [vmem:[#allocation6 + $0x10] sm:$0xff] %v403
        %v410 = vld [vmem:[%s368] sm:$0xff]
        %v411 = vld [vmem:[%s368 + $0x8] sm:$0xff]
        %v412 = vld [vmem:[%s368 + $0x10] sm:$0xff]
        %v413 = vld [vmem:[%s368 + $0x18] sm:$0xff]
        %418 = vrot.lane.b32.xlu0 %v410, 18
        %v419 = vpop.permute.xlu0 %418
        %420 = vrot.lane.b32.xlu0 %v411, 18
        %v421 = vpop.permute.xlu0 %420
        %422 = vrot.lane.b32.xlu0 %v412, 18
        %v423 = vpop.permute.xlu0 %422
        %424 = vrot.lane.b32.xlu0 %v413, 18
        %v425 = vpop.permute.xlu0 %424
        %vm426 = vcmask 146432
        %v427 = vsel %vm426, %v419, %v421
        %v428 = vsel %vm426, %v421, %v423
        %v429 = vsel %vm426, %v423, %v425
        %433 = vst [vmem:[#allocation6 + $0x18] sm:$0xff] %v427
        %434 = vst [vmem:[#allocation6 + $0x20] sm:$0xff] %v428
        %435 = vst [vmem:[#allocation6 + $0x28] sm:$0xff] %v429
        %v436 = vld [vmem:[%s368] sm:$0xff]
        %v437 = vld [vmem:[%s368 + $0x8] sm:$0xff]
        %v438 = vld [vmem:[%s368 + $0x10] sm:$0xff]
        %v439 = vld [vmem:[%s368 + $0x18] sm:$0xff]
        %444 = vrot.lane.b32.xlu0 %v436, 17
        %v445 = vpop.permute.xlu0 %444
        %446 = vrot.lane.b32.xlu0 %v437, 17
        %v447 = vpop.permute.xlu0 %446
        %448 = vrot.lane.b32.xlu0 %v438, 17
        %v449 = vpop.permute.xlu0 %448
        %450 = vrot.lane.b32.xlu0 %v439, 17
        %v451 = vpop.permute.xlu0 %450
        %vm452 = vcmask 138240
        %v453 = vsel %vm452, %v445, %v447
        %v454 = vsel %vm452, %v447, %v449
        %v455 = vsel %vm452, %v449, %v451
        %459 = vst [vmem:[#allocation6 + $0x30] sm:$0xff] %v453
        %460 = vst [vmem:[#allocation6 + $0x38] sm:$0xff] %v454
        %461 = vst [vmem:[#allocation6 + $0x40] sm:$0xff] %v455
        %v462 = vld [vmem:[%s368] sm:$0xff]
        %v463 = vld [vmem:[%s368 + $0x8] sm:$0xff]
        %v464 = vld [vmem:[%s368 + $0x10] sm:$0xff]
        %v465 = vld [vmem:[%s368 + $0x18] sm:$0xff]
        %470 = vrot.lane.b32.xlu0 %v462, 1
        %v471 = vpop.permute.xlu0 %470
        %472 = vrot.lane.b32.xlu0 %v463, 1
        %v473 = vpop.permute.xlu0 %472
        %474 = vrot.lane.b32.xlu0 %v464, 1
        %v475 = vpop.permute.xlu0 %474
        %476 = vrot.lane.b32.xlu0 %v465, 1
        %v477 = vpop.permute.xlu0 %476
        %vm478 = vcmask 7168
        %v479 = vsel %vm478, %v471, %v473
        %v480 = vsel %vm478, %v473, %v475
        %v481 = vsel %vm478, %v475, %v477
        %485 = vst [vmem:[#allocation6 + $0x48] sm:$0xff] %v479
        %486 = vst [vmem:[#allocation6 + $0x50] sm:$0xff] %v480
        %487 = vst [vmem:[#allocation6 + $0x58] sm:$0xff] %v481
        %v488 = vld [vmem:[%s368 + $0x8] sm:$0xff]
        %v489 = vld [vmem:[%s368 + $0x10] sm:$0xff]
        %v490 = vld [vmem:[%s368 + $0x18] sm:$0xff]
        %491 = vst [vmem:[#allocation6 + $0x60] sm:$0xff] %v488
        %492 = vst [vmem:[#allocation6 + $0x68] sm:$0xff] %v489
        %493 = vst [vmem:[#allocation6 + $0x70] sm:$0xff] %v490
        %v494 = vld [vmem:[%s368 + $0x8] sm:$0xff]
        %v495 = vld [vmem:[%s368 + $0x10] sm:$0xff]
        %v496 = vld [vmem:[%s368 + $0x18] sm:$0xff]
        %v497 = vld [vmem:[%s368 + $0x20] sm:$0xff]
        %502 = vrot.lane.b32.xlu0 %v494, 127
        %v503 = vpop.permute.xlu0 %502
        %504 = vrot.lane.b32.xlu0 %v495, 127
        %v505 = vpop.permute.xlu0 %504
        %506 = vrot.lane.b32.xlu0 %v496, 127
        %v507 = vpop.permute.xlu0 %506
        %508 = vrot.lane.b32.xlu0 %v497, 127
        %v509 = vpop.permute.xlu0 %508
        %vm510 = vcmask 1039360
        %v511 = vsel %vm510, %v503, %v505
        %v512 = vsel %vm510, %v505, %v507
        %v513 = vsel %vm510, %v507, %v509
        %517 = vst [vmem:[#allocation6 + $0x78] sm:$0xff] %v511
        %518 = vst [vmem:[#allocation6 + $0x80] sm:$0xff] %v512
        %519 = vst [vmem:[#allocation6 + $0x88] sm:$0xff] %v513
        %v520 = vld [vmem:[%s368 + $0x8] sm:$0xff]
        %v521 = vld [vmem:[%s368 + $0x10] sm:$0xff]
        %v522 = vld [vmem:[%s368 + $0x18] sm:$0xff]
        %v523 = vld [vmem:[%s368 + $0x20] sm:$0xff]
        %528 = vrot.lane.b32.xlu0 %v520, 111
        %v529 = vpop.permute.xlu0 %528
        %530 = vrot.lane.b32.xlu0 %v521, 111
        %v531 = vpop.permute.xlu0 %530
        %532 = vrot.lane.b32.xlu0 %v522, 111
        %v533 = vpop.permute.xlu0 %532
        %534 = vrot.lane.b32.xlu0 %v523, 111
        %v535 = vpop.permute.xlu0 %534
        %vm536 = vcmask 908288
        %v537 = vsel %vm536, %v529, %v531
        %v538 = vsel %vm536, %v531, %v533
        %v539 = vsel %vm536, %v533, %v535
        %543 = vst [vmem:[#allocation6 + $0x90] sm:$0xff] %v537
        %544 = vst [vmem:[#allocation6 + $0x98] sm:$0xff] %v538
        %545 = vst [vmem:[#allocation6 + $0xa0] sm:$0xff] %v539
        %v546 = vld [vmem:[%s368 + $0x8] sm:$0xff]
        %v547 = vld [vmem:[%s368 + $0x10] sm:$0xff]
        %v548 = vld [vmem:[%s368 + $0x18] sm:$0xff]
        %v549 = vld [vmem:[%s368 + $0x20] sm:$0xff]
        %554 = vrot.lane.b32.xlu0 %v546, 110
        %v555 = vpop.permute.xlu0 %554
        %556 = vrot.lane.b32.xlu0 %v547, 110
        %v557 = vpop.permute.xlu0 %556
        %558 = vrot.lane.b32.xlu0 %v548, 110
        %v559 = vpop.permute.xlu0 %558
        %560 = vrot.lane.b32.xlu0 %v549, 110
        %v561 = vpop.permute.xlu0 %560
        %vm562 = vcmask 900096
        %v563 = vsel %vm562, %v555, %v557
        %v564 = vsel %vm562, %v557, %v559
        %v565 = vsel %vm562, %v559, %v561
        %569 = vst [vmem:[#allocation6 + $0xa8] sm:$0xff] %v563
        %570 = vst [vmem:[#allocation6 + $0xb0] sm:$0xff] %v564
        %571 = vst [vmem:[#allocation6 + $0xb8] sm:$0xff] %v565
        %v572 = vld [vmem:[%s368 + $0x8] sm:$0xff]
        %v573 = vld [vmem:[%s368 + $0x10] sm:$0xff]
        %v574 = vld [vmem:[%s368 + $0x18] sm:$0xff]
        %v575 = vld [vmem:[%s368 + $0x20] sm:$0xff]
        %580 = vrot.lane.b32.xlu0 %v572, 109
        %v581 = vpop.permute.xlu0 %580
        %582 = vrot.lane.b32.xlu0 %v573, 109
        %v583 = vpop.permute.xlu0 %582
        %584 = vrot.lane.b32.xlu0 %v574, 109
        %v585 = vpop.permute.xlu0 %584
        %586 = vrot.lane.b32.xlu0 %v575, 109
        %v587 = vpop.permute.xlu0 %586
        %vm588 = vcmask 891904
        %v589 = vsel %vm588, %v581, %v583
        %v590 = vsel %vm588, %v583, %v585
        %v591 = vsel %vm588, %v585, %v587
        %595 = vst [vmem:[#allocation6 + $0xc0] sm:$0xff] %v589
        %596 = vst [vmem:[#allocation6 + $0xc8] sm:$0xff] %v590
        %597 = vst [vmem:[#allocation6 + $0xd0] sm:$0xff] %v591
        %v598 = vld [vmem:[#allocation6] sm:$0xff]
        %v599 = vld [vmem:[#allocation6 + $0x8] sm:$0xff]
        %v600 = vld [vmem:[#allocation6 + $0x10] sm:$0xff]
        %v601 = vld [vmem:[#allocation6 + $0x18] sm:$0xff]
        %v602 = vld [vmem:[#allocation6 + $0x20] sm:$0xff]
        %v603 = vld [vmem:[#allocation6 + $0x28] sm:$0xff]
        %v604 = vld [vmem:[#allocation6 + $0x30] sm:$0xff]
        %v605 = vld [vmem:[#allocation6 + $0x38] sm:$0xff]
        %v606 = vld [vmem:[#allocation6 + $0x40] sm:$0xff]
        %v607 = vld [vmem:[#allocation6 + $0x48] sm:$0xff]
        %v608 = vld [vmem:[#allocation6 + $0x50] sm:$0xff]
        %v609 = vld [vmem:[#allocation6 + $0x58] sm:$0xff]
        %v610 = vld [vmem:[#allocation6 + $0x60] sm:$0xff]
        %v611 = vld [vmem:[#allocation6 + $0x68] sm:$0xff]
        %v612 = vld [vmem:[#allocation6 + $0x70] sm:$0xff]
        %v613 = vld [vmem:[#allocation6 + $0x78] sm:$0xff]
        %v614 = vld [vmem:[#allocation6 + $0x80] sm:$0xff]
        %v615 = vld [vmem:[#allocation6 + $0x88] sm:$0xff]
        %v616 = vld [vmem:[#allocation6 + $0x90] sm:$0xff]
        %v617 = vld [vmem:[#allocation6 + $0x98] sm:$0xff]
        %v618 = vld [vmem:[#allocation6 + $0xa0] sm:$0xff]
        %v619 = vld [vmem:[#allocation6 + $0xa8] sm:$0xff]
        %v620 = vld [vmem:[#allocation6 + $0xb0] sm:$0xff]
        %v621 = vld [vmem:[#allocation6 + $0xb8] sm:$0xff]
        %v622 = vld [vmem:[#allocation6 + $0xc0] sm:$0xff]
        %v623 = vld [vmem:[#allocation6 + $0xc8] sm:$0xff]
        %v624 = vld [vmem:[#allocation6 + $0xd0] sm:$0xff]
        %v625 = vld [vmem:[%s2] sm:$0xff]
        %vm626 = vcmask 588800
        %v628 = vsel %vm626, %v625, 0
        %630 = vmatprep.subr.mxu0 %v599
        %631 = vmatpush1.msra.mxu0 %v598
        %632 = vmatprep.subr.mxu0 %v602
        %633 = vmatpush1.msra.mxu0 %v601
        %634 = vmatprep.subr.mxu0 %v605
        %635 = vmatpush1.msra.mxu0 %v604
        %636 = vmatprep.subr.mxu0 %v608
        %637 = vmatpush1.msra.mxu0 %v607
        %638 = vmatprep.subr.mxu0 %v611
        %639 = vmatpush1.msra.mxu0 %v610
        %640 = vmatprep.subr.mxu0 %v614
        %641 = vmatpush1.msra.mxu0 %v613
        %642 = vmatprep.subr.mxu0 %v617
        %643 = vmatpush1.msra.mxu0 %v616
        %644 = vmatprep.subr.mxu0 %v620
        %645 = vmatpush1.msra.mxu0 %v619
        %646 = vmatprep.subr.mxu0 %v623
        %647 = vmatpush1.msra.mxu0 %v622
        %648 = vmatprep.subr.mxu0 0.0
        %649 = vmatpush1.msra.mxu0 0.0
        %650 = vmatprep.subr.mxu0 0.0
        %651 = vmatpush1.msra.mxu0 0.0
        %652 = vmatprep.subr.mxu0 0.0
        %653 = vmatpush1.msra.mxu0 0.0
        %654 = vmatprep.subr.mxu0 0.0
        %655 = vmatpush1.msra.mxu0 0.0
        %656 = vmatprep.subr.mxu0 0.0
        %657 = vmatpush1.msra.mxu0 0.0
        %658 = vmatprep.subr.mxu0 0.0
        %659 = vmatpush1.msra.mxu0 0.0
        %660 = vmatprep.subr.mxu0 0.0
        %661 = vmatpush1.msra.mxu0 0.0
        %662 = vmatprep.subr.mxu0 0.0
        %663 = vmatpush1.msra.mxu0 0.0
        %664 = vmatprep.subr.mxu0 0.0
        %665 = vmatpush1.msra.mxu0 0.0
        %666 = vmatprep.subr.mxu0 0.0
        %667 = vmatpush1.msra.mxu0 0.0
        %668 = vmatprep.subr.mxu0 0.0
        %669 = vmatpush1.msra.mxu0 0.0
        %670 = vmatprep.subr.mxu0 0.0
        %671 = vmatpush1.msra.mxu0 0.0
        %672 = vmatprep.subr.mxu0 0.0
        %673 = vmatpush1.msra.mxu0 0.0
        %674 = vmatprep.subr.mxu0 0.0
        %675 = vmatpush1.msra.mxu0 0.0
        %676 = vmatprep.subr.mxu0 0.0
        %677 = vmatpush1.msra.mxu0 0.0
        %678 = vmatprep.subr.mxu0 0.0
        %679 = vmatpush1.msra.mxu0 0.0
        %680 = vmatprep.subr.mxu0 0.0
        %681 = vmatpush1.msra.mxu0 0.0
        %682 = vmatprep.subr.mxu0 0.0
        %683 = vmatpush1.msra.mxu0 0.0
        %684 = vmatprep.subr.mxu0 0.0
        %685 = vmatpush1.msra.mxu0 0.0
        %686 = vmatprep.subr.mxu0 0.0
        %687 = vmatpush1.msra.mxu0 0.0
        %688 = vmatprep.subr.mxu0 0.0
        %689 = vmatpush1.msra.mxu0 0.0
        %690 = vmatprep.subr.mxu0 0.0
        %691 = vmatpush1.msra.mxu0 0.0
        %692 = vmatprep.subr.mxu0 0.0
        %693 = vmatpush1.msra.mxu0 0.0
        %694 = vmatprep.mubr.f32.mxu0 0.0
        %695 = vmatmul.mubr.f32.gmra.mrb[0].mxu0 %v628
        %v696 = vpop.f32.mrb[0].mxu0
        %v697 = vadd.f32 0.0, %v696
        %v698 = vpop.f32.mrb[0].mxu0
        %v699 = vadd.f32 0.0, %v698
        %700 = vdwg.mxu0
        %701 = vmatprep.subr.mxu0 0.0
        %702 = vmatpush1.msra.mxu0 %v600
        %703 = vmatprep.subr.mxu0 0.0
        %704 = vmatpush1.msra.mxu0 %v603
        %705 = vmatprep.subr.mxu0 0.0
        %706 = vmatpush1.msra.mxu0 %v606
        %707 = vmatprep.subr.mxu0 0.0
        %708 = vmatpush1.msra.mxu0 %v609
        %709 = vmatprep.subr.mxu0 0.0
        %710 = vmatpush1.msra.mxu0 %v612
        %711 = vmatprep.subr.mxu0 0.0
        %712 = vmatpush1.msra.mxu0 %v615
        %713 = vmatprep.subr.mxu0 0.0
        %714 = vmatpush1.msra.mxu0 %v618
        %715 = vmatprep.subr.mxu0 0.0
        %716 = vmatpush1.msra.mxu0 %v621
        %717 = vmatprep.subr.mxu0 0.0
        %718 = vmatpush1.msra.mxu0 %v624
        %719 = vmatprep.subr.mxu0 0.0
        %720 = vmatpush1.msra.mxu0 0.0
        %721 = vmatprep.subr.mxu0 0.0
        %722 = vmatpush1.msra.mxu0 0.0
        %723 = vmatprep.subr.mxu0 0.0
        %724 = vmatpush1.msra.mxu0 0.0
        %725 = vmatprep.subr.mxu0 0.0
        %726 = vmatpush1.msra.mxu0 0.0
        %727 = vmatprep.subr.mxu0 0.0
        %728 = vmatpush1.msra.mxu0 0.0
        %729 = vmatprep.subr.mxu0 0.0
        %730 = vmatpush1.msra.mxu0 0.0
        %731 = vmatprep.subr.mxu0 0.0
        %732 = vmatpush1.msra.mxu0 0.0
        %733 = vmatprep.subr.mxu0 0.0
        %734 = vmatpush1.msra.mxu0 0.0
        %735 = vmatprep.subr.mxu0 0.0
        %736 = vmatpush1.msra.mxu0 0.0
        %737 = vmatprep.subr.mxu0 0.0
        %738 = vmatpush1.msra.mxu0 0.0
        %739 = vmatprep.subr.mxu0 0.0
        %740 = vmatpush1.msra.mxu0 0.0
        %741 = vmatprep.subr.mxu0 0.0
        %742 = vmatpush1.msra.mxu0 0.0
        %743 = vmatprep.subr.mxu0 0.0
        %744 = vmatpush1.msra.mxu0 0.0
        %745 = vmatprep.subr.mxu0 0.0
        %746 = vmatpush1.msra.mxu0 0.0
        %747 = vmatprep.subr.mxu0 0.0
        %748 = vmatpush1.msra.mxu0 0.0
        %749 = vmatprep.subr.mxu0 0.0
        %750 = vmatpush1.msra.mxu0 0.0
        %751 = vmatprep.subr.mxu0 0.0
        %752 = vmatpush1.msra.mxu0 0.0
        %753 = vmatprep.subr.mxu0 0.0
        %754 = vmatpush1.msra.mxu0 0.0
        %755 = vmatprep.subr.mxu0 0.0
        %756 = vmatpush1.msra.mxu0 0.0
        %757 = vmatprep.subr.mxu0 0.0
        %758 = vmatpush1.msra.mxu0 0.0
        %759 = vmatprep.subr.mxu0 0.0
        %760 = vmatpush1.msra.mxu0 0.0
        %761 = vmatprep.subr.mxu0 0.0
        %762 = vmatpush1.msra.mxu0 0.0
        %763 = vmatprep.subr.mxu0 0.0
        %764 = vmatpush1.msra.mxu0 0.0
        %765 = vmatprep.mubr.f32.mxu0 0.0
        %766 = vmatmul.mubr.f32.gmra.mrb[0].mxu0 %v628
        %v767 = vpop.f32.mrb[0].mxu0
        %v768 = vadd.f32 0.0, %v767
        %v769 = vpop.f32.mrb[0].mxu0
        %770 = vdwg.mxu0
        %s771 = sld [smem:[#allocation7]]
        %vm772 = vcmp.ge.f32.partialorder %v697, 0.0
        %vm773 = vcmp.ge.f32.partialorder %v699, 0.0
        %vm774 = vcmp.ge.f32.partialorder %v768, 0.0
        %v775 = vstv %s771
        %v776 = vmul.f32 %v775, %v697
        %v777 = vmul.f32 %v775, %v699
        %v778 = vmul.f32 %v775, %v768
        %v779 = vsel %vm772, %v697, %v776
        %v780 = vsel %vm773, %v699, %v777
        %v781 = vsel %vm774, %v768, %v778
        %v782 = vld [vmem:[%s9] sm:$0x7]
        %v784 = vlaneseq
        %v785 = vshrl.u32 %v784, 7
        %v786 = vsub.s32 0, %v785
        %v787 = vrot.slane %v782, %v786
        %v788 = vlaneseq
        %v789 = vshrl.u32 %v788, 7
        %v790 = vsub.s32 1, %v789
        %v791 = vrot.slane %v782, %v790
        %v792 = vlaneseq
        %v793 = vshrl.u32 %v792, 7
        %v794 = vsub.s32 2, %v793
        %v795 = vrot.slane %v782, %v794
        %v799 = vmul.f32 %v779, %v787
        %v800 = vmul.f32 %v780, %v791
        %v801 = vmul.f32 %v781, %v795
        %802 = vst [vmem:[#allocation2 + $0x8] sm:$0xff] %v799
        %803 = vst [vmem:[#allocation2 + $0x10] sm:$0xff] %v800
        %804 = vst [vmem:[#allocation2 + $0x18] sm:$0xff] %v801
        %v805 = vld [vmem:[#allocation2] sm:$0xff]
        %v806 = vld [vmem:[#allocation2 + $0x8] sm:$0xff]
        %v807 = vld [vmem:[#allocation2 + $0x10] sm:$0xff]
        %v808 = vld [vmem:[#allocation2 + $0x18] sm:$0xff]
        %813 = vrot.lane.b32.xlu0 %v805, 19
        %v814 = vpop.permute.xlu0 %813
        %815 = vrot.lane.b32.xlu0 %v806, 19
        %v816 = vpop.permute.xlu0 %815
        %817 = vrot.lane.b32.xlu0 %v807, 19
        %v818 = vpop.permute.xlu0 %817
        %819 = vrot.lane.b32.xlu0 %v808, 19
        %v820 = vpop.permute.xlu0 %819
        %v821 = vsel %vm400, %v814, %v816
        %v822 = vsel %vm400, %v816, %v818
        %v823 = vsel %vm400, %v818, %v820
        %827 = vst [vmem:[#allocation6] sm:$0xff] %v821
        %828 = vst [vmem:[#allocation6 + $0x8] sm:$0xff] %v822
        %829 = vst [vmem:[#allocation6 + $0x10] sm:$0xff] %v823
        %v830 = vld [vmem:[#allocation2] sm:$0xff]
        %v831 = vld [vmem:[#allocation2 + $0x8] sm:$0xff]
        %v832 = vld [vmem:[#allocation2 + $0x10] sm:$0xff]
        %v833 = vld [vmem:[#allocation2 + $0x18] sm:$0xff]
        %838 = vrot.lane.b32.xlu0 %v830, 18
        %v839 = vpop.permute.xlu0 %838
        %840 = vrot.lane.b32.xlu0 %v831, 18
        %v841 = vpop.permute.xlu0 %840
        %842 = vrot.lane.b32.xlu0 %v832, 18
        %v843 = vpop.permute.xlu0 %842
        %844 = vrot.lane.b32.xlu0 %v833, 18
        %v845 = vpop.permute.xlu0 %844
        %v846 = vsel %vm426, %v839, %v841
        %v847 = vsel %vm426, %v841, %v843
        %v848 = vsel %vm426, %v843, %v845
        %852 = vst [vmem:[#allocation6 + $0x18] sm:$0xff] %v846
        %853 = vst [vmem:[#allocation6 + $0x20] sm:$0xff] %v847
        %854 = vst [vmem:[#allocation6 + $0x28] sm:$0xff] %v848
        %v855 = vld [vmem:[#allocation2] sm:$0xff]
        %v856 = vld [vmem:[#allocation2 + $0x8] sm:$0xff]
        %v857 = vld [vmem:[#allocation2 + $0x10] sm:$0xff]
        %v858 = vld [vmem:[#allocation2 + $0x18] sm:$0xff]
        %863 = vrot.lane.b32.xlu0 %v855, 17
        %v864 = vpop.permute.xlu0 %863
        %865 = vrot.lane.b32.xlu0 %v856, 17
        %v866 = vpop.permute.xlu0 %865
        %867 = vrot.lane.b32.xlu0 %v857, 17
        %v868 = vpop.permute.xlu0 %867
        %869 = vrot.lane.b32.xlu0 %v858, 17
        %v870 = vpop.permute.xlu0 %869
        %v871 = vsel %vm452, %v864, %v866
        %v872 = vsel %vm452, %v866, %v868
        %v873 = vsel %vm452, %v868, %v870
        %877 = vst [vmem:[#allocation6 + $0x30] sm:$0xff] %v871
        %878 = vst [vmem:[#allocation6 + $0x38] sm:$0xff] %v872
        %879 = vst [vmem:[#allocation6 + $0x40] sm:$0xff] %v873
        %v880 = vld [vmem:[#allocation2] sm:$0xff]
        %v881 = vld [vmem:[#allocation2 + $0x8] sm:$0xff]
        %v882 = vld [vmem:[#allocation2 + $0x10] sm:$0xff]
        %v883 = vld [vmem:[#allocation2 + $0x18] sm:$0xff]
        %888 = vrot.lane.b32.xlu0 %v880, 1
        %v889 = vpop.permute.xlu0 %888
        %890 = vrot.lane.b32.xlu0 %v881, 1
        %v891 = vpop.permute.xlu0 %890
        %892 = vrot.lane.b32.xlu0 %v882, 1
        %v893 = vpop.permute.xlu0 %892
        %894 = vrot.lane.b32.xlu0 %v883, 1
        %v895 = vpop.permute.xlu0 %894
        %v896 = vsel %vm478, %v889, %v891
        %v897 = vsel %vm478, %v891, %v893
        %v898 = vsel %vm478, %v893, %v895
        %902 = vst [vmem:[#allocation6 + $0x48] sm:$0xff] %v896
        %903 = vst [vmem:[#allocation6 + $0x50] sm:$0xff] %v897
        %904 = vst [vmem:[#allocation6 + $0x58] sm:$0xff] %v898
        %v905 = vld [vmem:[#allocation2 + $0x8] sm:$0xff]
        %v906 = vld [vmem:[#allocation2 + $0x10] sm:$0xff]
        %v907 = vld [vmem:[#allocation2 + $0x18] sm:$0xff]
        %908 = vst [vmem:[#allocation6 + $0x60] sm:$0xff] %v905
        %909 = vst [vmem:[#allocation6 + $0x68] sm:$0xff] %v906
        %910 = vst [vmem:[#allocation6 + $0x70] sm:$0xff] %v907
        %v911 = vld [vmem:[#allocation2 + $0x8] sm:$0xff]
        %v912 = vld [vmem:[#allocation2 + $0x10] sm:$0xff]
        %v913 = vld [vmem:[#allocation2 + $0x18] sm:$0xff]
        %v914 = vld [vmem:[#allocation2 + $0x20] sm:$0xff]
        %919 = vrot.lane.b32.xlu0 %v911, 127
        %v920 = vpop.permute.xlu0 %919
        %921 = vrot.lane.b32.xlu0 %v912, 127
        %v922 = vpop.permute.xlu0 %921
        %923 = vrot.lane.b32.xlu0 %v913, 127
        %v924 = vpop.permute.xlu0 %923
        %925 = vrot.lane.b32.xlu0 %v914, 127
        %v926 = vpop.permute.xlu0 %925
        %v927 = vsel %vm510, %v920, %v922
        %v928 = vsel %vm510, %v922, %v924
        %v929 = vsel %vm510, %v924, %v926
        %933 = vst [vmem:[#allocation6 + $0x78] sm:$0xff] %v927
        %934 = vst [vmem:[#allocation6 + $0x80] sm:$0xff] %v928
        %935 = vst [vmem:[#allocation6 + $0x88] sm:$0xff] %v929
        %v936 = vld [vmem:[#allocation2 + $0x8] sm:$0xff]
        %v937 = vld [vmem:[#allocation2 + $0x10] sm:$0xff]
        %v938 = vld [vmem:[#allocation2 + $0x18] sm:$0xff]
        %v939 = vld [vmem:[#allocation2 + $0x20] sm:$0xff]
        %944 = vrot.lane.b32.xlu0 %v936, 111
        %v945 = vpop.permute.xlu0 %944
        %946 = vrot.lane.b32.xlu0 %v937, 111
        %v947 = vpop.permute.xlu0 %946
        %948 = vrot.lane.b32.xlu0 %v938, 111
        %v949 = vpop.permute.xlu0 %948
        %950 = vrot.lane.b32.xlu0 %v939, 111
        %v951 = vpop.permute.xlu0 %950
        %v952 = vsel %vm536, %v945, %v947
        %v953 = vsel %vm536, %v947, %v949
        %v954 = vsel %vm536, %v949, %v951
        %958 = vst [vmem:[#allocation6 + $0x90] sm:$0xff] %v952
        %959 = vst [vmem:[#allocation6 + $0x98] sm:$0xff] %v953
        %960 = vst [vmem:[#allocation6 + $0xa0] sm:$0xff] %v954
        %v961 = vld [vmem:[#allocation2 + $0x8] sm:$0xff]
        %v962 = vld [vmem:[#allocation2 + $0x10] sm:$0xff]
        %v963 = vld [vmem:[#allocation2 + $0x18] sm:$0xff]
        %v964 = vld [vmem:[#allocation2 + $0x20] sm:$0xff]
        %969 = vrot.lane.b32.xlu0 %v961, 110
        %v970 = vpop.permute.xlu0 %969
        %971 = vrot.lane.b32.xlu0 %v962, 110
        %v972 = vpop.permute.xlu0 %971
        %973 = vrot.lane.b32.xlu0 %v963, 110
        %v974 = vpop.permute.xlu0 %973
        %975 = vrot.lane.b32.xlu0 %v964, 110
        %v976 = vpop.permute.xlu0 %975
        %v977 = vsel %vm562, %v970, %v972
        %v978 = vsel %vm562, %v972, %v974
        %v979 = vsel %vm562, %v974, %v976
        %983 = vst [vmem:[#allocation6 + $0xa8] sm:$0xff] %v977
        %984 = vst [vmem:[#allocation6 + $0xb0] sm:$0xff] %v978
        %985 = vst [vmem:[#allocation6 + $0xb8] sm:$0xff] %v979
        %v986 = vld [vmem:[#allocation2 + $0x8] sm:$0xff]
        %v987 = vld [vmem:[#allocation2 + $0x10] sm:$0xff]
        %v988 = vld [vmem:[#allocation2 + $0x18] sm:$0xff]
        %v989 = vld [vmem:[#allocation2 + $0x20] sm:$0xff]
        %994 = vrot.lane.b32.xlu0 %v986, 109
        %v995 = vpop.permute.xlu0 %994
        %996 = vrot.lane.b32.xlu0 %v987, 109
        %v997 = vpop.permute.xlu0 %996
        %998 = vrot.lane.b32.xlu0 %v988, 109
        %v999 = vpop.permute.xlu0 %998
        %1000 = vrot.lane.b32.xlu0 %v989, 109
        %v1001 = vpop.permute.xlu0 %1000
        %v1002 = vsel %vm588, %v995, %v997
        %v1003 = vsel %vm588, %v997, %v999
        %v1004 = vsel %vm588, %v999, %v1001
        %1008 = vst [vmem:[#allocation6 + $0xc0] sm:$0xff] %v1002
        %1009 = vst [vmem:[#allocation6 + $0xc8] sm:$0xff] %v1003
        %1010 = vst [vmem:[#allocation6 + $0xd0] sm:$0xff] %v1004
        %v1011 = vld [vmem:[#allocation6] sm:$0xff]
        %v1012 = vld [vmem:[#allocation6 + $0x8] sm:$0xff]
        %v1013 = vld [vmem:[#allocation6 + $0x10] sm:$0xff]
        %v1014 = vld [vmem:[#allocation6 + $0x18] sm:$0xff]
        %v1015 = vld [vmem:[#allocation6 + $0x20] sm:$0xff]
        %v1016 = vld [vmem:[#allocation6 + $0x28] sm:$0xff]
        %v1017 = vld [vmem:[#allocation6 + $0x30] sm:$0xff]
        %v1018 = vld [vmem:[#allocation6 + $0x38] sm:$0xff]
        %v1019 = vld [vmem:[#allocation6 + $0x40] sm:$0xff]
        %v1020 = vld [vmem:[#allocation6 + $0x48] sm:$0xff]
        %v1021 = vld [vmem:[#allocation6 + $0x50] sm:$0xff]
        %v1022 = vld [vmem:[#allocation6 + $0x58] sm:$0xff]
        %v1023 = vld [vmem:[#allocation6 + $0x60] sm:$0xff]
        %v1024 = vld [vmem:[#allocation6 + $0x68] sm:$0xff]
        %v1025 = vld [vmem:[#allocation6 + $0x70] sm:$0xff]
        %v1026 = vld [vmem:[#allocation6 + $0x78] sm:$0xff]
        %v1027 = vld [vmem:[#allocation6 + $0x80] sm:$0xff]
        %v1028 = vld [vmem:[#allocation6 + $0x88] sm:$0xff]
        %v1029 = vld [vmem:[#allocation6 + $0x90] sm:$0xff]
        %v1030 = vld [vmem:[#allocation6 + $0x98] sm:$0xff]
        %v1031 = vld [vmem:[#allocation6 + $0xa0] sm:$0xff]
        %v1032 = vld [vmem:[#allocation6 + $0xa8] sm:$0xff]
        %v1033 = vld [vmem:[#allocation6 + $0xb0] sm:$0xff]
        %v1034 = vld [vmem:[#allocation6 + $0xb8] sm:$0xff]
        %v1035 = vld [vmem:[#allocation6 + $0xc0] sm:$0xff]
        %v1036 = vld [vmem:[#allocation6 + $0xc8] sm:$0xff]
        %v1037 = vld [vmem:[#allocation6 + $0xd0] sm:$0xff]
        %v1038 = vld [vmem:[%s3] sm:$0xff]
        %v1040 = vsel %vm626, %v1038, 0
        %1042 = vmatprep.subr.mxu0 %v1012
        %1043 = vmatpush1.msra.mxu0 %v1011
        %1044 = vmatprep.subr.mxu0 %v1015
        %1045 = vmatpush1.msra.mxu0 %v1014
        %1046 = vmatprep.subr.mxu0 %v1018
        %1047 = vmatpush1.msra.mxu0 %v1017
        %1048 = vmatprep.subr.mxu0 %v1021
        %1049 = vmatpush1.msra.mxu0 %v1020
        %1050 = vmatprep.subr.mxu0 %v1024
        %1051 = vmatpush1.msra.mxu0 %v1023
        %1052 = vmatprep.subr.mxu0 %v1027
        %1053 = vmatpush1.msra.mxu0 %v1026
        %1054 = vmatprep.subr.mxu0 %v1030
        %1055 = vmatpush1.msra.mxu0 %v1029
        %1056 = vmatprep.subr.mxu0 %v1033
        %1057 = vmatpush1.msra.mxu0 %v1032
        %1058 = vmatprep.subr.mxu0 %v1036
        %1059 = vmatpush1.msra.mxu0 %v1035
        %1060 = vmatprep.subr.mxu0 0.0
        %1061 = vmatpush1.msra.mxu0 0.0
        %1062 = vmatprep.subr.mxu0 0.0
        %1063 = vmatpush1.msra.mxu0 0.0
        %1064 = vmatprep.subr.mxu0 0.0
        %1065 = vmatpush1.msra.mxu0 0.0
        %1066 = vmatprep.subr.mxu0 0.0
        %1067 = vmatpush1.msra.mxu0 0.0
        %1068 = vmatprep.subr.mxu0 0.0
        %1069 = vmatpush1.msra.mxu0 0.0
        %1070 = vmatprep.subr.mxu0 0.0
        %1071 = vmatpush1.msra.mxu0 0.0
        %1072 = vmatprep.subr.mxu0 0.0
        %1073 = vmatpush1.msra.mxu0 0.0
        %1074 = vmatprep.subr.mxu0 0.0
        %1075 = vmatpush1.msra.mxu0 0.0
        %1076 = vmatprep.subr.mxu0 0.0
        %1077 = vmatpush1.msra.mxu0 0.0
        %1078 = vmatprep.subr.mxu0 0.0
        %1079 = vmatpush1.msra.mxu0 0.0
        %1080 = vmatprep.subr.mxu0 0.0
        %1081 = vmatpush1.msra.mxu0 0.0
        %1082 = vmatprep.subr.mxu0 0.0
        %1083 = vmatpush1.msra.mxu0 0.0
        %1084 = vmatprep.subr.mxu0 0.0
        %1085 = vmatpush1.msra.mxu0 0.0
        %1086 = vmatprep.subr.mxu0 0.0
        %1087 = vmatpush1.msra.mxu0 0.0
        %1088 = vmatprep.subr.mxu0 0.0
        %1089 = vmatpush1.msra.mxu0 0.0
        %1090 = vmatprep.subr.mxu0 0.0
        %1091 = vmatpush1.msra.mxu0 0.0
        %1092 = vmatprep.subr.mxu0 0.0
        %1093 = vmatpush1.msra.mxu0 0.0
        %1094 = vmatprep.subr.mxu0 0.0
        %1095 = vmatpush1.msra.mxu0 0.0
        %1096 = vmatprep.subr.mxu0 0.0
        %1097 = vmatpush1.msra.mxu0 0.0
        %1098 = vmatprep.subr.mxu0 0.0
        %1099 = vmatpush1.msra.mxu0 0.0
        %1100 = vmatprep.subr.mxu0 0.0
        %1101 = vmatpush1.msra.mxu0 0.0
        %1102 = vmatprep.subr.mxu0 0.0
        %1103 = vmatpush1.msra.mxu0 0.0
        %1104 = vmatprep.subr.mxu0 0.0
        %1105 = vmatpush1.msra.mxu0 0.0
        %1106 = vmatprep.mubr.f32.mxu0 0.0
        %1107 = vmatmul.mubr.f32.gmra.mrb[0].mxu0 %v1040
        %v1108 = vpop.f32.mrb[0].mxu0
        %v1109 = vadd.f32 0.0, %v1108
        %v1110 = vpop.f32.mrb[0].mxu0
        %v1111 = vadd.f32 0.0, %v1110
        %1112 = vdwg.mxu0
        %1113 = vmatprep.subr.mxu0 0.0
        %1114 = vmatpush1.msra.mxu0 %v1013
        %1115 = vmatprep.subr.mxu0 0.0
        %1116 = vmatpush1.msra.mxu0 %v1016
        %1117 = vmatprep.subr.mxu0 0.0
        %1118 = vmatpush1.msra.mxu0 %v1019
        %1119 = vmatprep.subr.mxu0 0.0
        %1120 = vmatpush1.msra.mxu0 %v1022
        %1121 = vmatprep.subr.mxu0 0.0
        %1122 = vmatpush1.msra.mxu0 %v1025
        %1123 = vmatprep.subr.mxu0 0.0
        %1124 = vmatpush1.msra.mxu0 %v1028
        %1125 = vmatprep.subr.mxu0 0.0
        %1126 = vmatpush1.msra.mxu0 %v1031
        %1127 = vmatprep.subr.mxu0 0.0
        %1128 = vmatpush1.msra.mxu0 %v1034
        %1129 = vmatprep.subr.mxu0 0.0
        %1130 = vmatpush1.msra.mxu0 %v1037
        %1131 = vmatprep.subr.mxu0 0.0
        %1132 = vmatpush1.msra.mxu0 0.0
        %1133 = vmatprep.subr.mxu0 0.0
        %1134 = vmatpush1.msra.mxu0 0.0
        %1135 = vmatprep.subr.mxu0 0.0
        %1136 = vmatpush1.msra.mxu0 0.0
        %1137 = vmatprep.subr.mxu0 0.0
        %1138 = vmatpush1.msra.mxu0 0.0
        %1139 = vmatprep.subr.mxu0 0.0
        %1140 = vmatpush1.msra.mxu0 0.0
        %1141 = vmatprep.subr.mxu0 0.0
        %1142 = vmatpush1.msra.mxu0 0.0
        %1143 = vmatprep.subr.mxu0 0.0
        %1144 = vmatpush1.msra.mxu0 0.0
        %1145 = vmatprep.subr.mxu0 0.0
        %1146 = vmatpush1.msra.mxu0 0.0
        %1147 = vmatprep.subr.mxu0 0.0
        %1148 = vmatpush1.msra.mxu0 0.0
        %1149 = vmatprep.subr.mxu0 0.0
        %1150 = vmatpush1.msra.mxu0 0.0
        %1151 = vmatprep.subr.mxu0 0.0
        %1152 = vmatpush1.msra.mxu0 0.0
        %1153 = vmatprep.subr.mxu0 0.0
        %1154 = vmatpush1.msra.mxu0 0.0
        %1155 = vmatprep.subr.mxu0 0.0
        %1156 = vmatpush1.msra.mxu0 0.0
        %1157 = vmatprep.subr.mxu0 0.0
        %1158 = vmatpush1.msra.mxu0 0.0
        %1159 = vmatprep.subr.mxu0 0.0
        %1160 = vmatpush1.msra.mxu0 0.0
        %1161 = vmatprep.subr.mxu0 0.0
        %1162 = vmatpush1.msra.mxu0 0.0
        %1163 = vmatprep.subr.mxu0 0.0
        %1164 = vmatpush1.msra.mxu0 0.0
        %1165 = vmatprep.subr.mxu0 0.0
        %1166 = vmatpush1.msra.mxu0 0.0
        %1167 = vmatprep.subr.mxu0 0.0
        %1168 = vmatpush1.msra.mxu0 0.0
        %1169 = vmatprep.subr.mxu0 0.0
        %1170 = vmatpush1.msra.mxu0 0.0
        %1171 = vmatprep.subr.mxu0 0.0
        %1172 = vmatpush1.msra.mxu0 0.0
        %1173 = vmatprep.subr.mxu0 0.0
        %1174 = vmatpush1.msra.mxu0 0.0
        %1175 = vmatprep.subr.mxu0 0.0
        %1176 = vmatpush1.msra.mxu0 0.0
        %1177 = vmatprep.mubr.f32.mxu0 0.0
        %1178 = vmatmul.mubr.f32.gmra.mrb[0].mxu0 %v1040
        %v1179 = vpop.f32.mrb[0].mxu0
        %v1180 = vadd.f32 0.0, %v1179
        %v1181 = vpop.f32.mrb[0].mxu0
        %1182 = vdwg.mxu0
        %s1183 = sld [smem:[#allocation7 + $0x1]]
        %vm1184 = vcmp.ge.f32.partialorder %v1109, 0.0
        %vm1185 = vcmp.ge.f32.partialorder %v1111, 0.0
        %vm1186 = vcmp.ge.f32.partialorder %v1180, 0.0
        %v1187 = vstv %s1183
        %v1188 = vmul.f32 %v1187, %v1109
        %v1189 = vmul.f32 %v1187, %v1111
        %v1190 = vmul.f32 %v1187, %v1180
        %v1191 = vsel %vm1184, %v1109, %v1188
        %v1192 = vsel %vm1185, %v1111, %v1189
        %v1193 = vsel %vm1186, %v1180, %v1190
        %v1194 = vld [vmem:[%s9] sm:$0x7]
        %v1196 = vlaneseq
        %v1197 = vshrl.u32 %v1196, 7
        %v1198 = vsub.s32 0, %v1197
        %v1199 = vrot.slane %v1194, %v1198
        %v1200 = vlaneseq
        %v1201 = vshrl.u32 %v1200, 7
        %v1202 = vsub.s32 1, %v1201
        %v1203 = vrot.slane %v1194, %v1202
        %v1204 = vlaneseq
        %v1205 = vshrl.u32 %v1204, 7
        %v1206 = vsub.s32 2, %v1205
        %v1207 = vrot.slane %v1194, %v1206
        %v1211 = vmul.f32 %v1191, %v1199
        %v1212 = vmul.f32 %v1192, %v1203
        %v1213 = vmul.f32 %v1193, %v1207
        %1214 = vst [vmem:[#allocation3 + $0x8] sm:$0xff] %v1211
        %1215 = vst [vmem:[#allocation3 + $0x10] sm:$0xff] %v1212
        %1216 = vst [vmem:[#allocation3 + $0x18] sm:$0xff] %v1213
        %v1217 = vld [vmem:[#allocation3] sm:$0xff]
        %v1218 = vld [vmem:[#allocation3 + $0x8] sm:$0xff]
        %v1219 = vld [vmem:[#allocation3 + $0x10] sm:$0xff]
        %v1220 = vld [vmem:[#allocation3 + $0x18] sm:$0xff]
        %1225 = vrot.lane.b32.xlu0 %v1217, 19
        %v1226 = vpop.permute.xlu0 %1225
        %1227 = vrot.lane.b32.xlu0 %v1218, 19
        %v1228 = vpop.permute.xlu0 %1227
        %1229 = vrot.lane.b32.xlu0 %v1219, 19
        %v1230 = vpop.permute.xlu0 %1229
        %1231 = vrot.lane.b32.xlu0 %v1220, 19
        %v1232 = vpop.permute.xlu0 %1231
        %v1233 = vsel %vm400, %v1226, %v1228
        %v1234 = vsel %vm400, %v1228, %v1230
        %v1235 = vsel %vm400, %v1230, %v1232
        %1239 = vst [vmem:[#allocation6] sm:$0xff] %v1233
        %1240 = vst [vmem:[#allocation6 + $0x8] sm:$0xff] %v1234
        %1241 = vst [vmem:[#allocation6 + $0x10] sm:$0xff] %v1235
        %v1242 = vld [vmem:[#allocation3] sm:$0xff]
        %v1243 = vld [vmem:[#allocation3 + $0x8] sm:$0xff]
        %v1244 = vld [vmem:[#allocation3 + $0x10] sm:$0xff]
        %v1245 = vld [vmem:[#allocation3 + $0x18] sm:$0xff]
        %1250 = vrot.lane.b32.xlu0 %v1242, 18
        %v1251 = vpop.permute.xlu0 %1250
        %1252 = vrot.lane.b32.xlu0 %v1243, 18
        %v1253 = vpop.permute.xlu0 %1252
        %1254 = vrot.lane.b32.xlu0 %v1244, 18
        %v1255 = vpop.permute.xlu0 %1254
        %1256 = vrot.lane.b32.xlu0 %v1245, 18
        %v1257 = vpop.permute.xlu0 %1256
        %v1258 = vsel %vm426, %v1251, %v1253
        %v1259 = vsel %vm426, %v1253, %v1255
        %v1260 = vsel %vm426, %v1255, %v1257
        %1264 = vst [vmem:[#allocation6 + $0x18] sm:$0xff] %v1258
        %1265 = vst [vmem:[#allocation6 + $0x20] sm:$0xff] %v1259
        %1266 = vst [vmem:[#allocation6 + $0x28] sm:$0xff] %v1260
        %v1267 = vld [vmem:[#allocation3] sm:$0xff]
        %v1268 = vld [vmem:[#allocation3 + $0x8] sm:$0xff]
        %v1269 = vld [vmem:[#allocation3 + $0x10] sm:$0xff]
        %v1270 = vld [vmem:[#allocation3 + $0x18] sm:$0xff]
        %1275 = vrot.lane.b32.xlu0 %v1267, 17
        %v1276 = vpop.permute.xlu0 %1275
        %1277 = vrot.lane.b32.xlu0 %v1268, 17
        %v1278 = vpop.permute.xlu0 %1277
        %1279 = vrot.lane.b32.xlu0 %v1269, 17
        %v1280 = vpop.permute.xlu0 %1279
        %1281 = vrot.lane.b32.xlu0 %v1270, 17
        %v1282 = vpop.permute.xlu0 %1281
        %v1283 = vsel %vm452, %v1276, %v1278
        %v1284 = vsel %vm452, %v1278, %v1280
        %v1285 = vsel %vm452, %v1280, %v1282
        %1289 = vst [vmem:[#allocation6 + $0x30] sm:$0xff] %v1283
        %1290 = vst [vmem:[#allocation6 + $0x38] sm:$0xff] %v1284
        %1291 = vst [vmem:[#allocation6 + $0x40] sm:$0xff] %v1285
        %v1292 = vld [vmem:[#allocation3] sm:$0xff]
        %v1293 = vld [vmem:[#allocation3 + $0x8] sm:$0xff]
        %v1294 = vld [vmem:[#allocation3 + $0x10] sm:$0xff]
        %v1295 = vld [vmem:[#allocation3 + $0x18] sm:$0xff]
        %1300 = vrot.lane.b32.xlu0 %v1292, 1
        %v1301 = vpop.permute.xlu0 %1300
        %1302 = vrot.lane.b32.xlu0 %v1293, 1
        %v1303 = vpop.permute.xlu0 %1302
        %1304 = vrot.lane.b32.xlu0 %v1294, 1
        %v1305 = vpop.permute.xlu0 %1304
        %1306 = vrot.lane.b32.xlu0 %v1295, 1
        %v1307 = vpop.permute.xlu0 %1306
        %v1308 = vsel %vm478, %v1301, %v1303
        %v1309 = vsel %vm478, %v1303, %v1305
        %v1310 = vsel %vm478, %v1305, %v1307
        %1314 = vst [vmem:[#allocation6 + $0x48] sm:$0xff] %v1308
        %1315 = vst [vmem:[#allocation6 + $0x50] sm:$0xff] %v1309
        %1316 = vst [vmem:[#allocation6 + $0x58] sm:$0xff] %v1310
        %v1317 = vld [vmem:[#allocation3 + $0x8] sm:$0xff]
        %v1318 = vld [vmem:[#allocation3 + $0x10] sm:$0xff]
        %v1319 = vld [vmem:[#allocation3 + $0x18] sm:$0xff]
        %1320 = vst [vmem:[#allocation6 + $0x60] sm:$0xff] %v1317
        %1321 = vst [vmem:[#allocation6 + $0x68] sm:$0xff] %v1318
        %1322 = vst [vmem:[#allocation6 + $0x70] sm:$0xff] %v1319
        %v1323 = vld [vmem:[#allocation3 + $0x8] sm:$0xff]
        %v1324 = vld [vmem:[#allocation3 + $0x10] sm:$0xff]
        %v1325 = vld [vmem:[#allocation3 + $0x18] sm:$0xff]
        %v1326 = vld [vmem:[#allocation3 + $0x20] sm:$0xff]
        %1331 = vrot.lane.b32.xlu0 %v1323, 127
        %v1332 = vpop.permute.xlu0 %1331
        %1333 = vrot.lane.b32.xlu0 %v1324, 127
        %v1334 = vpop.permute.xlu0 %1333
        %1335 = vrot.lane.b32.xlu0 %v1325, 127
        %v1336 = vpop.permute.xlu0 %1335
        %1337 = vrot.lane.b32.xlu0 %v1326, 127
        %v1338 = vpop.permute.xlu0 %1337
        %v1339 = vsel %vm510, %v1332, %v1334
        %v1340 = vsel %vm510, %v1334, %v1336
        %v1341 = vsel %vm510, %v1336, %v1338
        %1345 = vst [vmem:[#allocation6 + $0x78] sm:$0xff] %v1339
        %1346 = vst [vmem:[#allocation6 + $0x80] sm:$0xff] %v1340
        %1347 = vst [vmem:[#allocation6 + $0x88] sm:$0xff] %v1341
        %v1348 = vld [vmem:[#allocation3 + $0x8] sm:$0xff]
        %v1349 = vld [vmem:[#allocation3 + $0x10] sm:$0xff]
        %v1350 = vld [vmem:[#allocation3 + $0x18] sm:$0xff]
        %v1351 = vld [vmem:[#allocation3 + $0x20] sm:$0xff]
        %1356 = vrot.lane.b32.xlu0 %v1348, 111
        %v1357 = vpop.permute.xlu0 %1356
        %1358 = vrot.lane.b32.xlu0 %v1349, 111
        %v1359 = vpop.permute.xlu0 %1358
        %1360 = vrot.lane.b32.xlu0 %v1350, 111
        %v1361 = vpop.permute.xlu0 %1360
        %1362 = vrot.lane.b32.xlu0 %v1351, 111
        %v1363 = vpop.permute.xlu0 %1362
        %v1364 = vsel %vm536, %v1357, %v1359
        %v1365 = vsel %vm536, %v1359, %v1361
        %v1366 = vsel %vm536, %v1361, %v1363
        %1370 = vst [vmem:[#allocation6 + $0x90] sm:$0xff] %v1364
        %1371 = vst [vmem:[#allocation6 + $0x98] sm:$0xff] %v1365
        %1372 = vst [vmem:[#allocation6 + $0xa0] sm:$0xff] %v1366
        %v1373 = vld [vmem:[#allocation3 + $0x8] sm:$0xff]
        %v1374 = vld [vmem:[#allocation3 + $0x10] sm:$0xff]
        %v1375 = vld [vmem:[#allocation3 + $0x18] sm:$0xff]
        %v1376 = vld [vmem:[#allocation3 + $0x20] sm:$0xff]
        %1381 = vrot.lane.b32.xlu0 %v1373, 110
        %v1382 = vpop.permute.xlu0 %1381
        %1383 = vrot.lane.b32.xlu0 %v1374, 110
        %v1384 = vpop.permute.xlu0 %1383
        %1385 = vrot.lane.b32.xlu0 %v1375, 110
        %v1386 = vpop.permute.xlu0 %1385
        %1387 = vrot.lane.b32.xlu0 %v1376, 110
        %v1388 = vpop.permute.xlu0 %1387
        %v1389 = vsel %vm562, %v1382, %v1384
        %v1390 = vsel %vm562, %v1384, %v1386
        %v1391 = vsel %vm562, %v1386, %v1388
        %1395 = vst [vmem:[#allocation6 + $0xa8] sm:$0xff] %v1389
        %1396 = vst [vmem:[#allocation6 + $0xb0] sm:$0xff] %v1390
        %1397 = vst [vmem:[#allocation6 + $0xb8] sm:$0xff] %v1391
        %v1398 = vld [vmem:[#allocation3 + $0x8] sm:$0xff]
        %v1399 = vld [vmem:[#allocation3 + $0x10] sm:$0xff]
        %v1400 = vld [vmem:[#allocation3 + $0x18] sm:$0xff]
        %v1401 = vld [vmem:[#allocation3 + $0x20] sm:$0xff]
        %1406 = vrot.lane.b32.xlu0 %v1398, 109
        %v1407 = vpop.permute.xlu0 %1406
        %1408 = vrot.lane.b32.xlu0 %v1399, 109
        %v1409 = vpop.permute.xlu0 %1408
        %1410 = vrot.lane.b32.xlu0 %v1400, 109
        %v1411 = vpop.permute.xlu0 %1410
        %1412 = vrot.lane.b32.xlu0 %v1401, 109
        %v1413 = vpop.permute.xlu0 %1412
        %v1414 = vsel %vm588, %v1407, %v1409
        %v1415 = vsel %vm588, %v1409, %v1411
        %v1416 = vsel %vm588, %v1411, %v1413
        %1420 = vst [vmem:[#allocation6 + $0xc0] sm:$0xff] %v1414
        %1421 = vst [vmem:[#allocation6 + $0xc8] sm:$0xff] %v1415
        %1422 = vst [vmem:[#allocation6 + $0xd0] sm:$0xff] %v1416
        %v1423 = vld [vmem:[#allocation6] sm:$0xff]
        %v1424 = vld [vmem:[#allocation6 + $0x8] sm:$0xff]
        %v1425 = vld [vmem:[#allocation6 + $0x10] sm:$0xff]
        %v1426 = vld [vmem:[#allocation6 + $0x18] sm:$0xff]
        %v1427 = vld [vmem:[#allocation6 + $0x20] sm:$0xff]
        %v1428 = vld [vmem:[#allocation6 + $0x28] sm:$0xff]
        %v1429 = vld [vmem:[#allocation6 + $0x30] sm:$0xff]
        %v1430 = vld [vmem:[#allocation6 + $0x38] sm:$0xff]
        %v1431 = vld [vmem:[#allocation6 + $0x40] sm:$0xff]
        %v1432 = vld [vmem:[#allocation6 + $0x48] sm:$0xff]
        %v1433 = vld [vmem:[#allocation6 + $0x50] sm:$0xff]
        %v1434 = vld [vmem:[#allocation6 + $0x58] sm:$0xff]
        %v1435 = vld [vmem:[#allocation6 + $0x60] sm:$0xff]
        %v1436 = vld [vmem:[#allocation6 + $0x68] sm:$0xff]
        %v1437 = vld [vmem:[#allocation6 + $0x70] sm:$0xff]
        %v1438 = vld [vmem:[#allocation6 + $0x78] sm:$0xff]
        %v1439 = vld [vmem:[#allocation6 + $0x80] sm:$0xff]
        %v1440 = vld [vmem:[#allocation6 + $0x88] sm:$0xff]
        %v1441 = vld [vmem:[#allocation6 + $0x90] sm:$0xff]
        %v1442 = vld [vmem:[#allocation6 + $0x98] sm:$0xff]
        %v1443 = vld [vmem:[#allocation6 + $0xa0] sm:$0xff]
        %v1444 = vld [vmem:[#allocation6 + $0xa8] sm:$0xff]
        %v1445 = vld [vmem:[#allocation6 + $0xb0] sm:$0xff]
        %v1446 = vld [vmem:[#allocation6 + $0xb8] sm:$0xff]
        %v1447 = vld [vmem:[#allocation6 + $0xc0] sm:$0xff]
        %v1448 = vld [vmem:[#allocation6 + $0xc8] sm:$0xff]
        %v1449 = vld [vmem:[#allocation6 + $0xd0] sm:$0xff]
        %v1450 = vld [vmem:[%s4] sm:$0xff]
        %v1451 = vld [vmem:[%s4 + $0x8] sm:$0xff]
        %v1452 = vld [vmem:[%s7] sm:$0xff]
        %v1453 = vld [vmem:[%s7 + $0x8] sm:$0xff]
        %1455 = vset.pattern.permute.xlu0 0
        %1456 = vperm.xlu0 %1455, %v1452
        %v1457 = vpop.permute.xlu0 %1456
        %1460 = vset.pattern.permute.xlu0 0
        %1461 = vperm.xlu0 %1460, %v1453
        %v1462 = vpop.permute.xlu0 %1461
        %v1465 = vsel %vm626, %v1450, 0
        %v1468 = vsel %vm626, %v1451, 0
        %1470 = vmatprep.subr.mxu0 %v1424
        %1471 = vmatpush1.msra.mxu0 %v1423
        %1472 = vmatprep.subr.mxu0 %v1427
        %1473 = vmatpush1.msra.mxu0 %v1426
        %1474 = vmatprep.subr.mxu0 %v1430
        %1475 = vmatpush1.msra.mxu0 %v1429
        %1476 = vmatprep.subr.mxu0 %v1433
        %1477 = vmatpush1.msra.mxu0 %v1432
        %1478 = vmatprep.subr.mxu0 %v1436
        %1479 = vmatpush1.msra.mxu0 %v1435
        %1480 = vmatprep.subr.mxu0 %v1439
        %1481 = vmatpush1.msra.mxu0 %v1438
        %1482 = vmatprep.subr.mxu0 %v1442
        %1483 = vmatpush1.msra.mxu0 %v1441
        %1484 = vmatprep.subr.mxu0 %v1445
        %1485 = vmatpush1.msra.mxu0 %v1444
        %1486 = vmatprep.subr.mxu0 %v1448
        %1487 = vmatpush1.msra.mxu0 %v1447
        %1488 = vmatprep.subr.mxu0 0.0
        %1489 = vmatpush1.msra.mxu0 0.0
        %1490 = vmatprep.subr.mxu0 0.0
        %1491 = vmatpush1.msra.mxu0 0.0
        %1492 = vmatprep.subr.mxu0 0.0
        %1493 = vmatpush1.msra.mxu0 0.0
        %1494 = vmatprep.subr.mxu0 0.0
        %1495 = vmatpush1.msra.mxu0 0.0
        %1496 = vmatprep.subr.mxu0 0.0
        %1497 = vmatpush1.msra.mxu0 0.0
        %1498 = vmatprep.subr.mxu0 0.0
        %1499 = vmatpush1.msra.mxu0 0.0
        %1500 = vmatprep.subr.mxu0 0.0
        %1501 = vmatpush1.msra.mxu0 0.0
        %1502 = vmatprep.subr.mxu0 0.0
        %1503 = vmatpush1.msra.mxu0 0.0
        %1504 = vmatprep.subr.mxu0 0.0
        %1505 = vmatpush1.msra.mxu0 0.0
        %1506 = vmatprep.subr.mxu0 0.0
        %1507 = vmatpush1.msra.mxu0 0.0
        %1508 = vmatprep.subr.mxu0 0.0
        %1509 = vmatpush1.msra.mxu0 0.0
        %1510 = vmatprep.subr.mxu0 0.0
        %1511 = vmatpush1.msra.mxu0 0.0
        %1512 = vmatprep.subr.mxu0 0.0
        %1513 = vmatpush1.msra.mxu0 0.0
        %1514 = vmatprep.subr.mxu0 0.0
        %1515 = vmatpush1.msra.mxu0 0.0
        %1516 = vmatprep.subr.mxu0 0.0
        %1517 = vmatpush1.msra.mxu0 0.0
        %1518 = vmatprep.subr.mxu0 0.0
        %1519 = vmatpush1.msra.mxu0 0.0
        %1520 = vmatprep.subr.mxu0 0.0
        %1521 = vmatpush1.msra.mxu0 0.0
        %1522 = vmatprep.subr.mxu0 0.0
        %1523 = vmatpush1.msra.mxu0 0.0
        %1524 = vmatprep.subr.mxu0 0.0
        %1525 = vmatpush1.msra.mxu0 0.0
        %1526 = vmatprep.subr.mxu0 0.0
        %1527 = vmatpush1.msra.mxu0 0.0
        %1528 = vmatprep.subr.mxu0 0.0
        %1529 = vmatpush1.msra.mxu0 0.0
        %1530 = vmatprep.subr.mxu0 0.0
        %1531 = vmatpush1.msra.mxu0 0.0
        %1532 = vmatprep.subr.mxu0 0.0
        %1533 = vmatpush1.msra.mxu0 0.0
        %1534 = vmatprep.mubr.f32.mxu0 0.0
        %1535 = vmatmul.mubr.f32.gmra.mrb[0].mxu0 %v1465
        %v1536 = vpop.f32.mrb[0].mxu0
        %v1537 = vadd.f32 %v1457, %v1536
        %v1538 = vpop.f32.mrb[0].mxu0
        %v1539 = vadd.f32 %v1457, %v1538
        %1540 = vmatprep.mubr.f32.mxu0 0.0
        %1541 = vmatmul.mubr.f32.gmra.mrb[0].mxu0 %v1468
        %v1542 = vpop.f32.mrb[0].mxu0
        %v1543 = vadd.f32 %v1462, %v1542
        %v1544 = vpop.f32.mrb[0].mxu0
        %v1545 = vadd.f32 %v1462, %v1544
        %1546 = vdwg.mxu0
        %1547 = vmatprep.subr.mxu0 0.0
        %1548 = vmatpush1.msra.mxu0 %v1425
        %1549 = vmatprep.subr.mxu0 0.0
        %1550 = vmatpush1.msra.mxu0 %v1428
        %1551 = vmatprep.subr.mxu0 0.0
        %1552 = vmatpush1.msra.mxu0 %v1431
        %1553 = vmatprep.subr.mxu0 0.0
        %1554 = vmatpush1.msra.mxu0 %v1434
        %1555 = vmatprep.subr.mxu0 0.0
        %1556 = vmatpush1.msra.mxu0 %v1437
        %1557 = vmatprep.subr.mxu0 0.0
        %1558 = vmatpush1.msra.mxu0 %v1440
        %1559 = vmatprep.subr.mxu0 0.0
        %1560 = vmatpush1.msra.mxu0 %v1443
        %1561 = vmatprep.subr.mxu0 0.0
        %1562 = vmatpush1.msra.mxu0 %v1446
        %1563 = vmatprep.subr.mxu0 0.0
        %1564 = vmatpush1.msra.mxu0 %v1449
        %1565 = vmatprep.subr.mxu0 0.0
        %1566 = vmatpush1.msra.mxu0 0.0
        %1567 = vmatprep.subr.mxu0 0.0
        %1568 = vmatpush1.msra.mxu0 0.0
        %1569 = vmatprep.subr.mxu0 0.0
        %1570 = vmatpush1.msra.mxu0 0.0
        %1571 = vmatprep.subr.mxu0 0.0
        %1572 = vmatpush1.msra.mxu0 0.0
        %1573 = vmatprep.subr.mxu0 0.0
        %1574 = vmatpush1.msra.mxu0 0.0
        %1575 = vmatprep.subr.mxu0 0.0
        %1576 = vmatpush1.msra.mxu0 0.0
        %1577 = vmatprep.subr.mxu0 0.0
        %1578 = vmatpush1.msra.mxu0 0.0
        %1579 = vmatprep.subr.mxu0 0.0
        %1580 = vmatpush1.msra.mxu0 0.0
        %1581 = vmatprep.subr.mxu0 0.0
        %1582 = vmatpush1.msra.mxu0 0.0
        %1583 = vmatprep.subr.mxu0 0.0
        %1584 = vmatpush1.msra.mxu0 0.0
        %1585 = vmatprep.subr.mxu0 0.0
        %1586 = vmatpush1.msra.mxu0 0.0
        %1587 = vmatprep.subr.mxu0 0.0
        %1588 = vmatpush1.msra.mxu0 0.0
        %1589 = vmatprep.subr.mxu0 0.0
        %1590 = vmatpush1.msra.mxu0 0.0
        %1591 = vmatprep.subr.mxu0 0.0
        %1592 = vmatpush1.msra.mxu0 0.0
        %1593 = vmatprep.subr.mxu0 0.0
        %1594 = vmatpush1.msra.mxu0 0.0
        %1595 = vmatprep.subr.mxu0 0.0
        %1596 = vmatpush1.msra.mxu0 0.0
        %1597 = vmatprep.subr.mxu0 0.0
        %1598 = vmatpush1.msra.mxu0 0.0
        %1599 = vmatprep.subr.mxu0 0.0
        %1600 = vmatpush1.msra.mxu0 0.0
        %1601 = vmatprep.subr.mxu0 0.0
        %1602 = vmatpush1.msra.mxu0 0.0
        %1603 = vmatprep.subr.mxu0 0.0
        %1604 = vmatpush1.msra.mxu0 0.0
        %1605 = vmatprep.subr.mxu0 0.0
        %1606 = vmatpush1.msra.mxu0 0.0
        %1607 = vmatprep.subr.mxu0 0.0
        %1608 = vmatpush1.msra.mxu0 0.0
        %1609 = vmatprep.subr.mxu0 0.0
        %1610 = vmatpush1.msra.mxu0 0.0
        %1611 = vmatprep.mubr.f32.mxu0 0.0
        %1612 = vmatmul.mubr.f32.gmra.mrb[0].mxu0 %v1465
        %v1613 = vpop.f32.mrb[0].mxu0
        %v1614 = vadd.f32 %v1457, %v1613
        %v1615 = vpop.f32.mrb[0].mxu0
        %1616 = vmatprep.mubr.f32.mxu0 0.0
        %1617 = vmatmul.mubr.f32.gmra.mrb[0].mxu0 %v1468
        %v1618 = vpop.f32.mrb[0].mxu0
        %v1619 = vadd.f32 %v1462, %v1618
        %v1620 = vpop.f32.mrb[0].mxu0
        %1621 = vdwg.mxu0
        %s1622 = sld [smem:[#allocation7 + $0x2]]
        %vm1623 = vcmp.ge.f32.partialorder %v1537, 0.0
        %vm1624 = vcmp.ge.f32.partialorder %v1539, 0.0
        %vm1625 = vcmp.ge.f32.partialorder %v1614, 0.0
        %vm1626 = vcmp.ge.f32.partialorder %v1543, 0.0
        %vm1627 = vcmp.ge.f32.partialorder %v1545, 0.0
        %vm1628 = vcmp.ge.f32.partialorder %v1619, 0.0
        %v1629 = vstv %s1622
        %v1630 = vmul.f32 %v1629, %v1537
        %v1631 = vmul.f32 %v1629, %v1539
        %v1632 = vmul.f32 %v1629, %v1614
        %v1633 = vmul.f32 %v1629, %v1543
        %v1634 = vmul.f32 %v1629, %v1545
        %v1635 = vmul.f32 %v1629, %v1619
        %v1636 = vsel %vm1623, %v1537, %v1630
        %v1637 = vsel %vm1624, %v1539, %v1631
        %v1638 = vsel %vm1625, %v1614, %v1632
        %v1639 = vsel %vm1626, %v1543, %v1633
        %v1640 = vsel %vm1627, %v1545, %v1634
        %v1641 = vsel %vm1628, %v1619, %v1635
        %v1642 = vld [vmem:[%s9] sm:$0x7]
        %v1644 = vlaneseq
        %v1645 = vshrl.u32 %v1644, 7
        %v1646 = vsub.s32 0, %v1645
        %v1647 = vrot.slane %v1642, %v1646
        %v1648 = vlaneseq
        %v1649 = vshrl.u32 %v1648, 7
        %v1650 = vsub.s32 1, %v1649
        %v1651 = vrot.slane %v1642, %v1650
        %v1652 = vlaneseq
        %v1653 = vshrl.u32 %v1652, 7
        %v1654 = vsub.s32 2, %v1653
        %v1655 = vrot.slane %v1642, %v1654
        %v1659 = vmul.f32 %v1636, %v1647
        %v1660 = vmul.f32 %v1637, %v1651
        %v1661 = vmul.f32 %v1638, %v1655
        %v1662 = vmul.f32 %v1639, %v1647
        %v1663 = vmul.f32 %v1640, %v1651
        %v1664 = vmul.f32 %v1641, %v1655
        %1665 = vst [vmem:[#allocation4 + $0x8] sm:$0xff] %v1659
        %1666 = vst [vmem:[#allocation4 + $0x10] sm:$0xff] %v1660
        %1667 = vst [vmem:[#allocation4 + $0x18] sm:$0xff] %v1661
        %1668 = vst [vmem:[#allocation4 + $0x30] sm:$0xff] %v1662
        %1669 = vst [vmem:[#allocation4 + $0x38] sm:$0xff] %v1663
        %1670 = vst [vmem:[#allocation4 + $0x40] sm:$0xff] %v1664
        %v1671 = vld [vmem:[#allocation4] sm:$0xff]
        %v1672 = vld [vmem:[#allocation4 + $0x8] sm:$0xff]
        %v1673 = vld [vmem:[#allocation4 + $0x10] sm:$0xff]
        %v1674 = vld [vmem:[#allocation4 + $0x18] sm:$0xff]
        %v1675 = vld [vmem:[#allocation4 + $0x28] sm:$0xff]
        %v1676 = vld [vmem:[#allocation4 + $0x30] sm:$0xff]
        %v1677 = vld [vmem:[#allocation4 + $0x38] sm:$0xff]
        %v1678 = vld [vmem:[#allocation4 + $0x40] sm:$0xff]
        %1687 = vrot.lane.b32.xlu0 %v1671, 19
        %v1688 = vpop.permute.xlu0 %1687
        %1689 = vrot.lane.b32.xlu0 %v1672, 19
        %v1690 = vpop.permute.xlu0 %1689
        %1691 = vrot.lane.b32.xlu0 %v1673, 19
        %v1692 = vpop.permute.xlu0 %1691
        %1693 = vrot.lane.b32.xlu0 %v1674, 19
        %v1694 = vpop.permute.xlu0 %1693
        %1695 = vrot.lane.b32.xlu0 %v1675, 19
        %v1696 = vpop.permute.xlu0 %1695
        %1697 = vrot.lane.b32.xlu0 %v1676, 19
        %v1698 = vpop.permute.xlu0 %1697
        %1699 = vrot.lane.b32.xlu0 %v1677, 19
        %v1700 = vpop.permute.xlu0 %1699
        %1701 = vrot.lane.b32.xlu0 %v1678, 19
        %v1702 = vpop.permute.xlu0 %1701
        %v1703 = vsel %vm400, %v1688, %v1690
        %v1704 = vsel %vm400, %v1690, %v1692
        %v1705 = vsel %vm400, %v1692, %v1694
        %v1706 = vsel %vm400, %v1696, %v1698
        %v1707 = vsel %vm400, %v1698, %v1700
        %v1708 = vsel %vm400, %v1700, %v1702
        %1715 = vst [vmem:[#allocation6] sm:$0xff] %v1703
        %1716 = vst [vmem:[#allocation6 + $0x8] sm:$0xff] %v1704
        %1717 = vst [vmem:[#allocation6 + $0x10] sm:$0xff] %v1705
        %1718 = vst [vmem:[#allocation6 + $0x18] sm:$0xff] %v1706
        %1719 = vst [vmem:[#allocation6 + $0x20] sm:$0xff] %v1707
        %1720 = vst [vmem:[#allocation6 + $0x28] sm:$0xff] %v1708
        %v1721 = vld [vmem:[#allocation4] sm:$0xff]
        %v1722 = vld [vmem:[#allocation4 + $0x8] sm:$0xff]
        %v1723 = vld [vmem:[#allocation4 + $0x10] sm:$0xff]
        %v1724 = vld [vmem:[#allocation4 + $0x18] sm:$0xff]
        %v1725 = vld [vmem:[#allocation4 + $0x28] sm:$0xff]
        %v1726 = vld [vmem:[#allocation4 + $0x30] sm:$0xff]
        %v1727 = vld [vmem:[#allocation4 + $0x38] sm:$0xff]
        %v1728 = vld [vmem:[#allocation4 + $0x40] sm:$0xff]
        %1737 = vrot.lane.b32.xlu0 %v1721, 18
        %v1738 = vpop.permute.xlu0 %1737
        %1739 = vrot.lane.b32.xlu0 %v1722, 18
        %v1740 = vpop.permute.xlu0 %1739
        %1741 = vrot.lane.b32.xlu0 %v1723, 18
        %v1742 = vpop.permute.xlu0 %1741
        %1743 = vrot.lane.b32.xlu0 %v1724, 18
        %v1744 = vpop.permute.xlu0 %1743
        %1745 = vrot.lane.b32.xlu0 %v1725, 18
        %v1746 = vpop.permute.xlu0 %1745
        %1747 = vrot.lane.b32.xlu0 %v1726, 18
        %v1748 = vpop.permute.xlu0 %1747
        %1749 = vrot.lane.b32.xlu0 %v1727, 18
        %v1750 = vpop.permute.xlu0 %1749
        %1751 = vrot.lane.b32.xlu0 %v1728, 18
        %v1752 = vpop.permute.xlu0 %1751
        %v1753 = vsel %vm426, %v1738, %v1740
        %v1754 = vsel %vm426, %v1740, %v1742
        %v1755 = vsel %vm426, %v1742, %v1744
        %v1756 = vsel %vm426, %v1746, %v1748
        %v1757 = vsel %vm426, %v1748, %v1750
        %v1758 = vsel %vm426, %v1750, %v1752
        %1765 = vst [vmem:[#allocation6 + $0x30] sm:$0xff] %v1753
        %1766 = vst [vmem:[#allocation6 + $0x38] sm:$0xff] %v1754
        %1767 = vst [vmem:[#allocation6 + $0x40] sm:$0xff] %v1755
        %1768 = vst [vmem:[#allocation6 + $0x48] sm:$0xff] %v1756
        %1769 = vst [vmem:[#allocation6 + $0x50] sm:$0xff] %v1757
        %1770 = vst [vmem:[#allocation6 + $0x58] sm:$0xff] %v1758
        %v1771 = vld [vmem:[#allocation4] sm:$0xff]
        %v1772 = vld [vmem:[#allocation4 + $0x8] sm:$0xff]
        %v1773 = vld [vmem:[#allocation4 + $0x10] sm:$0xff]
        %v1774 = vld [vmem:[#allocation4 + $0x18] sm:$0xff]
        %v1775 = vld [vmem:[#allocation4 + $0x28] sm:$0xff]
        %v1776 = vld [vmem:[#allocation4 + $0x30] sm:$0xff]
        %v1777 = vld [vmem:[#allocation4 + $0x38] sm:$0xff]
        %v1778 = vld [vmem:[#allocation4 + $0x40] sm:$0xff]
        %1787 = vrot.lane.b32.xlu0 %v1771, 17
        %v1788 = vpop.permute.xlu0 %1787
        %1789 = vrot.lane.b32.xlu0 %v1772, 17
        %v1790 = vpop.permute.xlu0 %1789
        %1791 = vrot.lane.b32.xlu0 %v1773, 17
        %v1792 = vpop.permute.xlu0 %1791
        %1793 = vrot.lane.b32.xlu0 %v1774, 17
        %v1794 = vpop.permute.xlu0 %1793
        %1795 = vrot.lane.b32.xlu0 %v1775, 17
        %v1796 = vpop.permute.xlu0 %1795
        %1797 = vrot.lane.b32.xlu0 %v1776, 17
        %v1798 = vpop.permute.xlu0 %1797
        %1799 = vrot.lane.b32.xlu0 %v1777, 17
        %v1800 = vpop.permute.xlu0 %1799
        %1801 = vrot.lane.b32.xlu0 %v1778, 17
        %v1802 = vpop.permute.xlu0 %1801
        %v1803 = vsel %vm452, %v1788, %v1790
        %v1804 = vsel %vm452, %v1790, %v1792
        %v1805 = vsel %vm452, %v1792, %v1794
        %v1806 = vsel %vm452, %v1796, %v1798
        %v1807 = vsel %vm452, %v1798, %v1800
        %v1808 = vsel %vm452, %v1800, %v1802
        %1815 = vst [vmem:[#allocation6 + $0x60] sm:$0xff] %v1803
        %1816 = vst [vmem:[#allocation6 + $0x68] sm:$0xff] %v1804
        %1817 = vst [vmem:[#allocation6 + $0x70] sm:$0xff] %v1805
        %1818 = vst [vmem:[#allocation6 + $0x78] sm:$0xff] %v1806
        %1819 = vst [vmem:[#allocation6 + $0x80] sm:$0xff] %v1807
        %1820 = vst [vmem:[#allocation6 + $0x88] sm:$0xff] %v1808
        %v1821 = vld [vmem:[#allocation4] sm:$0xff]
        %v1822 = vld [vmem:[#allocation4 + $0x8] sm:$0xff]
        %v1823 = vld [vmem:[#allocation4 + $0x10] sm:$0xff]
        %v1824 = vld [vmem:[#allocation4 + $0x18] sm:$0xff]
        %v1825 = vld [vmem:[#allocation4 + $0x28] sm:$0xff]
        %v1826 = vld [vmem:[#allocation4 + $0x30] sm:$0xff]
        %v1827 = vld [vmem:[#allocation4 + $0x38] sm:$0xff]
        %v1828 = vld [vmem:[#allocation4 + $0x40] sm:$0xff]
        %1837 = vrot.lane.b32.xlu0 %v1821, 1
        %v1838 = vpop.permute.xlu0 %1837
        %1839 = vrot.lane.b32.xlu0 %v1822, 1
        %v1840 = vpop.permute.xlu0 %1839
        %1841 = vrot.lane.b32.xlu0 %v1823, 1
        %v1842 = vpop.permute.xlu0 %1841
        %1843 = vrot.lane.b32.xlu0 %v1824, 1
        %v1844 = vpop.permute.xlu0 %1843
        %1845 = vrot.lane.b32.xlu0 %v1825, 1
        %v1846 = vpop.permute.xlu0 %1845
        %1847 = vrot.lane.b32.xlu0 %v1826, 1
        %v1848 = vpop.permute.xlu0 %1847
        %1849 = vrot.lane.b32.xlu0 %v1827, 1
        %v1850 = vpop.permute.xlu0 %1849
        %1851 = vrot.lane.b32.xlu0 %v1828, 1
        %v1852 = vpop.permute.xlu0 %1851
        %v1853 = vsel %vm478, %v1838, %v1840
        %v1854 = vsel %vm478, %v1840, %v1842
        %v1855 = vsel %vm478, %v1842, %v1844
        %v1856 = vsel %vm478, %v1846, %v1848
        %v1857 = vsel %vm478, %v1848, %v1850
        %v1858 = vsel %vm478, %v1850, %v1852
        %1865 = vst [vmem:[#allocation6 + $0x90] sm:$0xff] %v1853
        %1866 = vst [vmem:[#allocation6 + $0x98] sm:$0xff] %v1854
        %1867 = vst [vmem:[#allocation6 + $0xa0] sm:$0xff] %v1855
        %1868 = vst [vmem:[#allocation6 + $0xa8] sm:$0xff] %v1856
        %1869 = vst [vmem:[#allocation6 + $0xb0] sm:$0xff] %v1857
        %1870 = vst [vmem:[#allocation6 + $0xb8] sm:$0xff] %v1858
        %v1871 = vld [vmem:[#allocation4 + $0x8] sm:$0xff]
        %v1872 = vld [vmem:[#allocation4 + $0x10] sm:$0xff]
        %v1873 = vld [vmem:[#allocation4 + $0x18] sm:$0xff]
        %v1874 = vld [vmem:[#allocation4 + $0x30] sm:$0xff]
        %v1875 = vld [vmem:[#allocation4 + $0x38] sm:$0xff]
        %v1876 = vld [vmem:[#allocation4 + $0x40] sm:$0xff]
        %1877 = vst [vmem:[#allocation6 + $0xc0] sm:$0xff] %v1871
        %1878 = vst [vmem:[#allocation6 + $0xc8] sm:$0xff] %v1872
        %1879 = vst [vmem:[#allocation6 + $0xd0] sm:$0xff] %v1873
        %1880 = vst [vmem:[#allocation6 + $0xd8] sm:$0xff] %v1874
        %1881 = vst [vmem:[#allocation6 + $0xe0] sm:$0xff] %v1875
        %1882 = vst [vmem:[#allocation6 + $0xe8] sm:$0xff] %v1876
        %v1883 = vld [vmem:[#allocation4 + $0x8] sm:$0xff]
        %v1884 = vld [vmem:[#allocation4 + $0x10] sm:$0xff]
        %v1885 = vld [vmem:[#allocation4 + $0x18] sm:$0xff]
        %v1886 = vld [vmem:[#allocation4 + $0x20] sm:$0xff]
        %v1887 = vld [vmem:[#allocation4 + $0x30] sm:$0xff]
        %v1888 = vld [vmem:[#allocation4 + $0x38] sm:$0xff]
        %v1889 = vld [vmem:[#allocation4 + $0x40] sm:$0xff]
        %v1890 = vld [vmem:[#allocation4 + $0x48] sm:$0xff]
        %1899 = vrot.lane.b32.xlu0 %v1883, 127
        %v1900 = vpop.permute.xlu0 %1899
        %1901 = vrot.lane.b32.xlu0 %v1884, 127
        %v1902 = vpop.permute.xlu0 %1901
        %1903 = vrot.lane.b32.xlu0 %v1885, 127
        %v1904 = vpop.permute.xlu0 %1903
        %1905 = vrot.lane.b32.xlu0 %v1886, 127
        %v1906 = vpop.permute.xlu0 %1905
        %1907 = vrot.lane.b32.xlu0 %v1887, 127
        %v1908 = vpop.permute.xlu0 %1907
        %1909 = vrot.lane.b32.xlu0 %v1888, 127
        %v1910 = vpop.permute.xlu0 %1909
        %1911 = vrot.lane.b32.xlu0 %v1889, 127
        %v1912 = vpop.permute.xlu0 %1911
        %1913 = vrot.lane.b32.xlu0 %v1890, 127
        %v1914 = vpop.permute.xlu0 %1913
        %v1915 = vsel %vm510, %v1900, %v1902
        %v1916 = vsel %vm510, %v1902, %v1904
        %v1917 = vsel %vm510, %v1904, %v1906
        %v1918 = vsel %vm510, %v1908, %v1910
        %v1919 = vsel %vm510, %v1910, %v1912
        %v1920 = vsel %vm510, %v1912, %v1914
        %1927 = vst [vmem:[#allocation6 + $0xf0] sm:$0xff] %v1915
        %1928 = vst [vmem:[#allocation6 + $0xf8] sm:$0xff] %v1916
        %1929 = vst [vmem:[#allocation6 + $0x100] sm:$0xff] %v1917
        %1930 = vst [vmem:[#allocation6 + $0x108] sm:$0xff] %v1918
        %1931 = vst [vmem:[#allocation6 + $0x110] sm:$0xff] %v1919
        %1932 = vst [vmem:[#allocation6 + $0x118] sm:$0xff] %v1920
        %v1933 = vld [vmem:[#allocation4 + $0x8] sm:$0xff]
        %v1934 = vld [vmem:[#allocation4 + $0x10] sm:$0xff]
        %v1935 = vld [vmem:[#allocation4 + $0x18] sm:$0xff]
        %v1936 = vld [vmem:[#allocation4 + $0x20] sm:$0xff]
        %v1937 = vld [vmem:[#allocation4 + $0x30] sm:$0xff]
        %v1938 = vld [vmem:[#allocation4 + $0x38] sm:$0xff]
        %v1939 = vld [vmem:[#allocation4 + $0x40] sm:$0xff]
        %v1940 = vld [vmem:[#allocation4 + $0x48] sm:$0xff]
        %1949 = vrot.lane.b32.xlu0 %v1933, 111
        %v1950 = vpop.permute.xlu0 %1949
        %1951 = vrot.lane.b32.xlu0 %v1934, 111
        %v1952 = vpop.permute.xlu0 %1951
        %1953 = vrot.lane.b32.xlu0 %v1935, 111
        %v1954 = vpop.permute.xlu0 %1953
        %1955 = vrot.lane.b32.xlu0 %v1936, 111
        %v1956 = vpop.permute.xlu0 %1955
        %1957 = vrot.lane.b32.xlu0 %v1937, 111
        %v1958 = vpop.permute.xlu0 %1957
        %1959 = vrot.lane.b32.xlu0 %v1938, 111
        %v1960 = vpop.permute.xlu0 %1959
        %1961 = vrot.lane.b32.xlu0 %v1939, 111
        %v1962 = vpop.permute.xlu0 %1961
        %1963 = vrot.lane.b32.xlu0 %v1940, 111
        %v1964 = vpop.permute.xlu0 %1963
        %v1965 = vsel %vm536, %v1950, %v1952
        %v1966 = vsel %vm536, %v1952, %v1954
        %v1967 = vsel %vm536, %v1954, %v1956
        %v1968 = vsel %vm536, %v1958, %v1960
        %v1969 = vsel %vm536, %v1960, %v1962
        %v1970 = vsel %vm536, %v1962, %v1964
        %1977 = vst [vmem:[#allocation6 + $0x120] sm:$0xff] %v1965
        %1978 = vst [vmem:[#allocation6 + $0x128] sm:$0xff] %v1966
        %1979 = vst [vmem:[#allocation6 + $0x130] sm:$0xff] %v1967
        %1980 = vst [vmem:[#allocation6 + $0x138] sm:$0xff] %v1968
        %1981 = vst [vmem:[#allocation6 + $0x140] sm:$0xff] %v1969
        %1982 = vst [vmem:[#allocation6 + $0x148] sm:$0xff] %v1970
        %v1983 = vld [vmem:[#allocation4 + $0x8] sm:$0xff]
        %v1984 = vld [vmem:[#allocation4 + $0x10] sm:$0xff]
        %v1985 = vld [vmem:[#allocation4 + $0x18] sm:$0xff]
        %v1986 = vld [vmem:[#allocation4 + $0x20] sm:$0xff]
        %v1987 = vld [vmem:[#allocation4 + $0x30] sm:$0xff]
        %v1988 = vld [vmem:[#allocation4 + $0x38] sm:$0xff]
        %v1989 = vld [vmem:[#allocation4 + $0x40] sm:$0xff]
        %v1990 = vld [vmem:[#allocation4 + $0x48] sm:$0xff]
        %1999 = vrot.lane.b32.xlu0 %v1983, 110
        %v2000 = vpop.permute.xlu0 %1999
        %2001 = vrot.lane.b32.xlu0 %v1984, 110
        %v2002 = vpop.permute.xlu0 %2001
        %2003 = vrot.lane.b32.xlu0 %v1985, 110
        %v2004 = vpop.permute.xlu0 %2003
        %2005 = vrot.lane.b32.xlu0 %v1986, 110
        %v2006 = vpop.permute.xlu0 %2005
        %2007 = vrot.lane.b32.xlu0 %v1987, 110
        %v2008 = vpop.permute.xlu0 %2007
        %2009 = vrot.lane.b32.xlu0 %v1988, 110
        %v2010 = vpop.permute.xlu0 %2009
        %2011 = vrot.lane.b32.xlu0 %v1989, 110
        %v2012 = vpop.permute.xlu0 %2011
        %2013 = vrot.lane.b32.xlu0 %v1990, 110
        %v2014 = vpop.permute.xlu0 %2013
        %v2015 = vsel %vm562, %v2000, %v2002
        %v2016 = vsel %vm562, %v2002, %v2004
        %v2017 = vsel %vm562, %v2004, %v2006
        %v2018 = vsel %vm562, %v2008, %v2010
        %v2019 = vsel %vm562, %v2010, %v2012
        %v2020 = vsel %vm562, %v2012, %v2014
        %2027 = vst [vmem:[#allocation6 + $0x150] sm:$0xff] %v2015
        %2028 = vst [vmem:[#allocation6 + $0x158] sm:$0xff] %v2016
        %2029 = vst [vmem:[#allocation6 + $0x160] sm:$0xff] %v2017
        %2030 = vst [vmem:[#allocation6 + $0x168] sm:$0xff] %v2018
        %2031 = vst [vmem:[#allocation6 + $0x170] sm:$0xff] %v2019
        %2032 = vst [vmem:[#allocation6 + $0x178] sm:$0xff] %v2020
        %v2033 = vld [vmem:[#allocation4 + $0x8] sm:$0xff]
        %v2034 = vld [vmem:[#allocation4 + $0x10] sm:$0xff]
        %v2035 = vld [vmem:[#allocation4 + $0x18] sm:$0xff]
        %v2036 = vld [vmem:[#allocation4 + $0x20] sm:$0xff]
        %v2037 = vld [vmem:[#allocation4 + $0x30] sm:$0xff]
        %v2038 = vld [vmem:[#allocation4 + $0x38] sm:$0xff]
        %v2039 = vld [vmem:[#allocation4 + $0x40] sm:$0xff]
        %v2040 = vld [vmem:[#allocation4 + $0x48] sm:$0xff]
        %2049 = vrot.lane.b32.xlu0 %v2033, 109
        %v2050 = vpop.permute.xlu0 %2049
        %2051 = vrot.lane.b32.xlu0 %v2034, 109
        %v2052 = vpop.permute.xlu0 %2051
        %2053 = vrot.lane.b32.xlu0 %v2035, 109
        %v2054 = vpop.permute.xlu0 %2053
        %2055 = vrot.lane.b32.xlu0 %v2036, 109
        %v2056 = vpop.permute.xlu0 %2055
        %2057 = vrot.lane.b32.xlu0 %v2037, 109
        %v2058 = vpop.permute.xlu0 %2057
        %2059 = vrot.lane.b32.xlu0 %v2038, 109
        %v2060 = vpop.permute.xlu0 %2059
        %2061 = vrot.lane.b32.xlu0 %v2039, 109
        %v2062 = vpop.permute.xlu0 %2061
        %2063 = vrot.lane.b32.xlu0 %v2040, 109
        %v2064 = vpop.permute.xlu0 %2063
        %v2065 = vsel %vm588, %v2050, %v2052
        %v2066 = vsel %vm588, %v2052, %v2054
        %v2067 = vsel %vm588, %v2054, %v2056
        %v2068 = vsel %vm588, %v2058, %v2060
        %v2069 = vsel %vm588, %v2060, %v2062
        %v2070 = vsel %vm588, %v2062, %v2064
        %2077 = vst [vmem:[#allocation6 + $0x180] sm:$0xff] %v2065
        %2078 = vst [vmem:[#allocation6 + $0x188] sm:$0xff] %v2066
        %2079 = vst [vmem:[#allocation6 + $0x190] sm:$0xff] %v2067
        %2080 = vst [vmem:[#allocation6 + $0x198] sm:$0xff] %v2068
        %2081 = vst [vmem:[#allocation6 + $0x1a0] sm:$0xff] %v2069
        %2082 = vst [vmem:[#allocation6 + $0x1a8] sm:$0xff] %v2070
        %v2083 = vld [vmem:[#allocation6] sm:$0xff]
        %v2084 = vld [vmem:[#allocation6 + $0x8] sm:$0xff]
        %v2085 = vld [vmem:[#allocation6 + $0x10] sm:$0xff]
        %v2086 = vld [vmem:[#allocation6 + $0x18] sm:$0xff]
        %v2087 = vld [vmem:[#allocation6 + $0x20] sm:$0xff]
        %v2088 = vld [vmem:[#allocation6 + $0x28] sm:$0xff]
        %v2089 = vld [vmem:[#allocation6 + $0x30] sm:$0xff]
        %v2090 = vld [vmem:[#allocation6 + $0x38] sm:$0xff]
        %v2091 = vld [vmem:[#allocation6 + $0x40] sm:$0xff]
        %v2092 = vld [vmem:[#allocation6 + $0x48] sm:$0xff]
        %v2093 = vld [vmem:[#allocation6 + $0x50] sm:$0xff]
        %v2094 = vld [vmem:[#allocation6 + $0x58] sm:$0xff]
        %v2095 = vld [vmem:[#allocation6 + $0x60] sm:$0xff]
        %v2096 = vld [vmem:[#allocation6 + $0x68] sm:$0xff]
        %v2097 = vld [vmem:[#allocation6 + $0x70] sm:$0xff]
        %v2098 = vld [vmem:[#allocation6 + $0x78] sm:$0xff]
        %v2099 = vld [vmem:[#allocation6 + $0x80] sm:$0xff]
        %v2100 = vld [vmem:[#allocation6 + $0x88] sm:$0xff]
        %v2101 = vld [vmem:[#allocation6 + $0x90] sm:$0xff]
        %v2102 = vld [vmem:[#allocation6 + $0x98] sm:$0xff]
        %v2103 = vld [vmem:[#allocation6 + $0xa0] sm:$0xff]
        %v2104 = vld [vmem:[#allocation6 + $0xa8] sm:$0xff]
        %v2105 = vld [vmem:[#allocation6 + $0xb0] sm:$0xff]
        %v2106 = vld [vmem:[#allocation6 + $0xb8] sm:$0xff]
        %v2107 = vld [vmem:[#allocation6 + $0xc0] sm:$0xff]
        %v2108 = vld [vmem:[#allocation6 + $0xc8] sm:$0xff]
        %v2109 = vld [vmem:[#allocation6 + $0xd0] sm:$0xff]
        %v2110 = vld [vmem:[#allocation6 + $0xd8] sm:$0xff]
        %v2111 = vld [vmem:[#allocation6 + $0xe0] sm:$0xff]
        %v2112 = vld [vmem:[#allocation6 + $0xe8] sm:$0xff]
        %v2113 = vld [vmem:[#allocation6 + $0xf0] sm:$0xff]
        %v2114 = vld [vmem:[#allocation6 + $0xf8] sm:$0xff]
        %v2115 = vld [vmem:[#allocation6 + $0x100] sm:$0xff]
        %v2116 = vld [vmem:[#allocation6 + $0x108] sm:$0xff]
        %v2117 = vld [vmem:[#allocation6 + $0x110] sm:$0xff]
        %v2118 = vld [vmem:[#allocation6 + $0x118] sm:$0xff]
        %v2119 = vld [vmem:[#allocation6 + $0x120] sm:$0xff]
        %v2120 = vld [vmem:[#allocation6 + $0x128] sm:$0xff]
        %v2121 = vld [vmem:[#allocation6 + $0x130] sm:$0xff]
        %v2122 = vld [vmem:[#allocation6 + $0x138] sm:$0xff]
        %v2123 = vld [vmem:[#allocation6 + $0x140] sm:$0xff]
        %v2124 = vld [vmem:[#allocation6 + $0x148] sm:$0xff]
        %v2125 = vld [vmem:[#allocation6 + $0x150] sm:$0xff]
        %v2126 = vld [vmem:[#allocation6 + $0x158] sm:$0xff]
        %v2127 = vld [vmem:[#allocation6 + $0x160] sm:$0xff]
        %v2128 = vld [vmem:[#allocation6 + $0x168] sm:$0xff]
        %v2129 = vld [vmem:[#allocation6 + $0x170] sm:$0xff]
        %v2130 = vld [vmem:[#allocation6 + $0x178] sm:$0xff]
        %v2131 = vld [vmem:[#allocation6 + $0x180] sm:$0xff]
        %v2132 = vld [vmem:[#allocation6 + $0x188] sm:$0xff]
        %v2133 = vld [vmem:[#allocation6 + $0x190] sm:$0xff]
        %v2134 = vld [vmem:[#allocation6 + $0x198] sm:$0xff]
        %v2135 = vld [vmem:[#allocation6 + $0x1a0] sm:$0xff]
        %v2136 = vld [vmem:[#allocation6 + $0x1a8] sm:$0xff]
        %v2137 = vld [vmem:[%s5] sm:$0xff]
        %v2138 = vld [vmem:[%s5 + $0x8] sm:$0xff]
        %v2139 = vld [vmem:[%s8] sm:$0xff]
        %2141 = vset.pattern.permute.xlu0 0
        %2142 = vperm.xlu0 %2141, %v2139
        %v2143 = vpop.permute.xlu0 %2142
        %vm2145 = vcmask 130048
        %v2147 = vsel %vm2145, %v2138, 0
        %2149 = vmatprep.subr.mxu0 %v2084
        %2150 = vmatpush1.msra.mxu0 %v2083
        %2151 = vmatprep.subr.mxu0 %v2087
        %2152 = vmatpush1.msra.mxu0 %v2086
        %2153 = vmatprep.subr.mxu0 %v2090
        %2154 = vmatpush1.msra.mxu0 %v2089
        %2155 = vmatprep.subr.mxu0 %v2093
        %2156 = vmatpush1.msra.mxu0 %v2092
        %2157 = vmatprep.subr.mxu0 %v2096
        %2158 = vmatpush1.msra.mxu0 %v2095
        %2159 = vmatprep.subr.mxu0 %v2099
        %2160 = vmatpush1.msra.mxu0 %v2098
        %2161 = vmatprep.subr.mxu0 %v2102
        %2162 = vmatpush1.msra.mxu0 %v2101
        %2163 = vmatprep.subr.mxu0 %v2105
        %2164 = vmatpush1.msra.mxu0 %v2104
        %2165 = vmatprep.subr.mxu0 %v2108
        %2166 = vmatpush1.msra.mxu0 %v2107
        %2167 = vmatprep.subr.mxu0 %v2111
        %2168 = vmatpush1.msra.mxu0 %v2110
        %2169 = vmatprep.subr.mxu0 %v2114
        %2170 = vmatpush1.msra.mxu0 %v2113
        %2171 = vmatprep.subr.mxu0 %v2117
        %2172 = vmatpush1.msra.mxu0 %v2116
        %2173 = vmatprep.subr.mxu0 %v2120
        %2174 = vmatpush1.msra.mxu0 %v2119
        %2175 = vmatprep.subr.mxu0 %v2123
        %2176 = vmatpush1.msra.mxu0 %v2122
        %2177 = vmatprep.subr.mxu0 %v2126
        %2178 = vmatpush1.msra.mxu0 %v2125
        %2179 = vmatprep.subr.mxu0 %v2129
        %2180 = vmatpush1.msra.mxu0 %v2128
        %2181 = vmatprep.subr.mxu0 %v2132
        %2182 = vmatpush1.msra.mxu0 %v2131
        %2183 = vmatprep.subr.mxu0 %v2135
        %2184 = vmatpush1.msra.mxu0 %v2134
        %2185 = vmatprep.subr.mxu0 0.0
        %2186 = vmatpush1.msra.mxu0 0.0
        %2187 = vmatprep.subr.mxu0 0.0
        %2188 = vmatpush1.msra.mxu0 0.0
        %2189 = vmatprep.subr.mxu0 0.0
        %2190 = vmatpush1.msra.mxu0 0.0
        %2191 = vmatprep.subr.mxu0 0.0
        %2192 = vmatpush1.msra.mxu0 0.0
        %2193 = vmatprep.subr.mxu0 0.0
        %2194 = vmatpush1.msra.mxu0 0.0
        %2195 = vmatprep.subr.mxu0 0.0
        %2196 = vmatpush1.msra.mxu0 0.0
        %2197 = vmatprep.subr.mxu0 0.0
        %2198 = vmatpush1.msra.mxu0 0.0
        %2199 = vmatprep.subr.mxu0 0.0
        %2200 = vmatpush1.msra.mxu0 0.0
        %2201 = vmatprep.subr.mxu0 0.0
        %2202 = vmatpush1.msra.mxu0 0.0
        %2203 = vmatprep.subr.mxu0 0.0
        %2204 = vmatpush1.msra.mxu0 0.0
        %2205 = vmatprep.subr.mxu0 0.0
        %2206 = vmatpush1.msra.mxu0 0.0
        %2207 = vmatprep.subr.mxu0 0.0
        %2208 = vmatpush1.msra.mxu0 0.0
        %2209 = vmatprep.subr.mxu0 0.0
        %2210 = vmatpush1.msra.mxu0 0.0
        %2211 = vmatprep.subr.mxu0 0.0
        %2212 = vmatpush1.msra.mxu0 0.0
        %2213 = vmatprep.mubr.f32.mxu0 %v2147
        %2214 = vmatmul.mubr.f32.gmra.mrb[0].mxu0 %v2137
        %v2215 = vpop.f32.mrb[0].mxu0
        %v2216 = vadd.f32 %v2143, %v2215
        %v2217 = vpop.f32.mrb[0].mxu0
        %v2218 = vadd.f32 %v2143, %v2217
        %2219 = vdwg.mxu0
        %2220 = vmatprep.subr.mxu0 0.0
        %2221 = vmatpush1.msra.mxu0 %v2085
        %2222 = vmatprep.subr.mxu0 0.0
        %2223 = vmatpush1.msra.mxu0 %v2088
        %2224 = vmatprep.subr.mxu0 0.0
        %2225 = vmatpush1.msra.mxu0 %v2091
        %2226 = vmatprep.subr.mxu0 0.0
        %2227 = vmatpush1.msra.mxu0 %v2094
        %2228 = vmatprep.subr.mxu0 0.0
        %2229 = vmatpush1.msra.mxu0 %v2097
        %2230 = vmatprep.subr.mxu0 0.0
        %2231 = vmatpush1.msra.mxu0 %v2100
        %2232 = vmatprep.subr.mxu0 0.0
        %2233 = vmatpush1.msra.mxu0 %v2103
        %2234 = vmatprep.subr.mxu0 0.0
        %2235 = vmatpush1.msra.mxu0 %v2106
        %2236 = vmatprep.subr.mxu0 0.0
        %2237 = vmatpush1.msra.mxu0 %v2109
        %2238 = vmatprep.subr.mxu0 0.0
        %2239 = vmatpush1.msra.mxu0 %v2112
        %2240 = vmatprep.subr.mxu0 0.0
        %2241 = vmatpush1.msra.mxu0 %v2115
        %2242 = vmatprep.subr.mxu0 0.0
        %2243 = vmatpush1.msra.mxu0 %v2118
        %2244 = vmatprep.subr.mxu0 0.0
        %2245 = vmatpush1.msra.mxu0 %v2121
        %2246 = vmatprep.subr.mxu0 0.0
        %2247 = vmatpush1.msra.mxu0 %v2124
        %2248 = vmatprep.subr.mxu0 0.0
        %2249 = vmatpush1.msra.mxu0 %v2127
        %2250 = vmatprep.subr.mxu0 0.0
        %2251 = vmatpush1.msra.mxu0 %v2130
        %2252 = vmatprep.subr.mxu0 0.0
        %2253 = vmatpush1.msra.mxu0 %v2133
        %2254 = vmatprep.subr.mxu0 0.0
        %2255 = vmatpush1.msra.mxu0 %v2136
        %2256 = vmatprep.subr.mxu0 0.0
        %2257 = vmatpush1.msra.mxu0 0.0
        %2258 = vmatprep.subr.mxu0 0.0
        %2259 = vmatpush1.msra.mxu0 0.0
        %2260 = vmatprep.subr.mxu0 0.0
        %2261 = vmatpush1.msra.mxu0 0.0
        %2262 = vmatprep.subr.mxu0 0.0
        %2263 = vmatpush1.msra.mxu0 0.0
        %2264 = vmatprep.subr.mxu0 0.0
        %2265 = vmatpush1.msra.mxu0 0.0
        %2266 = vmatprep.subr.mxu0 0.0
        %2267 = vmatpush1.msra.mxu0 0.0
        %2268 = vmatprep.subr.mxu0 0.0
        %2269 = vmatpush1.msra.mxu0 0.0
        %2270 = vmatprep.subr.mxu0 0.0
        %2271 = vmatpush1.msra.mxu0 0.0
        %2272 = vmatprep.subr.mxu0 0.0
        %2273 = vmatpush1.msra.mxu0 0.0
        %2274 = vmatprep.subr.mxu0 0.0
        %2275 = vmatpush1.msra.mxu0 0.0
        %2276 = vmatprep.subr.mxu0 0.0
        %2277 = vmatpush1.msra.mxu0 0.0
        %2278 = vmatprep.subr.mxu0 0.0
        %2279 = vmatpush1.msra.mxu0 0.0
        %2280 = vmatprep.subr.mxu0 0.0
        %2281 = vmatpush1.msra.mxu0 0.0
        %2282 = vmatprep.subr.mxu0 0.0
        %2283 = vmatpush1.msra.mxu0 0.0
        %2284 = vmatprep.mubr.f32.mxu0 %v2147
        %2285 = vmatmul.mubr.f32.gmra.mrb[0].mxu0 %v2137
        %v2286 = vpop.f32.mrb[0].mxu0
        %v2287 = vadd.f32 %v2143, %v2286
        %v2288 = vpop.f32.mrb[0].mxu0
        %2289 = vdwg.mxu0
        %s2290 = sld [smem:[#allocation7 + $0x3]]
        %vm2291 = vcmp.ge.f32.partialorder %v2216, 0.0
        %vm2292 = vcmp.ge.f32.partialorder %v2218, 0.0
        %vm2293 = vcmp.ge.f32.partialorder %v2287, 0.0
        %v2294 = vstv %s2290
        %v2295 = vmul.f32 %v2294, %v2216
        %v2296 = vmul.f32 %v2294, %v2218
        %v2297 = vmul.f32 %v2294, %v2287
        %v2298 = vsel %vm2291, %v2216, %v2295
        %v2299 = vsel %vm2292, %v2218, %v2296
        %v2300 = vsel %vm2293, %v2287, %v2297
        %v2301 = vld [vmem:[#allocation2 + $0x8] sm:$0xff]
        %v2302 = vld [vmem:[#allocation2 + $0x10] sm:$0xff]
        %v2303 = vld [vmem:[#allocation2 + $0x18] sm:$0xff]
        %v2304 = vadd.f32 %v2298, %v2301
        %v2305 = vadd.f32 %v2299, %v2302
        %v2306 = vadd.f32 %v2300, %v2303
        %v2307 = vld [vmem:[%s9] sm:$0x7]
        %v2309 = vlaneseq
        %v2310 = vshrl.u32 %v2309, 7
        %v2311 = vsub.s32 0, %v2310
        %v2312 = vrot.slane %v2307, %v2311
        %v2313 = vlaneseq
        %v2314 = vshrl.u32 %v2313, 7
        %v2315 = vsub.s32 1, %v2314
        %v2316 = vrot.slane %v2307, %v2315
        %v2317 = vlaneseq
        %v2318 = vshrl.u32 %v2317, 7
        %v2319 = vsub.s32 2, %v2318
        %v2320 = vrot.slane %v2307, %v2319
        %v2324 = vmul.f32 %v2304, %v2312
        %v2325 = vmul.f32 %v2305, %v2316
        %v2326 = vmul.f32 %v2306, %v2320
        %2327 = vst [vmem:[#allocation5 + $0x8] sm:$0xff] %v2324
        %2328 = vst [vmem:[#allocation5 + $0x10] sm:$0xff] %v2325
        %2329 = vst [vmem:[#allocation5 + $0x18] sm:$0xff] %v2326
        %v2330 = vld [vmem:[#allocation5] sm:$0xff]
        %v2331 = vld [vmem:[#allocation5 + $0x8] sm:$0xff]
        %v2332 = vld [vmem:[#allocation5 + $0x10] sm:$0xff]
        %v2333 = vld [vmem:[#allocation5 + $0x18] sm:$0xff]
        %2338 = vrot.lane.b32.xlu0 %v2330, 19
        %v2339 = vpop.permute.xlu0 %2338
        %2340 = vrot.lane.b32.xlu0 %v2331, 19
        %v2341 = vpop.permute.xlu0 %2340
        %2342 = vrot.lane.b32.xlu0 %v2332, 19
        %v2343 = vpop.permute.xlu0 %2342
        %2344 = vrot.lane.b32.xlu0 %v2333, 19
        %v2345 = vpop.permute.xlu0 %2344
        %v2346 = vsel %vm400, %v2339, %v2341
        %v2347 = vsel %vm400, %v2341, %v2343
        %v2348 = vsel %vm400, %v2343, %v2345
        %2352 = vst [vmem:[#allocation6] sm:$0xff] %v2346
        %2353 = vst [vmem:[#allocation6 + $0x8] sm:$0xff] %v2347
        %2354 = vst [vmem:[#allocation6 + $0x10] sm:$0xff] %v2348
        %v2355 = vld [vmem:[#allocation5] sm:$0xff]
        %v2356 = vld [vmem:[#allocation5 + $0x8] sm:$0xff]
        %v2357 = vld [vmem:[#allocation5 + $0x10] sm:$0xff]
        %v2358 = vld [vmem:[#allocation5 + $0x18] sm:$0xff]
        %2363 = vrot.lane.b32.xlu0 %v2355, 18
        %v2364 = vpop.permute.xlu0 %2363
        %2365 = vrot.lane.b32.xlu0 %v2356, 18
        %v2366 = vpop.permute.xlu0 %2365
        %2367 = vrot.lane.b32.xlu0 %v2357, 18
        %v2368 = vpop.permute.xlu0 %2367
        %2369 = vrot.lane.b32.xlu0 %v2358, 18
        %v2370 = vpop.permute.xlu0 %2369
        %v2371 = vsel %vm426, %v2364, %v2366
        %v2372 = vsel %vm426, %v2366, %v2368
        %v2373 = vsel %vm426, %v2368, %v2370
        %2377 = vst [vmem:[#allocation6 + $0x18] sm:$0xff] %v2371
        %2378 = vst [vmem:[#allocation6 + $0x20] sm:$0xff] %v2372
        %2379 = vst [vmem:[#allocation6 + $0x28] sm:$0xff] %v2373
        %v2380 = vld [vmem:[#allocation5] sm:$0xff]
        %v2381 = vld [vmem:[#allocation5 + $0x8] sm:$0xff]
        %v2382 = vld [vmem:[#allocation5 + $0x10] sm:$0xff]
        %v2383 = vld [vmem:[#allocation5 + $0x18] sm:$0xff]
        %2388 = vrot.lane.b32.xlu0 %v2380, 17
        %v2389 = vpop.permute.xlu0 %2388
        %2390 = vrot.lane.b32.xlu0 %v2381, 17
        %v2391 = vpop.permute.xlu0 %2390
        %2392 = vrot.lane.b32.xlu0 %v2382, 17
        %v2393 = vpop.permute.xlu0 %2392
        %2394 = vrot.lane.b32.xlu0 %v2383, 17
        %v2395 = vpop.permute.xlu0 %2394
        %v2396 = vsel %vm452, %v2389, %v2391
        %v2397 = vsel %vm452, %v2391, %v2393
        %v2398 = vsel %vm452, %v2393, %v2395
        %2402 = vst [vmem:[#allocation6 + $0x30] sm:$0xff] %v2396
        %2403 = vst [vmem:[#allocation6 + $0x38] sm:$0xff] %v2397
        %2404 = vst [vmem:[#allocation6 + $0x40] sm:$0xff] %v2398
        %v2405 = vld [vmem:[#allocation5] sm:$0xff]
        %v2406 = vld [vmem:[#allocation5 + $0x8] sm:$0xff]
        %v2407 = vld [vmem:[#allocation5 + $0x10] sm:$0xff]
        %v2408 = vld [vmem:[#allocation5 + $0x18] sm:$0xff]
        %2413 = vrot.lane.b32.xlu0 %v2405, 1
        %v2414 = vpop.permute.xlu0 %2413
        %2415 = vrot.lane.b32.xlu0 %v2406, 1
        %v2416 = vpop.permute.xlu0 %2415
        %2417 = vrot.lane.b32.xlu0 %v2407, 1
        %v2418 = vpop.permute.xlu0 %2417
        %2419 = vrot.lane.b32.xlu0 %v2408, 1
        %v2420 = vpop.permute.xlu0 %2419
        %v2421 = vsel %vm478, %v2414, %v2416
        %v2422 = vsel %vm478, %v2416, %v2418
        %v2423 = vsel %vm478, %v2418, %v2420
        %2427 = vst [vmem:[#allocation6 + $0x48] sm:$0xff] %v2421
        %2428 = vst [vmem:[#allocation6 + $0x50] sm:$0xff] %v2422
        %2429 = vst [vmem:[#allocation6 + $0x58] sm:$0xff] %v2423
        %v2430 = vld [vmem:[#allocation5 + $0x8] sm:$0xff]
        %v2431 = vld [vmem:[#allocation5 + $0x10] sm:$0xff]
        %v2432 = vld [vmem:[#allocation5 + $0x18] sm:$0xff]
        %2433 = vst [vmem:[#allocation6 + $0x60] sm:$0xff] %v2430
        %2434 = vst [vmem:[#allocation6 + $0x68] sm:$0xff] %v2431
        %2435 = vst [vmem:[#allocation6 + $0x70] sm:$0xff] %v2432
        %v2436 = vld [vmem:[#allocation5 + $0x8] sm:$0xff]
        %v2437 = vld [vmem:[#allocation5 + $0x10] sm:$0xff]
        %v2438 = vld [vmem:[#allocation5 + $0x18] sm:$0xff]
        %v2439 = vld [vmem:[#allocation5 + $0x20] sm:$0xff]
        %2444 = vrot.lane.b32.xlu0 %v2436, 127
        %v2445 = vpop.permute.xlu0 %2444
        %2446 = vrot.lane.b32.xlu0 %v2437, 127
        %v2447 = vpop.permute.xlu0 %2446
        %2448 = vrot.lane.b32.xlu0 %v2438, 127
        %v2449 = vpop.permute.xlu0 %2448
        %2450 = vrot.lane.b32.xlu0 %v2439, 127
        %v2451 = vpop.permute.xlu0 %2450
        %v2452 = vsel %vm510, %v2445, %v2447
        %v2453 = vsel %vm510, %v2447, %v2449
        %v2454 = vsel %vm510, %v2449, %v2451
        %2458 = vst [vmem:[#allocation6 + $0x78] sm:$0xff] %v2452
        %2459 = vst [vmem:[#allocation6 + $0x80] sm:$0xff] %v2453
        %2460 = vst [vmem:[#allocation6 + $0x88] sm:$0xff] %v2454
        %v2461 = vld [vmem:[#allocation5 + $0x8] sm:$0xff]
        %v2462 = vld [vmem:[#allocation5 + $0x10] sm:$0xff]
        %v2463 = vld [vmem:[#allocation5 + $0x18] sm:$0xff]
        %v2464 = vld [vmem:[#allocation5 + $0x20] sm:$0xff]
        %2469 = vrot.lane.b32.xlu0 %v2461, 111
        %v2470 = vpop.permute.xlu0 %2469
        %2471 = vrot.lane.b32.xlu0 %v2462, 111
        %v2472 = vpop.permute.xlu0 %2471
        %2473 = vrot.lane.b32.xlu0 %v2463, 111
        %v2474 = vpop.permute.xlu0 %2473
        %2475 = vrot.lane.b32.xlu0 %v2464, 111
        %v2476 = vpop.permute.xlu0 %2475
        %v2477 = vsel %vm536, %v2470, %v2472
        %v2478 = vsel %vm536, %v2472, %v2474
        %v2479 = vsel %vm536, %v2474, %v2476
        %2483 = vst [vmem:[#allocation6 + $0x90] sm:$0xff] %v2477
        %2484 = vst [vmem:[#allocation6 + $0x98] sm:$0xff] %v2478
        %2485 = vst [vmem:[#allocation6 + $0xa0] sm:$0xff] %v2479
        %v2486 = vld [vmem:[#allocation5 + $0x8] sm:$0xff]
        %v2487 = vld [vmem:[#allocation5 + $0x10] sm:$0xff]
        %v2488 = vld [vmem:[#allocation5 + $0x18] sm:$0xff]
        %v2489 = vld [vmem:[#allocation5 + $0x20] sm:$0xff]
        %2494 = vrot.lane.b32.xlu0 %v2486, 110
        %v2495 = vpop.permute.xlu0 %2494
        %2496 = vrot.lane.b32.xlu0 %v2487, 110
        %v2497 = vpop.permute.xlu0 %2496
        %2498 = vrot.lane.b32.xlu0 %v2488, 110
        %v2499 = vpop.permute.xlu0 %2498
        %2500 = vrot.lane.b32.xlu0 %v2489, 110
        %v2501 = vpop.permute.xlu0 %2500
        %v2502 = vsel %vm562, %v2495, %v2497
        %v2503 = vsel %vm562, %v2497, %v2499
        %v2504 = vsel %vm562, %v2499, %v2501
        %2508 = vst [vmem:[#allocation6 + $0xa8] sm:$0xff] %v2502
        %2509 = vst [vmem:[#allocation6 + $0xb0] sm:$0xff] %v2503
        %2510 = vst [vmem:[#allocation6 + $0xb8] sm:$0xff] %v2504
        %v2511 = vld [vmem:[#allocation5 + $0x8] sm:$0xff]
        %v2512 = vld [vmem:[#allocation5 + $0x10] sm:$0xff]
        %v2513 = vld [vmem:[#allocation5 + $0x18] sm:$0xff]
        %v2514 = vld [vmem:[#allocation5 + $0x20] sm:$0xff]
        %2519 = vrot.lane.b32.xlu0 %v2511, 109
        %v2520 = vpop.permute.xlu0 %2519
        %2521 = vrot.lane.b32.xlu0 %v2512, 109
        %v2522 = vpop.permute.xlu0 %2521
        %2523 = vrot.lane.b32.xlu0 %v2513, 109
        %v2524 = vpop.permute.xlu0 %2523
        %2525 = vrot.lane.b32.xlu0 %v2514, 109
        %v2526 = vpop.permute.xlu0 %2525
        %v2527 = vsel %vm588, %v2520, %v2522
        %v2528 = vsel %vm588, %v2522, %v2524
        %v2529 = vsel %vm588, %v2524, %v2526
        %2533 = vst [vmem:[#allocation6 + $0xc0] sm:$0xff] %v2527
        %2534 = vst [vmem:[#allocation6 + $0xc8] sm:$0xff] %v2528
        %2535 = vst [vmem:[#allocation6 + $0xd0] sm:$0xff] %v2529
        %v2536 = vld [vmem:[#allocation6] sm:$0xff]
        %v2537 = vld [vmem:[#allocation6 + $0x8] sm:$0xff]
        %v2538 = vld [vmem:[#allocation6 + $0x10] sm:$0xff]
        %v2539 = vld [vmem:[#allocation6 + $0x18] sm:$0xff]
        %v2540 = vld [vmem:[#allocation6 + $0x20] sm:$0xff]
        %v2541 = vld [vmem:[#allocation6 + $0x28] sm:$0xff]
        %v2542 = vld [vmem:[#allocation6 + $0x30] sm:$0xff]
        %v2543 = vld [vmem:[#allocation6 + $0x38] sm:$0xff]
        %v2544 = vld [vmem:[#allocation6 + $0x40] sm:$0xff]
        %v2545 = vld [vmem:[#allocation6 + $0x48] sm:$0xff]
        %v2546 = vld [vmem:[#allocation6 + $0x50] sm:$0xff]
        %v2547 = vld [vmem:[#allocation6 + $0x58] sm:$0xff]
        %v2548 = vld [vmem:[#allocation6 + $0x60] sm:$0xff]
        %v2549 = vld [vmem:[#allocation6 + $0x68] sm:$0xff]
        %v2550 = vld [vmem:[#allocation6 + $0x70] sm:$0xff]
        %v2551 = vld [vmem:[#allocation6 + $0x78] sm:$0xff]
        %v2552 = vld [vmem:[#allocation6 + $0x80] sm:$0xff]
        %v2553 = vld [vmem:[#allocation6 + $0x88] sm:$0xff]
        %v2554 = vld [vmem:[#allocation6 + $0x90] sm:$0xff]
        %v2555 = vld [vmem:[#allocation6 + $0x98] sm:$0xff]
        %v2556 = vld [vmem:[#allocation6 + $0xa0] sm:$0xff]
        %v2557 = vld [vmem:[#allocation6 + $0xa8] sm:$0xff]
        %v2558 = vld [vmem:[#allocation6 + $0xb0] sm:$0xff]
        %v2559 = vld [vmem:[#allocation6 + $0xb8] sm:$0xff]
        %v2560 = vld [vmem:[#allocation6 + $0xc0] sm:$0xff]
        %v2561 = vld [vmem:[#allocation6 + $0xc8] sm:$0xff]
        %v2562 = vld [vmem:[#allocation6 + $0xd0] sm:$0xff]
        %v2563 = vld [vmem:[%s6] sm:$0x7]
        %v2565 = vsel %vm626, %v2563, 0
        %2567 = vmatprep.subr.mxu0 %v2537
        %2568 = vmatpush1.msra.mxu0 %v2536
        %2569 = vmatprep.subr.mxu0 %v2540
        %2570 = vmatpush1.msra.mxu0 %v2539
        %2571 = vmatprep.subr.mxu0 %v2543
        %2572 = vmatpush1.msra.mxu0 %v2542
        %2573 = vmatprep.subr.mxu0 %v2546
        %2574 = vmatpush1.msra.mxu0 %v2545
        %2575 = vmatprep.subr.mxu0 %v2549
        %2576 = vmatpush1.msra.mxu0 %v2548
        %2577 = vmatprep.subr.mxu0 %v2552
        %2578 = vmatpush1.msra.mxu0 %v2551
        %2579 = vmatprep.subr.mxu0 %v2555
        %2580 = vmatpush1.msra.mxu0 %v2554
        %2581 = vmatprep.subr.mxu0 %v2558
        %2582 = vmatpush1.msra.mxu0 %v2557
        %2583 = vmatprep.subr.mxu0 %v2561
        %2584 = vmatpush1.msra.mxu0 %v2560
        %2585 = vmatprep.subr.mxu0 0.0
        %2586 = vmatpush1.msra.mxu0 0.0
        %2587 = vmatprep.subr.mxu0 0.0
        %2588 = vmatpush1.msra.mxu0 0.0
        %2589 = vmatprep.subr.mxu0 0.0
        %2590 = vmatpush1.msra.mxu0 0.0
        %2591 = vmatprep.subr.mxu0 0.0
        %2592 = vmatpush1.msra.mxu0 0.0
        %2593 = vmatprep.subr.mxu0 0.0
        %2594 = vmatpush1.msra.mxu0 0.0
        %2595 = vmatprep.subr.mxu0 0.0
        %2596 = vmatpush1.msra.mxu0 0.0
        %2597 = vmatprep.subr.mxu0 0.0
        %2598 = vmatpush1.msra.mxu0 0.0
        %2599 = vmatprep.subr.mxu0 0.0
        %2600 = vmatpush1.msra.mxu0 0.0
        %2601 = vmatprep.subr.mxu0 0.0
        %2602 = vmatpush1.msra.mxu0 0.0
        %2603 = vmatprep.subr.mxu0 0.0
        %2604 = vmatpush1.msra.mxu0 0.0
        %2605 = vmatprep.subr.mxu0 0.0
        %2606 = vmatpush1.msra.mxu0 0.0
        %2607 = vmatprep.subr.mxu0 0.0
        %2608 = vmatpush1.msra.mxu0 0.0
        %2609 = vmatprep.subr.mxu0 0.0
        %2610 = vmatpush1.msra.mxu0 0.0
        %2611 = vmatprep.subr.mxu0 0.0
        %2612 = vmatpush1.msra.mxu0 0.0
        %2613 = vmatprep.subr.mxu0 0.0
        %2614 = vmatpush1.msra.mxu0 0.0
        %2615 = vmatprep.subr.mxu0 0.0
        %2616 = vmatpush1.msra.mxu0 0.0
        %2617 = vmatprep.subr.mxu0 0.0
        %2618 = vmatpush1.msra.mxu0 0.0
        %2619 = vmatprep.subr.mxu0 0.0
        %2620 = vmatpush1.msra.mxu0 0.0
        %2621 = vmatprep.subr.mxu0 0.0
        %2622 = vmatpush1.msra.mxu0 0.0
        %2623 = vmatprep.subr.mxu0 0.0
        %2624 = vmatpush1.msra.mxu0 0.0
        %2625 = vmatprep.subr.mxu0 0.0
        %2626 = vmatpush1.msra.mxu0 0.0
        %2627 = vmatprep.subr.mxu0 0.0
        %2628 = vmatpush1.msra.mxu0 0.0
        %2629 = vmatprep.subr.mxu0 0.0
        %2630 = vmatpush1.msra.mxu0 0.0
        %2631 = vmatprep.mubr.f32.mxu0 0.0
        %2632 = vmatmul.mubr.f32.gmra.mrb[0].mxu0 %v2565
        %v2633 = vpop.f32.mrb[0].mxu0
        %v2634 = vadd.f32 0.0, %v2633
        %v2635 = vpop.f32.mrb[0].mxu0
        %v2636 = vadd.f32 0.0, %v2635
        %2637 = vdwg.mxu0
        %2638 = vmatprep.subr.mxu0 0.0
        %2639 = vmatpush1.msra.mxu0 %v2538
        %2640 = vmatprep.subr.mxu0 0.0
        %2641 = vmatpush1.msra.mxu0 %v2541
        %2642 = vmatprep.subr.mxu0 0.0
        %2643 = vmatpush1.msra.mxu0 %v2544
        %2644 = vmatprep.subr.mxu0 0.0
        %2645 = vmatpush1.msra.mxu0 %v2547
        %2646 = vmatprep.subr.mxu0 0.0
        %2647 = vmatpush1.msra.mxu0 %v2550
        %2648 = vmatprep.subr.mxu0 0.0
        %2649 = vmatpush1.msra.mxu0 %v2553
        %2650 = vmatprep.subr.mxu0 0.0
        %2651 = vmatpush1.msra.mxu0 %v2556
        %2652 = vmatprep.subr.mxu0 0.0
        %2653 = vmatpush1.msra.mxu0 %v2559
        %2654 = vmatprep.subr.mxu0 0.0
        %2655 = vmatpush1.msra.mxu0 %v2562
        %2656 = vmatprep.subr.mxu0 0.0
        %2657 = vmatpush1.msra.mxu0 0.0
        %2658 = vmatprep.subr.mxu0 0.0
        %2659 = vmatpush1.msra.mxu0 0.0
        %2660 = vmatprep.subr.mxu0 0.0
        %2661 = vmatpush1.msra.mxu0 0.0
        %2662 = vmatprep.subr.mxu0 0.0
        %2663 = vmatpush1.msra.mxu0 0.0
        %2664 = vmatprep.subr.mxu0 0.0
        %2665 = vmatpush1.msra.mxu0 0.0
        %2666 = vmatprep.subr.mxu0 0.0
        %2667 = vmatpush1.msra.mxu0 0.0
        %2668 = vmatprep.subr.mxu0 0.0
        %2669 = vmatpush1.msra.mxu0 0.0
        %2670 = vmatprep.subr.mxu0 0.0
        %2671 = vmatpush1.msra.mxu0 0.0
        %2672 = vmatprep.subr.mxu0 0.0
        %2673 = vmatpush1.msra.mxu0 0.0
        %2674 = vmatprep.subr.mxu0 0.0
        %2675 = vmatpush1.msra.mxu0 0.0
        %2676 = vmatprep.subr.mxu0 0.0
        %2677 = vmatpush1.msra.mxu0 0.0
        %2678 = vmatprep.subr.mxu0 0.0
        %2679 = vmatpush1.msra.mxu0 0.0
        %2680 = vmatprep.subr.mxu0 0.0
        %2681 = vmatpush1.msra.mxu0 0.0
        %2682 = vmatprep.subr.mxu0 0.0
        %2683 = vmatpush1.msra.mxu0 0.0
        %2684 = vmatprep.subr.mxu0 0.0
        %2685 = vmatpush1.msra.mxu0 0.0
        %2686 = vmatprep.subr.mxu0 0.0
        %2687 = vmatpush1.msra.mxu0 0.0
        %2688 = vmatprep.subr.mxu0 0.0
        %2689 = vmatpush1.msra.mxu0 0.0
        %2690 = vmatprep.subr.mxu0 0.0
        %2691 = vmatpush1.msra.mxu0 0.0
        %2692 = vmatprep.subr.mxu0 0.0
        %2693 = vmatpush1.msra.mxu0 0.0
        %2694 = vmatprep.subr.mxu0 0.0
        %2695 = vmatpush1.msra.mxu0 0.0
        %2696 = vmatprep.subr.mxu0 0.0
        %2697 = vmatpush1.msra.mxu0 0.0
        %2698 = vmatprep.subr.mxu0 0.0
        %2699 = vmatpush1.msra.mxu0 0.0
        %2700 = vmatprep.subr.mxu0 0.0
        %2701 = vmatpush1.msra.mxu0 0.0
        %2702 = vmatprep.mubr.f32.mxu0 0.0
        %2703 = vmatmul.mubr.f32.gmra.mrb[0].mxu0 %v2565
        %v2704 = vpop.f32.mrb[0].mxu0
        %v2705 = vadd.f32 0.0, %v2704
        %v2706 = vpop.f32.mrb[0].mxu0
        %2707 = vdwg.mxu0
        %s2708 = sld [smem:[#allocation7 + $0x4]]
        %vm2709 = vcmp.ge.f32.partialorder %v2634, 0.0
        %vm2710 = vcmp.ge.f32.partialorder %v2636, 0.0
        %vm2711 = vcmp.ge.f32.partialorder %v2705, 0.0
        %v2712 = vstv %s2708
        %v2713 = vmul.f32 %v2712, %v2634
        %v2714 = vmul.f32 %v2712, %v2636
        %v2715 = vmul.f32 %v2712, %v2705
        %v2716 = vsel %vm2709, %v2634, %v2713
        %v2717 = vsel %vm2710, %v2636, %v2714
        %v2718 = vsel %vm2711, %v2705, %v2715
        %v2721 = vcombine.low %v2716, %v2717
        %2723 = vst [vmem:[%s373] sm:$0x77] %v2721
        %2724 = vst [vmem:[%s373 + $0x8] sm:$0x7] %v2718
        %p2725 = scmp.lt.s32.totalorder %s22, 1
        %s2726 = scalar_select %p2725, %s22, 1
        %s2727 = smul.addr %s2726, 3
        %s2728 = smul.addr %s2727, 4
        %s2729 = scalar_lea.vmem %s10, %s2728
        // Predicated region
        $region65: #{net2_forward.1} parent=59 // pred_check
          %p2730 = pneg %p255
        $region66: #{net2_forward.1} parent=59 // pred_check_branch
          %2732 = sbr.rel (%p2730) target = $region68
        $region67: #{net2_forward.1} parent=59 // pred_region
          _
        $region68: #{net2_forward.1} parent=59 // pred_fallthru
          _
      $region60: #{net2_forward.1} parent=5 // pred_fallthru
        _
      %p2733 = scmp.le.s32.totalorder 2, %s17
      // Predicated region
      $region69: #{net2_forward.1} parent=5 // pred_check
        %p2734 = pneg %p2733
      $region70: #{net2_forward.1} parent=5 // pred_check_branch
        %2736 = sbr.rel (%p2734) target = $region72
      $region71: #{net2_forward.1} parent=5 // pred_region
        %s2737 = ssub.s32 %s17, 2
        // Predicated region
        $region73: #{net2_forward.1} parent=71 // pred_check
          %p2738 = pneg %p261
        $region74: #{net2_forward.1} parent=71 // pred_check_branch
          %2740 = sbr.rel (%p2738) target = $region76
        $region75: #{net2_forward.1} parent=71 // pred_region
          %p2741 = scmp.lt.s32.totalorder %s23, 1
          %s2742 = scalar_select %p2741, %s23, 1
          %s2743 = smul.addr %s2742, 3
          %s2744 = smul.addr %s2743, 4
          %s2745 = scalar_lea.vmem %s10, %s2744
        $region76: #{net2_forward.1} parent=71 // pred_fallthru
          _
      $region72: #{net2_forward.1} parent=5 // pred_fallthru
        _
    $region6: #{net2_forward.1} parent=1 // loop_footer
      %s21 = sadd.s32 1, %s17
    $region7: #{net2_forward.1} parent=1 // loop_footer_branch
      %16 = sbr.rel target = $region3
    $region8: #{net2_forward.1} parent=1 // loop_exit
      _
    %2746 = vsyncpa [#allocation8], 1
    %s2747 = scalar_lea.sflag [#allocation8], 1
    %2748 = vsyncpa %s2747, 1

</llo_original>
